<compile_context>
chip_gen: v6e
topology: v6e:2x2x1
jax: 0.10.0
libtpu: 0.0.40
codegen_flags: <defaults>
</compile_context>

<pallas_src>
import functools

import jax
import jax.numpy as jnp
from jax.experimental import pallas as pl
from jax.experimental.pallas import tpu as pltpu

OUTPUT_SHAPE = 64      # module default is 1024; kept small (must be divisible by 32)
SEQ_LEN = 8
LSTM_HIDDEN = 128
EMB_DIM = 256
VOCAB = 100000
BN_EPS = 1e-5

MAX_TK = 16384         # K tile for the big linear (capped for the v7x VMEM budget)


def _apply_act(y, activation):
    if activation == "relu":
        return jnp.maximum(y, 0.0)
    if activation == "tanh":
        return jnp.tanh(y)
    return y


# ----------------------------------------------------------------------------
# Generic linear:  out = act(x @ w + b), f32 accumulation.
# Weight may be bf16 (activations are cast in-vreg, no extra HBM traffic).
# Two paths: multi-step K reduction (VMEM accumulator) and single-step direct.
# ----------------------------------------------------------------------------
def _linear_reduce_kernel(x_ref, w_ref, b_ref, o_ref, acc_ref, *, nk, activation):
    k = pl.program_id(0)

    @pl.when(k == 0)
    def _():
        acc_ref[...] = jnp.zeros_like(acc_ref)

    x = x_ref[...]
    w = w_ref[...]
    if x.dtype != w.dtype:
        x = x.astype(w.dtype)          # bf16-weight path: cast activations in vregs
    acc_ref[...] += jnp.dot(x, w, preferred_element_type=jnp.float32)

    @pl.when(k == nk - 1)
    def _():
        y = _apply_act(acc_ref[...] + b_ref[...], activation)
        o_ref[...] = y.astype(o_ref.dtype)


def _linear_direct_kernel(x_ref, w_ref, b_ref, o_ref, *, activation):
    x = x_ref[...]
    w = w_ref[...]
    if x.dtype != w.dtype:
        x = x.astype(w.dtype)
    y = jnp.dot(x, w, preferred_element_type=jnp.float32) + b_ref[...]
    o_ref[...] = _apply_act(y, activation).astype(o_ref.dtype)


def linear_pallas(x, w, b, activation="none"):
    M, K = x.shape
    Kw, N = w.shape
    assert K == Kw
    M_orig = M
    # Pad the batch to a sublane multiple only when the zero-row HBM read is
    # negligible (small K); for K=262144 padding would cost more than it saves.
    if K <= 8192 and M % 8 != 0:
        x = jnp.pad(x, ((0, (-M) % 8), (0, 0)))
        M = x.shape[0]
    tk = K if K <= MAX_TK else MAX_TK
    assert K % tk == 0
    nk = K // tk
    b2 = b.reshape(1, N)

    if nk == 1:
        kernel = functools.partial(_linear_direct_kernel, activation=activation)
        out = pl.pallas_call(
            kernel,
            out_shape=jax.ShapeDtypeStruct((M, N), jnp.float32),
            grid=(1,),
            in_specs=[pl.BlockSpec((M, K), lambda k: (0, 0)),
                      pl.BlockSpec((K, N), lambda k: (0, 0)),
                      pl.BlockSpec((1, N), lambda k: (0, 0))],
            out_specs=pl.BlockSpec((M, N), lambda k: (0, 0)),
            compiler_params=pltpu.CompilerParams(dimension_semantics=("arbitrary",)),
        )(x, w, b2)
        return out[:M_orig]

    kernel = functools.partial(_linear_reduce_kernel, nk=nk, activation=activation)
    out = pl.pallas_call(
        kernel,
        out_shape=jax.ShapeDtypeStruct((M, N), jnp.float32),
        grid=(nk,),
        in_specs=[pl.BlockSpec((M, tk), lambda k: (0, k)),
                  pl.BlockSpec((tk, N), lambda k: (k, 0)),
                  pl.BlockSpec((1, N), lambda k: (0, 0))],
        out_specs=pl.BlockSpec((M, N), lambda k: (0, 0)),
        scratch_shapes=[pltpu.VMEM((M, N), jnp.float32)],
        compiler_params=pltpu.CompilerParams(dimension_semantics=("arbitrary",)),
    )(x, w, b2)
    return out[:M_orig]


# ----------------------------------------------------------------------------
# Fused Conv2d(3->64, 3x3, same) + BatchNorm(eval) + ReLU as one MXU matmul:
#   out[c, hw] = relu( (W[c,:] @ patches[:,hw]) * scale[c] + shift[c] )
# Output is NCHW-flat per image -> lane-dense stores, torch flatten order.
# ----------------------------------------------------------------------------
def _conv_bn_relu_kernel(p_ref, w_ref, scale_ref, shift_ref, o_ref):
    y = jnp.dot(w_ref[...], p_ref[0], preferred_element_type=jnp.float32)  # (Cout, HW)
    o_ref[0] = jnp.maximum(y * scale_ref[...] + shift_ref[...], 0.0)


def conv_bn_relu_pallas(patches, w27, scale, shift):
    N, K, HW = patches.shape           # K = Cin*9 = 27
    Cout = w27.shape[0]
    return pl.pallas_call(
        _conv_bn_relu_kernel,
        out_shape=jax.ShapeDtypeStruct((N, Cout, HW), jnp.float32),
        grid=(N,),
        in_specs=[pl.BlockSpec((1, K, HW), lambda n: (n, 0, 0)),
                  pl.BlockSpec((Cout, K), lambda n: (0, 0)),
                  pl.BlockSpec((Cout, 1), lambda n: (0, 0)),
                  pl.BlockSpec((Cout, 1), lambda n: (0, 0))],
        out_specs=pl.BlockSpec((1, Cout, HW), lambda n: (n, 0, 0)),
        compiler_params=pltpu.CompilerParams(dimension_semantics=("parallel",)),
    )(patches, w27, scale.reshape(Cout, 1), shift.reshape(Cout, 1))


# ----------------------------------------------------------------------------
# Fused 2-layer LSTM: grid over time; both layers' (h, c) live in VMEM scratch,
# layer-0 hidden never touches HBM.  PyTorch gate ordering (i, f, g, o).
# ----------------------------------------------------------------------------
def _lstm2_kernel(x_ref, w0i_ref, w0h_ref, b0_ref, w1i_ref, w1h_ref, b1_ref,
                  o_ref, h0_sc, c0_sc, h1_sc, c1_sc, *, Hd):
    t = pl.program_id(0)

    @pl.when(t == 0)
    def _():
        h0_sc[...] = jnp.zeros_like(h0_sc)
        c0_sc[...] = jnp.zeros_like(c0_sc)
        h1_sc[...] = jnp.zeros_like(h1_sc)
        c1_sc[...] = jnp.zeros_like(c1_sc)

    def sigmoid(z):
        return 1.0 / (1.0 + jnp.exp(-z))

    def cell(x_in, h_sc, c_sc, wi_ref, wh_ref, b_ref):
        gates = (jnp.dot(x_in, wi_ref[...], preferred_element_type=jnp.float32)
                 + jnp.dot(h_sc[...], wh_ref[...], preferred_element_type=jnp.float32)
                 + b_ref[...])                                   # (B, 4H)
        i_g = sigmoid(gates[:, 0:Hd])
        f_g = sigmoid(gates[:, Hd:2 * Hd])
        g_g = jnp.tanh(gates[:, 2 * Hd:3 * Hd])
        o_g = sigmoid(gates[:, 3 * Hd:4 * Hd])
        c_new = f_g * c_sc[...] + i_g * g_g
        h_new = o_g * jnp.tanh(c_new)
        c_sc[...] = c_new
        h_sc[...] = h_new
        return h_new

    h0_new = cell(x_ref[0], h0_sc, c0_sc, w0i_ref, w0h_ref, b0_ref)
    h1_new = cell(h0_new, h1_sc, c1_sc, w1i_ref, w1h_ref, b1_ref)
    o_ref[0] = h1_new


def lstm2_pallas(x_tbd, p, hidden):
    T, B, D = x_tbd.shape
    H = hidden
    kernel = functools.partial(_lstm2_kernel, Hd=H)
    return pl.pallas_call(
        kernel,
        out_shape=jax.ShapeDtypeStruct((T, B, H), jnp.float32),
        grid=(T,),
        in_specs=[pl.BlockSpec((1, B, D), lambda t: (t, 0, 0)),
                  pl.BlockSpec((D, 4 * H), lambda t: (0, 0)),
                  pl.BlockSpec((H, 4 * H), lambda t: (0, 0)),
                  pl.BlockSpec((1, 4 * H), lambda t: (0, 0)),
                  pl.BlockSpec((H, 4 * H), lambda t: (0, 0)),
                  pl.BlockSpec((H, 4 * H), lambda t: (0, 0)),
                  pl.BlockSpec((1, 4 * H), lambda t: (0, 0))],
        out_specs=pl.BlockSpec((1, B, H), lambda t: (t, 0, 0)),
        scratch_shapes=[pltpu.VMEM((B, H), jnp.float32)] * 4,
        compiler_params=pltpu.CompilerParams(dimension_semantics=("arbitrary",)),
    )(x_tbd, p["l0_wih"], p["l0_whh"], p["l0_b"].reshape(1, 4 * H),
      p["l1_wih"], p["l1_whh"], p["l1_b"].reshape(1, 4 * H))


# ----------------------------------------------------------------------------
# Fused AutoEncoder: all 6 Linears + 5 ReLU + final tanh in ONE pallas_call.
# ----------------------------------------------------------------------------
def _ae_kernel(x_ref, *args):
    o_ref = args[-1]
    wb = args[:-1]
    n_layers = len(wb) // 2
    y = x_ref[...]
    for i in range(n_layers):
        w = wb[2 * i][...]
        b = wb[2 * i + 1][...]
        y = jnp.dot(y, w, preferred_element_type=jnp.float32) + b
        y = jnp.maximum(y, 0.0) if i < n_layers - 1 else jnp.tanh(y)
    o_ref[...] = y


def autoencoder_pallas(ae_params, x):
    M, D = x.shape
    M_orig = M
    if M % 8 != 0:
        x = jnp.pad(x, ((0, (-M) % 8), (0, 0)))
        M = x.shape[0]
    flat_args = []
    in_specs = [pl.BlockSpec((M, D), lambda i: (0, 0))]
    for w, b in ae_params:
        d_in, d_out = w.shape
        flat_args += [w, b.reshape(1, d_out)]
        in_specs += [pl.BlockSpec((d_in, d_out), lambda i: (0, 0)),
                     pl.BlockSpec((1, d_out), lambda i: (0, 0))]
    d_final = ae_params[-1][0].shape[1]
    out = pl.pallas_call(
        _ae_kernel,
        out_shape=jax.ShapeDtypeStruct((M, d_final), jnp.float32),
        grid=(1,),
        in_specs=in_specs,
        out_specs=pl.BlockSpec((M, d_final), lambda i: (0, 0)),
        compiler_params=pltpu.CompilerParams(dimension_semantics=("arbitrary",)),
    )(x, *flat_args)
    return out[:M_orig]


# ----------------------------------------------------------------------------
# Forward passes (glue in plain JAX, hot paths in the Pallas kernels above)
# ----------------------------------------------------------------------------
def conv_feature_forward(p, x_nchw):
    x = x_nchw.astype(jnp.float32)
    N, C, H, W = x.shape
    # im2col glue (27 tiny slices): (N, 27, H*W); tap order (ci, ky, kx) matches
    # the OIHW conv weight reshape below.
    xp = jnp.pad(x, ((0, 0), (0, 0), (1, 1), (1, 1)))
    taps = [xp[:, c, dy:dy + H, dx:dx + W]
            for c in range(C) for dy in range(3) for dx in range(3)]
    patches = jnp.stack(taps, axis=1).reshape(N, C * 9, H * W)
    w27 = p["conv_w"].reshape(64, C * 9)                     # OIHW -> (Cout, 27)
    scale = p["bn_gamma"] / jnp.sqrt(p["bn_var"] + BN_EPS)
    shift = p["bn_beta"] + scale * (p["conv_b"] - p["bn_mean"])
    y = conv_bn_relu_pallas(patches, w27, scale, shift)      # (N, 64, H*W)  NCHW-flat
    # AdaptiveAvgPool2d((64,64)): uniform binning for H,W multiples of 64;
    # identity (skipped) for the 64x64 inputs used here.
    f1, f2 = H // 64, W // 64
    if f1 > 1 or f2 > 1:
        y = y.reshape(N, 64, 64, f1, 64, f2).mean(axis=(3, 5))
    flat = y.reshape(N, -1)                                  # == torch x.view(N, -1)
    # Feature Linear (bf16 weight, f32 accumulation) with MetricModel tanh fused.
    return linear_pallas(flat, p["lin_w"], p["lin_b"], activation="tanh")


def text_feature_forward(p, ids):
    B = ids.shape[0]
    # Embedding gather stays in plain JAX (XLA dynamic-gather); rest is Pallas.
    emb = jnp.take(p["emb"], ids, axis=0)                    # (B, T, 256)
    x = jnp.transpose(emb, (1, 0, 2))                        # (T, B, 256)
    Bp = ((B + 7) // 8) * 8                                  # sublane-pad the batch
    if Bp != B:
        x = jnp.pad(x, ((0, 0), (0, Bp - B), (0, 0)))
    h1 = lstm2_pallas(x, p, LSTM_HIDDEN)                     # (T, Bp, 128)
    flat = jnp.transpose(h1[:, :B], (1, 0, 2)).reshape(B, -1)  # batch_first flatten
    return linear_pallas(flat, p["lin_w"], p["lin_b"], activation="tanh")


def metric_model_forward(params, x, branch):
    if branch in ("Image", "Audio"):
        feat = conv_feature_forward(params[branch], x)
    elif branch == "Text":
        feat = text_feature_forward(params["Text"], x)
    else:
        raise ValueError(branch)
    feat_ae = autoencoder_pallas(params["ae"], feat)         # fused AE + final tanh
    return feat, feat_ae


# ----------------------------------------------------------------------------
# Deterministic parameter init (shapes follow the nn.Module __init__ /
# LazyLinear shapes implied by the first forward).
# ----------------------------------------------------------------------------
def init_params(key, output_shape=OUTPUT_SHAPE):
    keys = iter(jax.random.split(key, 64))

    def nrm(shape, scale=0.05, dtype=jnp.float32):
        return (scale * jax.random.normal(next(keys), shape, jnp.float32)).astype(dtype)

    def conv_branch():
        return dict(
            conv_w=nrm((64, 3, 3, 3)),                    # OIHW (torch layout)
            conv_b=nrm((64,)),
            bn_gamma=jnp.ones((64,), jnp.float32),
            bn_beta=jnp.zeros((64,), jnp.float32),
            bn_mean=jnp.zeros((64,), jnp.float32),
            bn_var=jnp.ones((64,), jnp.float32),
            # LazyLinear(262144 -> out): stored as torch_weight.T in bf16 to
            # halve the dominant HBM read; rows are in NCHW flatten order,
            # matching the conv kernel's output layout directly.
            lin_w=nrm((64 * 64 * 64, output_shape), 0.002, dtype=jnp.bfloat16),
            lin_b=nrm((output_shape,)),
        )

    params = {
        "Image": conv_branch(),
        "Audio": conv_branch(),
        "Text": dict(
            emb=nrm((VOCAB, EMB_DIM), 0.1),
            l0_wih=nrm((EMB_DIM, 4 * LSTM_HIDDEN)),       # W_ih_l0^T
            l0_whh=nrm((LSTM_HIDDEN, 4 * LSTM_HIDDEN)),   # W_hh_l0^T
            l0_b=nrm((4 * LSTM_HIDDEN,)),                 # b_ih + b_hh
            l1_wih=nrm((LSTM_HIDDEN, 4 * LSTM_HIDDEN)),
            l1_whh=nrm((LSTM_HIDDEN, 4 * LSTM_HIDDEN)),
            l1_b=nrm((4 * LSTM_HIDDEN,)),
            lin_w=nrm((SEQ_LEN * LSTM_HIDDEN, output_shape), 0.02),
            lin_b=nrm((output_shape,)),
        ),
        "ae": [],
    }
    ae_dims = [output_shape, output_shape // 4, output_shape // 16,
               output_shape // 32, output_shape // 16, output_shape // 4,
               output_shape]
    for d_in, d_out in zip(ae_dims[:-1], ae_dims[1:]):
        params["ae"].append((nrm((d_in, d_out), 0.1), nrm((d_out,))))
    return params


if __name__ == "__main__":
    key = jax.random.PRNGKey(0)
    pkey, k_img, k_txt, k_aud = jax.random.split(key, 4)
    params = init_params(pkey)

    img = jax.random.normal(k_img, (2, 3, 64, 64), dtype=jnp.float32)
    txt = jax.random.randint(k_txt, (2, SEQ_LEN), 0, VOCAB, dtype=jnp.int32)
    aud = jax.random.normal(k_aud, (2, 3, 64, 64), dtype=jnp.float32)

    for name, x in [("Image", img), ("Text", txt), ("Audio", aud)]:
        feat, feat_ae = metric_model_forward(params, x, name)
        jax.block_until_ready((feat, feat_ae))
        assert feat.shape == (2, OUTPUT_SHAPE), (name, feat.shape)
        assert feat_ae.shape == (2, OUTPUT_SHAPE), (name, feat_ae.shape)
        assert bool(jnp.all(jnp.abs(feat) <= 1.0)) and bool(jnp.all(jnp.abs(feat_ae) <= 1.0))

    print("KERNEL_OK")
</pallas_src>

<mosaic_0001>
module attributes {stable_mosaic.version = 11 : i64} {
  func.func @_conv_bn_relu_kernel(%arg0: i32, %arg1: memref<1x27x4096xf32, #tpu.memory_space<vmem>>, %arg2: memref<64x27xf32, #tpu.memory_space<vmem>>, %arg3: memref<64x1xf32, #tpu.memory_space<vmem>>, %arg4: memref<64x1xf32, #tpu.memory_space<vmem>>, %arg5: memref<1x64x4096xf32, #tpu.memory_space<vmem>>) attributes {dimension_semantics = [#tpu.dimension_semantics<parallel>], iteration_bounds = array<i64: 2>, scalar_prefetch = 0 : i64, scratch_operands = 0 : i64, tpu.core_type = #tpu.core_type<tc>, window_params = [{transform_indices = @transform_0, window_bounds = array<i64: 1, 27, 4096>}, {pipeline_mode = #tpu.pipeline_mode<synchronous>, transform_indices = @transform_1, window_bounds = array<i64: 64, 27>}, {pipeline_mode = #tpu.pipeline_mode<synchronous>, transform_indices = @transform_2, window_bounds = array<i64: 64, 1>}, {pipeline_mode = #tpu.pipeline_mode<synchronous>, transform_indices = @transform_3, window_bounds = array<i64: 64, 1>}, {transform_indices = @transform_4, window_bounds = array<i64: 1, 64, 4096>}]} {
    %c0 = arith.constant 0 : index
    %c0_0 = arith.constant 0 : index
    %0 = vector.load %arg2[%c0, %c0_0] : memref<64x27xf32, #tpu.memory_space<vmem>>, vector<64x27xf32>
    %c0_1 = arith.constant 0 : index
    %c0_2 = arith.constant 0 : index
    %c0_3 = arith.constant 0 : index
    %1 = vector.load %arg1[%c0_1, %c0_2, %c0_3] : memref<1x27x4096xf32, #tpu.memory_space<vmem>>, vector<1x27x4096xf32>
    %2 = vector.shape_cast %1 : vector<1x27x4096xf32> to vector<27x4096xf32>
    %cst = arith.constant dense<0.000000e+00> : vector<64x4096xf32>
    %3 = tpu.matmul %0, %2, %cst {dimension_numbers = #tpu.dot_dimension_numbers<[1], [0], [0], [1], [0, 0, 1, 1], [], []>} : vector<64x27xf32>, vector<27x4096xf32>, vector<64x4096xf32> -> vector<64x4096xf32>
    %c0_4 = arith.constant 0 : index
    %c0_5 = arith.constant 0 : index
    %4 = vector.load %arg3[%c0_4, %c0_5] : memref<64x1xf32, #tpu.memory_space<vmem>>, vector<64x1xf32>
    %5 = vector.broadcast %4 : vector<64x1xf32> to vector<64x4096xf32>
    %6 = arith.mulf %3, %5 : vector<64x4096xf32>
    %c0_6 = arith.constant 0 : index
    %c0_7 = arith.constant 0 : index
    %7 = vector.load %arg4[%c0_6, %c0_7] : memref<64x1xf32, #tpu.memory_space<vmem>>, vector<64x1xf32>
    %8 = vector.broadcast %7 : vector<64x1xf32> to vector<64x4096xf32>
    %9 = arith.addf %6, %8 : vector<64x4096xf32>
    %cst_8 = arith.constant 0.000000e+00 : f32
    %10 = vector.broadcast %cst_8 : f32 to vector<64x4096xf32>
    %11 = arith.maximumf %9, %10 : vector<64x4096xf32>
    %c0_9 = arith.constant 0 : index
    %c0_10 = arith.constant 0 : index
    %c0_11 = arith.constant 0 : index
    %12 = vector.load %arg5[%c0_9, %c0_10, %c0_11] : memref<1x64x4096xf32, #tpu.memory_space<vmem>>, vector<1x64x4096xf32>
    %13 = vector.shape_cast %12 : vector<1x64x4096xf32> to vector<64x4096xf32>
    %14 = vector.shape_cast %11 : vector<64x4096xf32> to vector<1x64x4096xf32>
    tpu.vector_store %arg5[%c0_9, %c0_10, %c0_11], %14 {strides = array<i32>} : memref<1x64x4096xf32, #tpu.memory_space<vmem>>, vector<1x64x4096xf32>,
    return
  }
  func.func @transform_0(%arg0: i32) -> (i32, i32, i32) {
    %c0_i32 = arith.constant 0 : i32
    %c0_i32_0 = arith.constant 0 : i32
    %c0_i32_1 = arith.constant 0 : i32
    return %arg0, %c0_i32, %c0_i32_0 : i32, i32, i32
  }
  func.func @transform_1(%arg0: i32) -> (i32, i32) {
    %c0_i32 = arith.constant 0 : i32
    %c0_i32_0 = arith.constant 0 : i32
    %c0_i32_1 = arith.constant 0 : i32
    return %c0_i32, %c0_i32_0 : i32, i32
  }
  func.func @transform_2(%arg0: i32) -> (i32, i32) {
    %c0_i32 = arith.constant 0 : i32
    %c0_i32_0 = arith.constant 0 : i32
    %c0_i32_1 = arith.constant 0 : i32
    return %c0_i32, %c0_i32_0 : i32, i32
  }
  func.func @transform_3(%arg0: i32) -> (i32, i32) {
    %c0_i32 = arith.constant 0 : i32
    %c0_i32_0 = arith.constant 0 : i32
    %c0_i32_1 = arith.constant 0 : i32
    return %c0_i32, %c0_i32_0 : i32, i32
  }
  func.func @transform_4(%arg0: i32) -> (i32, i32, i32) {
    %c0_i32 = arith.constant 0 : i32
    %c0_i32_0 = arith.constant 0 : i32
    %c0_i32_1 = arith.constant 0 : i32
    return %arg0, %c0_i32, %c0_i32_0 : i32, i32, i32
  }
}

</mosaic_0001>

<llo_original>
// kernel: tpu_custom_call.1
$region0: #{tpu_custom_call.1}
  #allocation0 [shape = 'u32[]', space=smem, size = 0x4, offset = 0x4, fixed_abs, tag = 'smem constant byte address 0x4 - core index']
  #allocation1 [shape = 'u32[144,128]{1,0:T(1,128)}', space=vmem, size = 0x12000, scoped, tag = 'internal scratch']
  %s0 = inlined_call_operand.vmem [shape: f32[2,27,4096], index: 0, kind: input, shape index: {}]
  %s1 = inlined_call_operand.vmem [shape: f32[64,27], index: 1, kind: input, shape index: {}]
  %s2 = inlined_call_operand.vmem [shape: f32[64,1], index: 2, kind: input, shape index: {}]
  %s3 = inlined_call_operand.vmem [shape: f32[64,1], index: 3, kind: input, shape index: {}]
  %s4 = inlined_call_operand.hbm [shape: f32[2,64,4096], index: 4, kind: output, shape index: {}]
  %s5 = sld [smem:[#allocation0]]
  $region49: #{tpu_custom_call.1} parent=0
    _
  %s7 = ssub.s32 1, %s5
  %s8 = scalar_select 0, %s7, %s5
  $region1: #{tpu_custom_call.1} parent=0
    #allocation2 [shape = 'u8[2097152]{0}', space=vmem, size = 0x200000, scoped, tag = 'output window, operand 0']
    #allocation3 [shape = 's32[2]{0}', space=sflag, size = 0x8, scoped, tag = 'scoped memory for tpu_custom_call.1']
    %9 = vsyncpa [#allocation3], 0
    %s10 = scalar_lea.sflag [#allocation3], 1
    %11 = vsyncpa %s10, 0
    loop: start=0, step=1, limit=4
    $region2: #{tpu_custom_call.1} parent=1 // loop_pre_header
      _
    $region3: #{tpu_custom_call.1} parent=1 // loop_header
      %s13 = sphi 0, %s17
      %p14 = scmp.ge.s32.totalorder %s13, 4
      %s23 = sphi 0, %s25
      %s26 = sphi 0, %s23
      %s27 = sphi 0, %s26
      %s43 = sphi 0, %s27
      %s47 = sphi 0, %s47
      %s49 = sphi 0, %s47
      %s50 = sphi 0, %s49
      %s64 = sphi 0, %s50
      %s68 = sphi 0, %s68
      %s70 = sphi 0, %s68
      %s71 = sphi 0, %s70
      %s85 = sphi 0, %s71
      %s89 = sphi 0, %s89
      %s91 = sphi 0, %s89
      %s92 = sphi 0, %s91
      %s106 = sphi 0, %s92
      %s112 = sphi 0, %s114
      %s115 = sphi 0, %s112
      %s116 = sphi 0, %s115
      %s132 = sphi 0, %s116
    $region4: #{tpu_custom_call.1} parent=1 // loop_header_branch
      %16 = sbr.rel (%p14) target = $region8
    $region5: #{tpu_custom_call.1} parent=1 // loop_body
      %s18 = ssub.s32 %s13, 1
      %s19 = ssub.s32 %s13, 2
      %s20 = sadd.s32 %s13, 1
      %s21 = ssub.s32 %s13, %s20
      %p22 = scmp.eq.s32.totalorder %s21, 0
      %s24 = sadd.s32 %s23, 1
      %s25 = scalar_select %p22, %s23, %s24
      %p28 = pneg %p22
      %p29 = scmp.eq.s32.totalorder %s13, 1
      %p30 = por %p28, %p29
      %p31 = scmp.ne.s32.totalorder %s23, %s26
      %p32 = scmp.eq.s32.totalorder %s13, 0
      %p33 = por %p31, %p32
      %p34 = scmp.ne.s32.totalorder %s23, %s26
      %p35 = scmp.eq.s32.totalorder %s18, 1
      %p36 = por %p34, %p35
      %p37 = scmp.ne.s32.totalorder %s26, %s27
      %p38 = scmp.eq.s32.totalorder %s18, 0
      %p39 = por %p37, %p38
      %p40 = scmp.ne.s32.totalorder %s26, %s27
      %p41 = scmp.eq.s32.totalorder %s19, 1
      %p42 = por %p40, %p41
      %p44 = scmp.ne.s32.totalorder %s27, %s43
      %p45 = scmp.eq.s32.totalorder %s19, 0
      %p46 = por %p44, %p45
      %s48 = sadd.s32 %s47, 1
      %p51 = scmp.eq.s32.totalorder %s13, 1
      %p52 = scmp.ne.s32.totalorder %s47, %s49
      %p53 = scmp.eq.s32.totalorder %s13, 0
      %p54 = por %p52, %p53
      %p55 = scmp.ne.s32.totalorder %s47, %s49
      %p56 = scmp.eq.s32.totalorder %s18, 1
      %p57 = por %p55, %p56
      %p58 = scmp.ne.s32.totalorder %s49, %s50
      %p59 = scmp.eq.s32.totalorder %s18, 0
      %p60 = por %p58, %p59
      %p61 = scmp.ne.s32.totalorder %s49, %s50
      %p62 = scmp.eq.s32.totalorder %s19, 1
      %p63 = por %p61, %p62
      %p65 = scmp.ne.s32.totalorder %s50, %s64
      %p66 = scmp.eq.s32.totalorder %s19, 0
      %p67 = por %p65, %p66
      %s69 = sadd.s32 %s68, 1
      %p72 = scmp.eq.s32.totalorder %s13, 1
      %p73 = scmp.ne.s32.totalorder %s68, %s70
      %p74 = scmp.eq.s32.totalorder %s13, 0
      %p75 = por %p73, %p74
      %p76 = scmp.ne.s32.totalorder %s68, %s70
      %p77 = scmp.eq.s32.totalorder %s18, 1
      %p78 = por %p76, %p77
      %p79 = scmp.ne.s32.totalorder %s70, %s71
      %p80 = scmp.eq.s32.totalorder %s18, 0
      %p81 = por %p79, %p80
      %p82 = scmp.ne.s32.totalorder %s70, %s71
      %p83 = scmp.eq.s32.totalorder %s19, 1
      %p84 = por %p82, %p83
      %p86 = scmp.ne.s32.totalorder %s71, %s85
      %p87 = scmp.eq.s32.totalorder %s19, 0
      %p88 = por %p86, %p87
      %s90 = sadd.s32 %s89, 1
      %p93 = scmp.eq.s32.totalorder %s13, 1
      %p94 = scmp.ne.s32.totalorder %s89, %s91
      %p95 = scmp.eq.s32.totalorder %s13, 0
      %p96 = por %p94, %p95
      %p97 = scmp.ne.s32.totalorder %s89, %s91
      %p98 = scmp.eq.s32.totalorder %s18, 1
      %p99 = por %p97, %p98
      %p100 = scmp.ne.s32.totalorder %s91, %s92
      %p101 = scmp.eq.s32.totalorder %s18, 0
      %p102 = por %p100, %p101
      %p103 = scmp.ne.s32.totalorder %s91, %s92
      %p104 = scmp.eq.s32.totalorder %s19, 1
      %p105 = por %p103, %p104
      %p107 = scmp.ne.s32.totalorder %s92, %s106
      %p108 = scmp.eq.s32.totalorder %s19, 0
      %p109 = por %p107, %p108
      %s110 = ssub.s32 %s13, %s20
      %p111 = scmp.eq.s32.totalorder %s110, 0
      %s113 = sadd.s32 %s112, 1
      %s114 = scalar_select %p111, %s112, %s113
      %p117 = pneg %p111
      %p118 = scmp.eq.s32.totalorder %s13, 1
      %p119 = por %p117, %p118
      %p120 = scmp.ne.s32.totalorder %s112, %s115
      %p121 = scmp.eq.s32.totalorder %s13, 0
      %p122 = por %p120, %p121
      %p123 = scmp.ne.s32.totalorder %s112, %s115
      %p124 = scmp.eq.s32.totalorder %s18, 1
      %p125 = por %p123, %p124
      %p126 = scmp.ne.s32.totalorder %s115, %s116
      %p127 = scmp.eq.s32.totalorder %s18, 0
      %p128 = por %p126, %p127
      %p129 = scmp.ne.s32.totalorder %s115, %s116
      %p130 = scmp.eq.s32.totalorder %s19, 1
      %p131 = por %p129, %p130
      %p133 = scmp.ne.s32.totalorder %s116, %s132
      %p134 = scmp.eq.s32.totalorder %s19, 0
      %p135 = por %p133, %p134
      %p136 = scmp.le.s32.totalorder 1, %s13
      %p137 = scmp.lt.s32.totalorder %s13, 3
      %p138 = pnand %p136, %p137
      %p139 = pneg %p138
      // Predicated region
      $region9: #{tpu_custom_call.1} parent=5 // pred_check
        _
      $region10: #{tpu_custom_call.1} parent=5 // pred_check_branch
        %141 = sbr.rel (%p138) target = $region12
      $region11: #{tpu_custom_call.1} parent=5 // pred_region
        %s142 = ssub.s32 %s13, 1
        // Predicated region
        $region13: #{tpu_custom_call.1} parent=11 // pred_check
          %p143 = pneg %p60
        $region14: #{tpu_custom_call.1} parent=11 // pred_check_branch
          %145 = sbr.rel (%p143) target = $region16
        $region15: #{tpu_custom_call.1} parent=11 // pred_region
          _
        $region16: #{tpu_custom_call.1} parent=11 // pred_fallthru
          _
        // Predicated region
        $region17: #{tpu_custom_call.1} parent=11 // pred_check
          %p146 = pneg %p81
        $region18: #{tpu_custom_call.1} parent=11 // pred_check_branch
          %148 = sbr.rel (%p146) target = $region20
        $region19: #{tpu_custom_call.1} parent=11 // pred_region
          _
        $region20: #{tpu_custom_call.1} parent=11 // pred_fallthru
          _
        // Predicated region
        $region21: #{tpu_custom_call.1} parent=11 // pred_check
          %p149 = pneg %p102
        $region22: #{tpu_custom_call.1} parent=11 // pred_check_branch
          %151 = sbr.rel (%p149) target = $region24
        $region23: #{tpu_custom_call.1} parent=11 // pred_region
          _
        $region24: #{tpu_custom_call.1} parent=11 // pred_fallthru
          _
      $region12: #{tpu_custom_call.1} parent=5 // pred_fallthru
        _
      %p152 = scmp.lt.s32.totalorder %s13, 2
      // Predicated region
      $region25: #{tpu_custom_call.1} parent=5 // pred_check
        %p153 = pneg %p152
      $region26: #{tpu_custom_call.1} parent=5 // pred_check_branch
        %155 = sbr.rel (%p153) target = $region28
      $region27: #{tpu_custom_call.1} parent=5 // pred_region
        // Predicated region
        $region29: #{tpu_custom_call.1} parent=27 // pred_check
          %p156 = pneg %p33
        $region30: #{tpu_custom_call.1} parent=27 // pred_check_branch
          %158 = sbr.rel (%p156) target = $region32
        $region31: #{tpu_custom_call.1} parent=27 // pred_region
          %p159 = scmp.lt.s32.totalorder %s13, 1
          %s160 = scalar_select %p159, %s13, 1
          %s161 = smul.addr %s160, 128
          %s162 = smul.addr %s161, 8
          %s163 = scalar_lea.vmem %s0, %s162
        $region32: #{tpu_custom_call.1} parent=27 // pred_fallthru
          _
      $region28: #{tpu_custom_call.1} parent=5 // pred_fallthru
        _
      %p164 = scmp.le.s32.totalorder 1, %s13
      %p165 = scmp.lt.s32.totalorder %s13, 3
      %p166 = pnand %p164, %p165
      %p167 = pneg %p166
      // Predicated region
      $region33: #{tpu_custom_call.1} parent=5 // pred_check
        _
      $region34: #{tpu_custom_call.1} parent=5 // pred_check_branch
        %169 = sbr.rel (%p166) target = $region36
      $region35: #{tpu_custom_call.1} parent=5 // pred_region
        %s170 = ssub.s32 %s13, 1
        %p171 = scmp.lt.s32.totalorder %s18, 1
        %s172 = scalar_select %p171, %s18, 1
        %s173 = smul.addr %s172, 128
        %s174 = smul.addr %s173, 8
        %s175 = scalar_lea.vmem %s0, %s174
        %p176 = pneg %p39
        %p177 = pneg %p36
        %p178 = pneg %p60
        %p179 = pneg %p57
        %p180 = pneg %p81
        %p181 = pneg %p78
        %p182 = pneg %p102
        %p183 = pneg %p99
        %p184 = pneg %p128
        %p185 = pneg %p125
        %s186 = sand.u32 %s115, 1
        %s187 = scalar_lea.sflag [#allocation3], %s186
        %s188 = sand.u32 %s115, 1
        %s189 = smul.addr %s188, 2048
        %s190 = scalar_lea.vmem [#allocation2], %s189
        %p191 = scmp.lt.s32.totalorder %s18, 1
        %s192 = scalar_select %p191, %s18, 1
        %s193 = smul.addr %s192, 128
        %s194 = smul.addr %s193, 8
        %s195 = scalar_lea.vmem %s0, %s194
        %v196 = vld [vmem:[%s1] sm:$0xff]
        %v197 = vld [vmem:[%s1 + $0x8] sm:$0xff]
        %v198 = vld [vmem:[%s1 + $0x10] sm:$0xff]
        %v199 = vld [vmem:[%s1 + $0x18] sm:$0xff]
        %v200 = vld [vmem:[%s1 + $0x20] sm:$0xff]
        %v201 = vld [vmem:[%s1 + $0x28] sm:$0xff]
        %v202 = vld [vmem:[%s1 + $0x30] sm:$0xff]
        %v203 = vld [vmem:[%s1 + $0x38] sm:$0xff]
        %v204 = vld [vmem:[%s195] sm:$0xff]
        %v205 = vld [vmem:[%s195 + $0x8] sm:$0xff]
        %v206 = vld [vmem:[%s195 + $0x10] sm:$0xff]
        %v207 = vld [vmem:[%s195 + $0x18] sm:$0xff]
        %v208 = vld [vmem:[%s195 + $0x20] sm:$0xff]
        %v209 = vld [vmem:[%s195 + $0x28] sm:$0xff]
        %v210 = vld [vmem:[%s195 + $0x30] sm:$0xff]
        %v211 = vld [vmem:[%s195 + $0x38] sm:$0xff]
        %v212 = vld [vmem:[%s195 + $0x40] sm:$0xff]
        %v213 = vld [vmem:[%s195 + $0x48] sm:$0xff]
        %v214 = vld [vmem:[%s195 + $0x50] sm:$0xff]
        %v215 = vld [vmem:[%s195 + $0x58] sm:$0xff]
        %v216 = vld [vmem:[%s195 + $0x60] sm:$0xff]
        %v217 = vld [vmem:[%s195 + $0x68] sm:$0xff]
        %v218 = vld [vmem:[%s195 + $0x70] sm:$0xff]
        %v219 = vld [vmem:[%s195 + $0x78] sm:$0xff]
        %v220 = vld [vmem:[%s195 + $0x80] sm:$0xff]
        %v221 = vld [vmem:[%s195 + $0x88] sm:$0xff]
        %v222 = vld [vmem:[%s195 + $0x90] sm:$0xff]
        %v223 = vld [vmem:[%s195 + $0x98] sm:$0xff]
        %v224 = vld [vmem:[%s195 + $0xa0] sm:$0xff]
        %v225 = vld [vmem:[%s195 + $0xa8] sm:$0xff]
        %v226 = vld [vmem:[%s195 + $0xb0] sm:$0xff]
        %v227 = vld [vmem:[%s195 + $0xb8] sm:$0xff]
        %v228 = vld [vmem:[%s195 + $0xc0] sm:$0xff]
        %v229 = vld [vmem:[%s195 + $0xc8] sm:$0xff]
        %v230 = vld [vmem:[%s195 + $0xd0] sm:$0xff]
        %v231 = vld [vmem:[%s195 + $0xd8] sm:$0xff]
        %v232 = vld [vmem:[%s195 + $0xe0] sm:$0xff]
        %v233 = vld [vmem:[%s195 + $0xe8] sm:$0xff]
        %v234 = vld [vmem:[%s195 + $0xf0] sm:$0xff]
        %v235 = vld [vmem:[%s195 + $0xf8] sm:$0xff]
        %v236 = vld [vmem:[%s195 + $0x100] sm:$0xff]
        %v237 = vld [vmem:[%s195 + $0x108] sm:$0xff]
        %v238 = vld [vmem:[%s195 + $0x110] sm:$0xff]
        %v239 = vld [vmem:[%s195 + $0x118] sm:$0xff]
        %v240 = vld [vmem:[%s195 + $0x120] sm:$0xff]
        %v241 = vld [vmem:[%s195 + $0x128] sm:$0xff]
        %v242 = vld [vmem:[%s195 + $0x130] sm:$0xff]
        %v243 = vld [vmem:[%s195 + $0x138] sm:$0xff]
        %v244 = vld [vmem:[%s195 + $0x140] sm:$0xff]
        %v245 = vld [vmem:[%s195 + $0x148] sm:$0xff]
        %v246 = vld [vmem:[%s195 + $0x150] sm:$0xff]
        %v247 = vld [vmem:[%s195 + $0x158] sm:$0xff]
        %v248 = vld [vmem:[%s195 + $0x160] sm:$0xff]
        %v249 = vld [vmem:[%s195 + $0x168] sm:$0xff]
        %v250 = vld [vmem:[%s195 + $0x170] sm:$0xff]
        %v251 = vld [vmem:[%s195 + $0x178] sm:$0xff]
        %v252 = vld [vmem:[%s195 + $0x180] sm:$0xff]
        %v253 = vld [vmem:[%s195 + $0x188] sm:$0xff]
        %v254 = vld [vmem:[%s195 + $0x190] sm:$0xff]
        %v255 = vld [vmem:[%s195 + $0x198] sm:$0xff]
        %v256 = vld [vmem:[%s195 + $0x1a0] sm:$0xff]
        %v257 = vld [vmem:[%s195 + $0x1a8] sm:$0xff]
        %v258 = vld [vmem:[%s195 + $0x1b0] sm:$0xff]
        %v259 = vld [vmem:[%s195 + $0x1b8] sm:$0xff]
        %v260 = vld [vmem:[%s195 + $0x1c0] sm:$0xff]
        %v261 = vld [vmem:[%s195 + $0x1c8] sm:$0xff]
        %v262 = vld [vmem:[%s195 + $0x1d0] sm:$0xff]
        %v263 = vld [vmem:[%s195 + $0x1d8] sm:$0xff]
        %v264 = vld [vmem:[%s195 + $0x1e0] sm:$0xff]
        %v265 = vld [vmem:[%s195 + $0x1e8] sm:$0xff]
        %v266 = vld [vmem:[%s195 + $0x1f0] sm:$0xff]
        %v267 = vld [vmem:[%s195 + $0x1f8] sm:$0xff]
        %v268 = vld [vmem:[%s195 + $0x200] sm:$0xff]
        %v269 = vld [vmem:[%s195 + $0x208] sm:$0xff]
        %v270 = vld [vmem:[%s195 + $0x210] sm:$0xff]
        %v271 = vld [vmem:[%s195 + $0x218] sm:$0xff]
        %v272 = vld [vmem:[%s195 + $0x220] sm:$0xff]
        %v273 = vld [vmem:[%s195 + $0x228] sm:$0xff]
        %v274 = vld [vmem:[%s195 + $0x230] sm:$0xff]
        %v275 = vld [vmem:[%s195 + $0x238] sm:$0xff]
        %v276 = vld [vmem:[%s195 + $0x240] sm:$0xff]
        %v277 = vld [vmem:[%s195 + $0x248] sm:$0xff]
        %v278 = vld [vmem:[%s195 + $0x250] sm:$0xff]
        %v279 = vld [vmem:[%s195 + $0x258] sm:$0xff]
        %v280 = vld [vmem:[%s195 + $0x260] sm:$0xff]
        %v281 = vld [vmem:[%s195 + $0x268] sm:$0xff]
        %v282 = vld [vmem:[%s195 + $0x270] sm:$0xff]
        %v283 = vld [vmem:[%s195 + $0x278] sm:$0xff]
        %v284 = vld [vmem:[%s195 + $0x280] sm:$0xff]
        %v285 = vld [vmem:[%s195 + $0x288] sm:$0xff]
        %v286 = vld [vmem:[%s195 + $0x290] sm:$0xff]
        %v287 = vld [vmem:[%s195 + $0x298] sm:$0xff]
        %v288 = vld [vmem:[%s195 + $0x2a0] sm:$0xff]
        %v289 = vld [vmem:[%s195 + $0x2a8] sm:$0xff]
        %v290 = vld [vmem:[%s195 + $0x2b0] sm:$0xff]
        %v291 = vld [vmem:[%s195 + $0x2b8] sm:$0xff]
        %v292 = vld [vmem:[%s195 + $0x2c0] sm:$0xff]
        %v293 = vld [vmem:[%s195 + $0x2c8] sm:$0xff]
        %v294 = vld [vmem:[%s195 + $0x2d0] sm:$0xff]
        %v295 = vld [vmem:[%s195 + $0x2d8] sm:$0xff]
        %v296 = vld [vmem:[%s195 + $0x2e0] sm:$0xff]
        %v297 = vld [vmem:[%s195 + $0x2e8] sm:$0xff]
        %v298 = vld [vmem:[%s195 + $0x2f0] sm:$0xff]
        %v299 = vld [vmem:[%s195 + $0x2f8] sm:$0xff]
        %v300 = vld [vmem:[%s195 + $0x300] sm:$0x7]
        %v301 = vld [vmem:[%s195 + $0x308] sm:$0x7]
        %v302 = vld [vmem:[%s195 + $0x310] sm:$0x7]
        %v303 = vld [vmem:[%s195 + $0x318] sm:$0x7]
        %v304 = vld [vmem:[%s195 + $0x320] sm:$0x7]
        %v305 = vld [vmem:[%s195 + $0x328] sm:$0x7]
        %v306 = vld [vmem:[%s195 + $0x330] sm:$0x7]
        %v307 = vld [vmem:[%s195 + $0x338] sm:$0x7]
        %v308 = vld [vmem:[%s195 + $0x340] sm:$0x7]
        %v309 = vld [vmem:[%s195 + $0x348] sm:$0x7]
        %v310 = vld [vmem:[%s195 + $0x350] sm:$0x7]
        %v311 = vld [vmem:[%s195 + $0x358] sm:$0x7]
        %v312 = vld [vmem:[%s195 + $0x360] sm:$0x7]
        %v313 = vld [vmem:[%s195 + $0x368] sm:$0x7]
        %v314 = vld [vmem:[%s195 + $0x370] sm:$0x7]
        %v315 = vld [vmem:[%s195 + $0x378] sm:$0x7]
        %v316 = vld [vmem:[%s195 + $0x380] sm:$0x7]
        %v317 = vld [vmem:[%s195 + $0x388] sm:$0x7]
        %v318 = vld [vmem:[%s195 + $0x390] sm:$0x7]
        %v319 = vld [vmem:[%s195 + $0x398] sm:$0x7]
        %v320 = vld [vmem:[%s195 + $0x3a0] sm:$0x7]
        %v321 = vld [vmem:[%s195 + $0x3a8] sm:$0x7]
        %v322 = vld [vmem:[%s195 + $0x3b0] sm:$0x7]
        %v323 = vld [vmem:[%s195 + $0x3b8] sm:$0x7]
        %v324 = vld [vmem:[%s195 + $0x3c0] sm:$0x7]
        %v325 = vld [vmem:[%s195 + $0x3c8] sm:$0x7]
        %v326 = vld [vmem:[%s195 + $0x3d0] sm:$0x7]
        %v327 = vld [vmem:[%s195 + $0x3d8] sm:$0x7]
        %v328 = vld [vmem:[%s195 + $0x3e0] sm:$0x7]
        %v329 = vld [vmem:[%s195 + $0x3e8] sm:$0x7]
        %v330 = vld [vmem:[%s195 + $0x3f0] sm:$0x7]
        %v331 = vld [vmem:[%s195 + $0x3f8] sm:$0x7]
        %vm332 = vcmask 220160
        %v334 = vsel %vm332, %v196, 0
        %v337 = vsel %vm332, %v197, 0
        %v340 = vsel %vm332, %v198, 0
        %v343 = vsel %vm332, %v199, 0
        %v346 = vsel %vm332, %v200, 0
        %v349 = vsel %vm332, %v201, 0
        %v352 = vsel %vm332, %v202, 0
        %v355 = vsel %vm332, %v203, 0
        %vm357 = vcmask 1042432
        %v359 = vsel %vm357, %v300, 0
        %v362 = vsel %vm357, %v301, 0
        %v365 = vsel %vm357, %v302, 0
        %v368 = vsel %vm357, %v303, 0
        %v371 = vsel %vm357, %v304, 0
        %v374 = vsel %vm357, %v305, 0
        %v377 = vsel %vm357, %v306, 0
        %v380 = vsel %vm357, %v307, 0
        %v383 = vsel %vm357, %v308, 0
        %v386 = vsel %vm357, %v309, 0
        %v389 = vsel %vm357, %v310, 0
        %v392 = vsel %vm357, %v311, 0
        %v395 = vsel %vm357, %v312, 0
        %v398 = vsel %vm357, %v313, 0
        %v401 = vsel %vm357, %v314, 0
        %v404 = vsel %vm357, %v315, 0
        %v407 = vsel %vm357, %v316, 0
        %v410 = vsel %vm357, %v317, 0
        %v413 = vsel %vm357, %v318, 0
        %v416 = vsel %vm357, %v319, 0
        %v419 = vsel %vm357, %v320, 0
        %v422 = vsel %vm357, %v321, 0
        %v425 = vsel %vm357, %v322, 0
        %v428 = vsel %vm357, %v323, 0
        %v431 = vsel %vm357, %v324, 0
        %v434 = vsel %vm357, %v325, 0
        %v437 = vsel %vm357, %v326, 0
        %v440 = vsel %vm357, %v327, 0
        %v443 = vsel %vm357, %v328, 0
        %v446 = vsel %vm357, %v329, 0
        %v449 = vsel %vm357, %v330, 0
        %v452 = vsel %vm357, %v331, 0
        %454 = vmatprep.subr.mxu0 0.0
        %455 = vmatpush1.msra.mxu0 0.0
        %456 = vmatprep.subr.mxu0 0.0
        %457 = vmatpush1.msra.mxu0 0.0
        %458 = vmatprep.subr.mxu0 0.0
        %459 = vmatpush1.msra.mxu0 0.0
        %460 = vmatprep.subr.mxu0 0.0
        %461 = vmatpush1.msra.mxu0 0.0
        %462 = vmatprep.subr.mxu0 0.0
        %463 = vmatpush1.msra.mxu0 0.0
        %464 = vmatprep.subr.mxu0 0.0
        %465 = vmatpush1.msra.mxu0 0.0
        %466 = vmatprep.subr.mxu0 0.0
        %467 = vmatpush1.msra.mxu0 0.0
        %468 = vmatprep.subr.mxu0 0.0
        %469 = vmatpush1.msra.mxu0 0.0
        %470 = vmatprep.subr.mxu0 0.0
        %471 = vmatpush1.msra.mxu0 0.0
        %472 = vmatprep.subr.mxu0 0.0
        %473 = vmatpush1.msra.mxu0 0.0
        %474 = vmatprep.subr.mxu0 0.0
        %475 = vmatpush1.msra.mxu0 0.0
        %476 = vmatprep.subr.mxu0 0.0
        %477 = vmatpush1.msra.mxu0 0.0
        %478 = vmatprep.subr.mxu0 %v362
        %479 = vmatpush1.msra.mxu0 %v359
        %480 = vmatprep.subr.mxu0 %v269
        %481 = vmatpush1.msra.mxu0 %v268
        %482 = vmatprep.subr.mxu0 %v237
        %483 = vmatpush1.msra.mxu0 %v236
        %484 = vmatprep.subr.mxu0 %v205
        %485 = vmatpush1.msra.mxu0 %v204
        %486 = vmatprep.subr.mxu0 0.0
        %487 = vmatpush2.msra.mxu0 0.0
        %488 = vmatprep.subr.mxu0 0.0
        %489 = vmatpush2.msra.mxu0 0.0
        %490 = vmatprep.subr.mxu0 0.0
        %491 = vmatpush2.msra.mxu0 0.0
        %492 = vmatprep.subr.mxu0 0.0
        %493 = vmatpush2.msra.mxu0 0.0
        %494 = vmatprep.subr.mxu0 0.0
        %495 = vmatpush2.msra.mxu0 0.0
        %496 = vmatprep.subr.mxu0 0.0
        %497 = vmatpush2.msra.mxu0 0.0
        %498 = vmatprep.subr.mxu0 0.0
        %499 = vmatpush2.msra.mxu0 0.0
        %500 = vmatprep.subr.mxu0 0.0
        %501 = vmatpush2.msra.mxu0 0.0
        %502 = vmatprep.subr.mxu0 0.0
        %503 = vmatpush2.msra.mxu0 0.0
        %504 = vmatprep.subr.mxu0 0.0
        %505 = vmatpush2.msra.mxu0 0.0
        %506 = vmatprep.subr.mxu0 0.0
        %507 = vmatpush2.msra.mxu0 0.0
        %508 = vmatprep.subr.mxu0 0.0
        %509 = vmatpush2.msra.mxu0 0.0
        %510 = vmatprep.subr.mxu0 0.0
        %511 = vmatpush2.msra.mxu0 0.0
        %512 = vmatprep.subr.mxu0 0.0
        %513 = vmatpush2.msra.mxu0 0.0
        %514 = vmatprep.subr.mxu0 0.0
        %515 = vmatpush2.msra.mxu0 0.0
        %516 = vmatprep.subr.mxu0 0.0
        %517 = vmatpush2.msra.mxu0 0.0
        %518 = vmatprep.mubr.f32.mxu0 0.0
        %519 = vmatmul.mubr.f32.gmra.mxu0 %v334
        %v520 = vpop.f32.mrf.mxu0
        %v521 = vadd.f32 0.0, %v520
        %v522 = vpop.f32.mrf.mxu0
        %v523 = vadd.f32 0.0, %v522
        %524 = vmatprep.mubr.f32.mxu0 0.0
        %525 = vmatmul.mubr.f32.gmra.mxu0 %v337
        %v526 = vpop.f32.mrf.mxu0
        %v527 = vadd.f32 0.0, %v526
        %v528 = vpop.f32.mrf.mxu0
        %v529 = vadd.f32 0.0, %v528
        %530 = vmatprep.mubr.f32.mxu0 0.0
        %531 = vmatmul.mubr.f32.gmra.mxu0 %v340
        %v532 = vpop.f32.mrf.mxu0
        %v533 = vadd.f32 0.0, %v532
        %v534 = vpop.f32.mrf.mxu0
        %v535 = vadd.f32 0.0, %v534
        %536 = vmatprep.mubr.f32.mxu0 0.0
        %537 = vmatmul.mubr.f32.gmra.mxu0 %v343
        %v538 = vpop.f32.mrf.mxu0
        %v539 = vadd.f32 0.0, %v538
        %v540 = vpop.f32.mrf.mxu0
        %v541 = vadd.f32 0.0, %v540
        %542 = vmatprep.mubr.f32.mxu0 0.0
        %543 = vmatmul.mubr.f32.gmra.mxu0 %v346
        %v544 = vpop.f32.mrf.mxu0
        %v545 = vadd.f32 0.0, %v544
        %v546 = vpop.f32.mrf.mxu0
        %v547 = vadd.f32 0.0, %v546
        %548 = vmatprep.mubr.f32.mxu0 0.0
        %549 = vmatmul.mubr.f32.gmra.mxu0 %v349
        %v550 = vpop.f32.mrf.mxu0
        %v551 = vadd.f32 0.0, %v550
        %v552 = vpop.f32.mrf.mxu0
        %v553 = vadd.f32 0.0, %v552
        %554 = vmatprep.mubr.f32.mxu0 0.0
        %555 = vmatmul.mubr.f32.gmra.mxu0 %v352
        %v556 = vpop.f32.mrf.mxu0
        %v557 = vadd.f32 0.0, %v556
        %v558 = vpop.f32.mrf.mxu0
        %v559 = vadd.f32 0.0, %v558
        %560 = vmatprep.mubr.f32.mxu0 0.0
        %561 = vmatmul.mubr.f32.gmra.mxu0 %v355
        %v562 = vpop.f32.mrf.mxu0
        %v563 = vadd.f32 0.0, %v562
        %v564 = vpop.f32.mrf.mxu0
        %v565 = vadd.f32 0.0, %v564
        %566 = vdwg.mxu0
        %567 = vmatprep.subr.mxu0 0.0
        %568 = vmatpush1.msra.mxu0 0.0
        %569 = vmatprep.subr.mxu0 0.0
        %570 = vmatpush1.msra.mxu0 0.0
        %571 = vmatprep.subr.mxu0 0.0
        %572 = vmatpush1.msra.mxu0 0.0
        %573 = vmatprep.subr.mxu0 0.0
        %574 = vmatpush1.msra.mxu0 0.0
        %575 = vmatprep.subr.mxu0 0.0
        %576 = vmatpush1.msra.mxu0 0.0
        %577 = vmatprep.subr.mxu0 0.0
        %578 = vmatpush1.msra.mxu0 0.0
        %579 = vmatprep.subr.mxu0 0.0
        %580 = vmatpush1.msra.mxu0 0.0
        %581 = vmatprep.subr.mxu0 0.0
        %582 = vmatpush1.msra.mxu0 0.0
        %583 = vmatprep.subr.mxu0 0.0
        %584 = vmatpush1.msra.mxu0 0.0
        %585 = vmatprep.subr.mxu0 0.0
        %586 = vmatpush1.msra.mxu0 0.0
        %587 = vmatprep.subr.mxu0 0.0
        %588 = vmatpush1.msra.mxu0 0.0
        %589 = vmatprep.subr.mxu0 0.0
        %590 = vmatpush1.msra.mxu0 0.0
        %591 = vmatprep.subr.mxu0 %v368
        %592 = vmatpush1.msra.mxu0 %v365
        %593 = vmatprep.subr.mxu0 %v271
        %594 = vmatpush1.msra.mxu0 %v270
        %595 = vmatprep.subr.mxu0 %v239
        %596 = vmatpush1.msra.mxu0 %v238
        %597 = vmatprep.subr.mxu0 %v207
        %598 = vmatpush1.msra.mxu0 %v206
        %599 = vmatprep.subr.mxu0 0.0
        %600 = vmatpush2.msra.mxu0 0.0
        %601 = vmatprep.subr.mxu0 0.0
        %602 = vmatpush2.msra.mxu0 0.0
        %603 = vmatprep.subr.mxu0 0.0
        %604 = vmatpush2.msra.mxu0 0.0
        %605 = vmatprep.subr.mxu0 0.0
        %606 = vmatpush2.msra.mxu0 0.0
        %607 = vmatprep.subr.mxu0 0.0
        %608 = vmatpush2.msra.mxu0 0.0
        %609 = vmatprep.subr.mxu0 0.0
        %610 = vmatpush2.msra.mxu0 0.0
        %611 = vmatprep.subr.mxu0 0.0
        %612 = vmatpush2.msra.mxu0 0.0
        %613 = vmatprep.subr.mxu0 0.0
        %614 = vmatpush2.msra.mxu0 0.0
        %615 = vmatprep.subr.mxu0 0.0
        %616 = vmatpush2.msra.mxu0 0.0
        %617 = vmatprep.subr.mxu0 0.0
        %618 = vmatpush2.msra.mxu0 0.0
        %619 = vmatprep.subr.mxu0 0.0
        %620 = vmatpush2.msra.mxu0 0.0
        %621 = vmatprep.subr.mxu0 0.0
        %622 = vmatpush2.msra.mxu0 0.0
        %623 = vmatprep.subr.mxu0 0.0
        %624 = vmatpush2.msra.mxu0 0.0
        %625 = vmatprep.subr.mxu0 0.0
        %626 = vmatpush2.msra.mxu0 0.0
        %627 = vmatprep.subr.mxu0 0.0
        %628 = vmatpush2.msra.mxu0 0.0
        %629 = vmatprep.subr.mxu0 0.0
        %630 = vmatpush2.msra.mxu0 0.0
        %631 = vmatprep.mubr.f32.mxu0 0.0
        %632 = vmatmul.mubr.f32.gmra.mxu0 %v334
        %v633 = vpop.f32.mrf.mxu0
        %v634 = vadd.f32 0.0, %v633
        %v635 = vpop.f32.mrf.mxu0
        %v636 = vadd.f32 0.0, %v635
        %637 = vmatprep.mubr.f32.mxu0 0.0
        %638 = vmatmul.mubr.f32.gmra.mxu0 %v337
        %v639 = vpop.f32.mrf.mxu0
        %v640 = vadd.f32 0.0, %v639
        %v641 = vpop.f32.mrf.mxu0
        %v642 = vadd.f32 0.0, %v641
        %643 = vmatprep.mubr.f32.mxu0 0.0
        %644 = vmatmul.mubr.f32.gmra.mxu0 %v340
        %v645 = vpop.f32.mrf.mxu0
        %v646 = vadd.f32 0.0, %v645
        %v647 = vpop.f32.mrf.mxu0
        %v648 = vadd.f32 0.0, %v647
        %649 = vmatprep.mubr.f32.mxu0 0.0
        %650 = vmatmul.mubr.f32.gmra.mxu0 %v343
        %v651 = vpop.f32.mrf.mxu0
        %v652 = vadd.f32 0.0, %v651
        %v653 = vpop.f32.mrf.mxu0
        %v654 = vadd.f32 0.0, %v653
        %655 = vmatprep.mubr.f32.mxu0 0.0
        %656 = vmatmul.mubr.f32.gmra.mxu0 %v346
        %v657 = vpop.f32.mrf.mxu0
        %v658 = vadd.f32 0.0, %v657
        %v659 = vpop.f32.mrf.mxu0
        %v660 = vadd.f32 0.0, %v659
        %661 = vmatprep.mubr.f32.mxu0 0.0
        %662 = vmatmul.mubr.f32.gmra.mxu0 %v349
        %v663 = vpop.f32.mrf.mxu0
        %v664 = vadd.f32 0.0, %v663
        %v665 = vpop.f32.mrf.mxu0
        %v666 = vadd.f32 0.0, %v665
        %667 = vmatprep.mubr.f32.mxu0 0.0
        %668 = vmatmul.mubr.f32.gmra.mxu0 %v352
        %v669 = vpop.f32.mrf.mxu0
        %v670 = vadd.f32 0.0, %v669
        %v671 = vpop.f32.mrf.mxu0
        %v672 = vadd.f32 0.0, %v671
        %673 = vmatprep.mubr.f32.mxu0 0.0
        %674 = vmatmul.mubr.f32.gmra.mxu0 %v355
        %v675 = vpop.f32.mrf.mxu0
        %v676 = vadd.f32 0.0, %v675
        %v677 = vpop.f32.mrf.mxu0
        %v678 = vadd.f32 0.0, %v677
        %679 = vdwg.mxu0
        %680 = vmatprep.subr.mxu0 0.0
        %681 = vmatpush1.msra.mxu0 0.0
        %682 = vmatprep.subr.mxu0 0.0
        %683 = vmatpush1.msra.mxu0 0.0
        %684 = vmatprep.subr.mxu0 0.0
        %685 = vmatpush1.msra.mxu0 0.0
        %686 = vmatprep.subr.mxu0 0.0
        %687 = vmatpush1.msra.mxu0 0.0
        %688 = vmatprep.subr.mxu0 0.0
        %689 = vmatpush1.msra.mxu0 0.0
        %690 = vmatprep.subr.mxu0 0.0
        %691 = vmatpush1.msra.mxu0 0.0
        %692 = vmatprep.subr.mxu0 0.0
        %693 = vmatpush1.msra.mxu0 0.0
        %694 = vmatprep.subr.mxu0 0.0
        %695 = vmatpush1.msra.mxu0 0.0
        %696 = vmatprep.subr.mxu0 0.0
        %697 = vmatpush1.msra.mxu0 0.0
        %698 = vmatprep.subr.mxu0 0.0
        %699 = vmatpush1.msra.mxu0 0.0
        %700 = vmatprep.subr.mxu0 0.0
        %701 = vmatpush1.msra.mxu0 0.0
        %702 = vmatprep.subr.mxu0 0.0
        %703 = vmatpush1.msra.mxu0 0.0
        %704 = vmatprep.subr.mxu0 %v374
        %705 = vmatpush1.msra.mxu0 %v371
        %706 = vmatprep.subr.mxu0 %v273
        %707 = vmatpush1.msra.mxu0 %v272
        %708 = vmatprep.subr.mxu0 %v241
        %709 = vmatpush1.msra.mxu0 %v240
        %710 = vmatprep.subr.mxu0 %v209
        %711 = vmatpush1.msra.mxu0 %v208
        %712 = vmatprep.subr.mxu0 0.0
        %713 = vmatpush2.msra.mxu0 0.0
        %714 = vmatprep.subr.mxu0 0.0
        %715 = vmatpush2.msra.mxu0 0.0
        %716 = vmatprep.subr.mxu0 0.0
        %717 = vmatpush2.msra.mxu0 0.0
        %718 = vmatprep.subr.mxu0 0.0
        %719 = vmatpush2.msra.mxu0 0.0
        %720 = vmatprep.subr.mxu0 0.0
        %721 = vmatpush2.msra.mxu0 0.0
        %722 = vmatprep.subr.mxu0 0.0
        %723 = vmatpush2.msra.mxu0 0.0
        %724 = vmatprep.subr.mxu0 0.0
        %725 = vmatpush2.msra.mxu0 0.0
        %726 = vmatprep.subr.mxu0 0.0
        %727 = vmatpush2.msra.mxu0 0.0
        %728 = vmatprep.subr.mxu0 0.0
        %729 = vmatpush2.msra.mxu0 0.0
        %730 = vmatprep.subr.mxu0 0.0
        %731 = vmatpush2.msra.mxu0 0.0
        %732 = vmatprep.subr.mxu0 0.0
        %733 = vmatpush2.msra.mxu0 0.0
        %734 = vmatprep.subr.mxu0 0.0
        %735 = vmatpush2.msra.mxu0 0.0
        %736 = vmatprep.subr.mxu0 0.0
        %737 = vmatpush2.msra.mxu0 0.0
        %738 = vmatprep.subr.mxu0 0.0
        %739 = vmatpush2.msra.mxu0 0.0
        %740 = vmatprep.subr.mxu0 0.0
        %741 = vmatpush2.msra.mxu0 0.0
        %742 = vmatprep.subr.mxu0 0.0
        %743 = vmatpush2.msra.mxu0 0.0
        %744 = vmatprep.mubr.f32.mxu0 0.0
        %745 = vmatmul.mubr.f32.gmra.mxu0 %v334
        %v746 = vpop.f32.mrf.mxu0
        %v747 = vadd.f32 0.0, %v746
        %v748 = vpop.f32.mrf.mxu0
        %v749 = vadd.f32 0.0, %v748
        %750 = vmatprep.mubr.f32.mxu0 0.0
        %751 = vmatmul.mubr.f32.gmra.mxu0 %v337
        %v752 = vpop.f32.mrf.mxu0
        %v753 = vadd.f32 0.0, %v752
        %v754 = vpop.f32.mrf.mxu0
        %v755 = vadd.f32 0.0, %v754
        %756 = vmatprep.mubr.f32.mxu0 0.0
        %757 = vmatmul.mubr.f32.gmra.mxu0 %v340
        %v758 = vpop.f32.mrf.mxu0
        %v759 = vadd.f32 0.0, %v758
        %v760 = vpop.f32.mrf.mxu0
        %v761 = vadd.f32 0.0, %v760
        %762 = vmatprep.mubr.f32.mxu0 0.0
        %763 = vmatmul.mubr.f32.gmra.mxu0 %v343
        %v764 = vpop.f32.mrf.mxu0
        %v765 = vadd.f32 0.0, %v764
        %v766 = vpop.f32.mrf.mxu0
        %v767 = vadd.f32 0.0, %v766
        %768 = vmatprep.mubr.f32.mxu0 0.0
        %769 = vmatmul.mubr.f32.gmra.mxu0 %v346
        %v770 = vpop.f32.mrf.mxu0
        %v771 = vadd.f32 0.0, %v770
        %v772 = vpop.f32.mrf.mxu0
        %v773 = vadd.f32 0.0, %v772
        %774 = vmatprep.mubr.f32.mxu0 0.0
        %775 = vmatmul.mubr.f32.gmra.mxu0 %v349
        %v776 = vpop.f32.mrf.mxu0
        %v777 = vadd.f32 0.0, %v776
        %v778 = vpop.f32.mrf.mxu0
        %v779 = vadd.f32 0.0, %v778
        %780 = vmatprep.mubr.f32.mxu0 0.0
        %781 = vmatmul.mubr.f32.gmra.mxu0 %v352
        %v782 = vpop.f32.mrf.mxu0
        %v783 = vadd.f32 0.0, %v782
        %v784 = vpop.f32.mrf.mxu0
        %v785 = vadd.f32 0.0, %v784
        %786 = vmatprep.mubr.f32.mxu0 0.0
        %787 = vmatmul.mubr.f32.gmra.mxu0 %v355
        %v788 = vpop.f32.mrf.mxu0
        %v789 = vadd.f32 0.0, %v788
        %v790 = vpop.f32.mrf.mxu0
        %v791 = vadd.f32 0.0, %v790
        %792 = vdwg.mxu0
        %793 = vmatprep.subr.mxu0 0.0
        %794 = vmatpush1.msra.mxu0 0.0
        %795 = vmatprep.subr.mxu0 0.0
        %796 = vmatpush1.msra.mxu0 0.0
        %797 = vmatprep.subr.mxu0 0.0
        %798 = vmatpush1.msra.mxu0 0.0
        %799 = vmatprep.subr.mxu0 0.0
        %800 = vmatpush1.msra.mxu0 0.0
        %801 = vmatprep.subr.mxu0 0.0
        %802 = vmatpush1.msra.mxu0 0.0
        %803 = vmatprep.subr.mxu0 0.0
        %804 = vmatpush1.msra.mxu0 0.0
        %805 = vmatprep.subr.mxu0 0.0
        %806 = vmatpush1.msra.mxu0 0.0
        %807 = vmatprep.subr.mxu0 0.0
        %808 = vmatpush1.msra.mxu0 0.0
        %809 = vmatprep.subr.mxu0 0.0
        %810 = vmatpush1.msra.mxu0 0.0
        %811 = vmatprep.subr.mxu0 0.0
        %812 = vmatpush1.msra.mxu0 0.0
        %813 = vmatprep.subr.mxu0 0.0
        %814 = vmatpush1.msra.mxu0 0.0
        %815 = vmatprep.subr.mxu0 0.0
        %816 = vmatpush1.msra.mxu0 0.0
        %817 = vmatprep.subr.mxu0 %v380
        %818 = vmatpush1.msra.mxu0 %v377
        %819 = vmatprep.subr.mxu0 %v275
        %820 = vmatpush1.msra.mxu0 %v274
        %821 = vmatprep.subr.mxu0 %v243
        %822 = vmatpush1.msra.mxu0 %v242
        %823 = vmatprep.subr.mxu0 %v211
        %824 = vmatpush1.msra.mxu0 %v210
        %825 = vmatprep.subr.mxu0 0.0
        %826 = vmatpush2.msra.mxu0 0.0
        %827 = vmatprep.subr.mxu0 0.0
        %828 = vmatpush2.msra.mxu0 0.0
        %829 = vmatprep.subr.mxu0 0.0
        %830 = vmatpush2.msra.mxu0 0.0
        %831 = vmatprep.subr.mxu0 0.0
        %832 = vmatpush2.msra.mxu0 0.0
        %833 = vmatprep.subr.mxu0 0.0
        %834 = vmatpush2.msra.mxu0 0.0
        %835 = vmatprep.subr.mxu0 0.0
        %836 = vmatpush2.msra.mxu0 0.0
        %837 = vmatprep.subr.mxu0 0.0
        %838 = vmatpush2.msra.mxu0 0.0
        %839 = vmatprep.subr.mxu0 0.0
        %840 = vmatpush2.msra.mxu0 0.0
        %841 = vmatprep.subr.mxu0 0.0
        %842 = vmatpush2.msra.mxu0 0.0
        %843 = vmatprep.subr.mxu0 0.0
        %844 = vmatpush2.msra.mxu0 0.0
        %845 = vmatprep.subr.mxu0 0.0
        %846 = vmatpush2.msra.mxu0 0.0
        %847 = vmatprep.subr.mxu0 0.0
        %848 = vmatpush2.msra.mxu0 0.0
        %849 = vmatprep.subr.mxu0 0.0
        %850 = vmatpush2.msra.mxu0 0.0
        %851 = vmatprep.subr.mxu0 0.0
        %852 = vmatpush2.msra.mxu0 0.0
        %853 = vmatprep.subr.mxu0 0.0
        %854 = vmatpush2.msra.mxu0 0.0
        %855 = vmatprep.subr.mxu0 0.0
        %856 = vmatpush2.msra.mxu0 0.0
        %857 = vmatprep.mubr.f32.mxu0 0.0
        %858 = vmatmul.mubr.f32.gmra.mxu0 %v334
        %v859 = vpop.f32.mrf.mxu0
        %v860 = vadd.f32 0.0, %v859
        %v861 = vpop.f32.mrf.mxu0
        %v862 = vadd.f32 0.0, %v861
        %863 = vmatprep.mubr.f32.mxu0 0.0
        %864 = vmatmul.mubr.f32.gmra.mxu0 %v337
        %v865 = vpop.f32.mrf.mxu0
        %v866 = vadd.f32 0.0, %v865
        %v867 = vpop.f32.mrf.mxu0
        %v868 = vadd.f32 0.0, %v867
        %869 = vmatprep.mubr.f32.mxu0 0.0
        %870 = vmatmul.mubr.f32.gmra.mxu0 %v340
        %v871 = vpop.f32.mrf.mxu0
        %v872 = vadd.f32 0.0, %v871
        %v873 = vpop.f32.mrf.mxu0
        %v874 = vadd.f32 0.0, %v873
        %875 = vmatprep.mubr.f32.mxu0 0.0
        %876 = vmatmul.mubr.f32.gmra.mxu0 %v343
        %v877 = vpop.f32.mrf.mxu0
        %v878 = vadd.f32 0.0, %v877
        %v879 = vpop.f32.mrf.mxu0
        %v880 = vadd.f32 0.0, %v879
        %881 = vmatprep.mubr.f32.mxu0 0.0
        %882 = vmatmul.mubr.f32.gmra.mxu0 %v346
        %v883 = vpop.f32.mrf.mxu0
        %v884 = vadd.f32 0.0, %v883
        %v885 = vpop.f32.mrf.mxu0
        %v886 = vadd.f32 0.0, %v885
        %887 = vmatprep.mubr.f32.mxu0 0.0
        %888 = vmatmul.mubr.f32.gmra.mxu0 %v349
        %v889 = vpop.f32.mrf.mxu0
        %v890 = vadd.f32 0.0, %v889
        %v891 = vpop.f32.mrf.mxu0
        %v892 = vadd.f32 0.0, %v891
        %893 = vmatprep.mubr.f32.mxu0 0.0
        %894 = vmatmul.mubr.f32.gmra.mxu0 %v352
        %v895 = vpop.f32.mrf.mxu0
        %v896 = vadd.f32 0.0, %v895
        %v897 = vpop.f32.mrf.mxu0
        %v898 = vadd.f32 0.0, %v897
        %899 = vmatprep.mubr.f32.mxu0 0.0
        %900 = vmatmul.mubr.f32.gmra.mxu0 %v355
        %v901 = vpop.f32.mrf.mxu0
        %v902 = vadd.f32 0.0, %v901
        %v903 = vpop.f32.mrf.mxu0
        %v904 = vadd.f32 0.0, %v903
        %905 = vdwg.mxu0
        %906 = vmatprep.subr.mxu0 0.0
        %907 = vmatpush1.msra.mxu0 0.0
        %908 = vmatprep.subr.mxu0 0.0
        %909 = vmatpush1.msra.mxu0 0.0
        %910 = vmatprep.subr.mxu0 0.0
        %911 = vmatpush1.msra.mxu0 0.0
        %912 = vmatprep.subr.mxu0 0.0
        %913 = vmatpush1.msra.mxu0 0.0
        %914 = vmatprep.subr.mxu0 0.0
        %915 = vmatpush1.msra.mxu0 0.0
        %916 = vmatprep.subr.mxu0 0.0
        %917 = vmatpush1.msra.mxu0 0.0
        %918 = vmatprep.subr.mxu0 0.0
        %919 = vmatpush1.msra.mxu0 0.0
        %920 = vmatprep.subr.mxu0 0.0
        %921 = vmatpush1.msra.mxu0 0.0
        %922 = vmatprep.subr.mxu0 0.0
        %923 = vmatpush1.msra.mxu0 0.0
        %924 = vmatprep.subr.mxu0 0.0
        %925 = vmatpush1.msra.mxu0 0.0
        %926 = vmatprep.subr.mxu0 0.0
        %927 = vmatpush1.msra.mxu0 0.0
        %928 = vmatprep.subr.mxu0 0.0
        %929 = vmatpush1.msra.mxu0 0.0
        %930 = vmatprep.subr.mxu0 %v386
        %931 = vmatpush1.msra.mxu0 %v383
        %932 = vmatprep.subr.mxu0 %v277
        %933 = vmatpush1.msra.mxu0 %v276
        %934 = vmatprep.subr.mxu0 %v245
        %935 = vmatpush1.msra.mxu0 %v244
        %936 = vmatprep.subr.mxu0 %v213
        %937 = vmatpush1.msra.mxu0 %v212
        %938 = vmatprep.subr.mxu0 0.0
        %939 = vmatpush2.msra.mxu0 0.0
        %940 = vmatprep.subr.mxu0 0.0
        %941 = vmatpush2.msra.mxu0 0.0
        %942 = vmatprep.subr.mxu0 0.0
        %943 = vmatpush2.msra.mxu0 0.0
        %944 = vmatprep.subr.mxu0 0.0
        %945 = vmatpush2.msra.mxu0 0.0
        %946 = vmatprep.subr.mxu0 0.0
        %947 = vmatpush2.msra.mxu0 0.0
        %948 = vmatprep.subr.mxu0 0.0
        %949 = vmatpush2.msra.mxu0 0.0
        %950 = vmatprep.subr.mxu0 0.0
        %951 = vmatpush2.msra.mxu0 0.0
        %952 = vmatprep.subr.mxu0 0.0
        %953 = vmatpush2.msra.mxu0 0.0
        %954 = vmatprep.subr.mxu0 0.0
        %955 = vmatpush2.msra.mxu0 0.0
        %956 = vmatprep.subr.mxu0 0.0
        %957 = vmatpush2.msra.mxu0 0.0
        %958 = vmatprep.subr.mxu0 0.0
        %959 = vmatpush2.msra.mxu0 0.0
        %960 = vmatprep.subr.mxu0 0.0
        %961 = vmatpush2.msra.mxu0 0.0
        %962 = vmatprep.subr.mxu0 0.0
        %963 = vmatpush2.msra.mxu0 0.0
        %964 = vmatprep.subr.mxu0 0.0
        %965 = vmatpush2.msra.mxu0 0.0
        %966 = vmatprep.subr.mxu0 0.0
        %967 = vmatpush2.msra.mxu0 0.0
        %968 = vmatprep.subr.mxu0 0.0
        %969 = vmatpush2.msra.mxu0 0.0
        %970 = vmatprep.mubr.f32.mxu0 0.0
        %971 = vmatmul.mubr.f32.gmra.mxu0 %v334
        %v972 = vpop.f32.mrf.mxu0
        %v973 = vadd.f32 0.0, %v972
        %v974 = vpop.f32.mrf.mxu0
        %v975 = vadd.f32 0.0, %v974
        %976 = vmatprep.mubr.f32.mxu0 0.0
        %977 = vmatmul.mubr.f32.gmra.mxu0 %v337
        %v978 = vpop.f32.mrf.mxu0
        %v979 = vadd.f32 0.0, %v978
        %v980 = vpop.f32.mrf.mxu0
        %v981 = vadd.f32 0.0, %v980
        %982 = vmatprep.mubr.f32.mxu0 0.0
        %983 = vmatmul.mubr.f32.gmra.mxu0 %v340
        %v984 = vpop.f32.mrf.mxu0
        %v985 = vadd.f32 0.0, %v984
        %v986 = vpop.f32.mrf.mxu0
        %v987 = vadd.f32 0.0, %v986
        %988 = vmatprep.mubr.f32.mxu0 0.0
        %989 = vmatmul.mubr.f32.gmra.mxu0 %v343
        %v990 = vpop.f32.mrf.mxu0
        %v991 = vadd.f32 0.0, %v990
        %v992 = vpop.f32.mrf.mxu0
        %v993 = vadd.f32 0.0, %v992
        %994 = vmatprep.mubr.f32.mxu0 0.0
        %995 = vmatmul.mubr.f32.gmra.mxu0 %v346
        %v996 = vpop.f32.mrf.mxu0
        %v997 = vadd.f32 0.0, %v996
        %v998 = vpop.f32.mrf.mxu0
        %v999 = vadd.f32 0.0, %v998
        %1000 = vmatprep.mubr.f32.mxu0 0.0
        %1001 = vmatmul.mubr.f32.gmra.mxu0 %v349
        %v1002 = vpop.f32.mrf.mxu0
        %v1003 = vadd.f32 0.0, %v1002
        %v1004 = vpop.f32.mrf.mxu0
        %v1005 = vadd.f32 0.0, %v1004
        %1006 = vmatprep.mubr.f32.mxu0 0.0
        %1007 = vmatmul.mubr.f32.gmra.mxu0 %v352
        %v1008 = vpop.f32.mrf.mxu0
        %v1009 = vadd.f32 0.0, %v1008
        %v1010 = vpop.f32.mrf.mxu0
        %v1011 = vadd.f32 0.0, %v1010
        %1012 = vmatprep.mubr.f32.mxu0 0.0
        %1013 = vmatmul.mubr.f32.gmra.mxu0 %v355
        %v1014 = vpop.f32.mrf.mxu0
        %v1015 = vadd.f32 0.0, %v1014
        %v1016 = vpop.f32.mrf.mxu0
        %v1017 = vadd.f32 0.0, %v1016
        %1018 = vdwg.mxu0
        %1019 = vmatprep.subr.mxu0 0.0
        %1020 = vmatpush1.msra.mxu0 0.0
        %1021 = vmatprep.subr.mxu0 0.0
        %1022 = vmatpush1.msra.mxu0 0.0
        %1023 = vmatprep.subr.mxu0 0.0
        %1024 = vmatpush1.msra.mxu0 0.0
        %1025 = vmatprep.subr.mxu0 0.0
        %1026 = vmatpush1.msra.mxu0 0.0
        %1027 = vmatprep.subr.mxu0 0.0
        %1028 = vmatpush1.msra.mxu0 0.0
        %1029 = vmatprep.subr.mxu0 0.0
        %1030 = vmatpush1.msra.mxu0 0.0
        %1031 = vmatprep.subr.mxu0 0.0
        %1032 = vmatpush1.msra.mxu0 0.0
        %1033 = vmatprep.subr.mxu0 0.0
        %1034 = vmatpush1.msra.mxu0 0.0
        %1035 = vmatprep.subr.mxu0 0.0
        %1036 = vmatpush1.msra.mxu0 0.0
        %1037 = vmatprep.subr.mxu0 0.0
        %1038 = vmatpush1.msra.mxu0 0.0
        %1039 = vmatprep.subr.mxu0 0.0
        %1040 = vmatpush1.msra.mxu0 0.0
        %1041 = vmatprep.subr.mxu0 0.0
        %1042 = vmatpush1.msra.mxu0 0.0
        %1043 = vmatprep.subr.mxu0 %v392
        %1044 = vmatpush1.msra.mxu0 %v389
        %1045 = vmatprep.subr.mxu0 %v279
        %1046 = vmatpush1.msra.mxu0 %v278
        %1047 = vmatprep.subr.mxu0 %v247
        %1048 = vmatpush1.msra.mxu0 %v246
        %1049 = vmatprep.subr.mxu0 %v215
        %1050 = vmatpush1.msra.mxu0 %v214
        %1051 = vmatprep.subr.mxu0 0.0
        %1052 = vmatpush2.msra.mxu0 0.0
        %1053 = vmatprep.subr.mxu0 0.0
        %1054 = vmatpush2.msra.mxu0 0.0
        %1055 = vmatprep.subr.mxu0 0.0
        %1056 = vmatpush2.msra.mxu0 0.0
        %1057 = vmatprep.subr.mxu0 0.0
        %1058 = vmatpush2.msra.mxu0 0.0
        %1059 = vmatprep.subr.mxu0 0.0
        %1060 = vmatpush2.msra.mxu0 0.0
        %1061 = vmatprep.subr.mxu0 0.0
        %1062 = vmatpush2.msra.mxu0 0.0
        %1063 = vmatprep.subr.mxu0 0.0
        %1064 = vmatpush2.msra.mxu0 0.0
        %1065 = vmatprep.subr.mxu0 0.0
        %1066 = vmatpush2.msra.mxu0 0.0
        %1067 = vmatprep.subr.mxu0 0.0
        %1068 = vmatpush2.msra.mxu0 0.0
        %1069 = vmatprep.subr.mxu0 0.0
        %1070 = vmatpush2.msra.mxu0 0.0
        %1071 = vmatprep.subr.mxu0 0.0
        %1072 = vmatpush2.msra.mxu0 0.0
        %1073 = vmatprep.subr.mxu0 0.0
        %1074 = vmatpush2.msra.mxu0 0.0
        %1075 = vmatprep.subr.mxu0 0.0
        %1076 = vmatpush2.msra.mxu0 0.0
        %1077 = vmatprep.subr.mxu0 0.0
        %1078 = vmatpush2.msra.mxu0 0.0
        %1079 = vmatprep.subr.mxu0 0.0
        %1080 = vmatpush2.msra.mxu0 0.0
        %1081 = vmatprep.subr.mxu0 0.0
        %1082 = vmatpush2.msra.mxu0 0.0
        %1083 = vmatprep.mubr.f32.mxu0 0.0
        %1084 = vmatmul.mubr.f32.gmra.mxu0 %v334
        %v1085 = vpop.f32.mrf.mxu0
        %v1086 = vadd.f32 0.0, %v1085
        %v1087 = vpop.f32.mrf.mxu0
        %v1088 = vadd.f32 0.0, %v1087
        %1089 = vmatprep.mubr.f32.mxu0 0.0
        %1090 = vmatmul.mubr.f32.gmra.mxu0 %v337
        %v1091 = vpop.f32.mrf.mxu0
        %v1092 = vadd.f32 0.0, %v1091
        %v1093 = vpop.f32.mrf.mxu0
        %v1094 = vadd.f32 0.0, %v1093
        %1095 = vmatprep.mubr.f32.mxu0 0.0
        %1096 = vmatmul.mubr.f32.gmra.mxu0 %v340
        %v1097 = vpop.f32.mrf.mxu0
        %v1098 = vadd.f32 0.0, %v1097
        %v1099 = vpop.f32.mrf.mxu0
        %v1100 = vadd.f32 0.0, %v1099
        %1101 = vmatprep.mubr.f32.mxu0 0.0
        %1102 = vmatmul.mubr.f32.gmra.mxu0 %v343
        %v1103 = vpop.f32.mrf.mxu0
        %v1104 = vadd.f32 0.0, %v1103
        %v1105 = vpop.f32.mrf.mxu0
        %v1106 = vadd.f32 0.0, %v1105
        %1107 = vmatprep.mubr.f32.mxu0 0.0
        %1108 = vmatmul.mubr.f32.gmra.mxu0 %v346
        %v1109 = vpop.f32.mrf.mxu0
        %v1110 = vadd.f32 0.0, %v1109
        %v1111 = vpop.f32.mrf.mxu0
        %v1112 = vadd.f32 0.0, %v1111
        %1113 = vmatprep.mubr.f32.mxu0 0.0
        %1114 = vmatmul.mubr.f32.gmra.mxu0 %v349
        %v1115 = vpop.f32.mrf.mxu0
        %v1116 = vadd.f32 0.0, %v1115
        %v1117 = vpop.f32.mrf.mxu0
        %v1118 = vadd.f32 0.0, %v1117
        %1119 = vmatprep.mubr.f32.mxu0 0.0
        %1120 = vmatmul.mubr.f32.gmra.mxu0 %v352
        %v1121 = vpop.f32.mrf.mxu0
        %v1122 = vadd.f32 0.0, %v1121
        %v1123 = vpop.f32.mrf.mxu0
        %v1124 = vadd.f32 0.0, %v1123
        %1125 = vmatprep.mubr.f32.mxu0 0.0
        %1126 = vmatmul.mubr.f32.gmra.mxu0 %v355
        %v1127 = vpop.f32.mrf.mxu0
        %v1128 = vadd.f32 0.0, %v1127
        %v1129 = vpop.f32.mrf.mxu0
        %v1130 = vadd.f32 0.0, %v1129
        %1131 = vdwg.mxu0
        %1132 = vmatprep.subr.mxu0 0.0
        %1133 = vmatpush1.msra.mxu0 0.0
        %1134 = vmatprep.subr.mxu0 0.0
        %1135 = vmatpush1.msra.mxu0 0.0
        %1136 = vmatprep.subr.mxu0 0.0
        %1137 = vmatpush1.msra.mxu0 0.0
        %1138 = vmatprep.subr.mxu0 0.0
        %1139 = vmatpush1.msra.mxu0 0.0
        %1140 = vmatprep.subr.mxu0 0.0
        %1141 = vmatpush1.msra.mxu0 0.0
        %1142 = vmatprep.subr.mxu0 0.0
        %1143 = vmatpush1.msra.mxu0 0.0
        %1144 = vmatprep.subr.mxu0 0.0
        %1145 = vmatpush1.msra.mxu0 0.0
        %1146 = vmatprep.subr.mxu0 0.0
        %1147 = vmatpush1.msra.mxu0 0.0
        %1148 = vmatprep.subr.mxu0 0.0
        %1149 = vmatpush1.msra.mxu0 0.0
        %1150 = vmatprep.subr.mxu0 0.0
        %1151 = vmatpush1.msra.mxu0 0.0
        %1152 = vmatprep.subr.mxu0 0.0
        %1153 = vmatpush1.msra.mxu0 0.0
        %1154 = vmatprep.subr.mxu0 0.0
        %1155 = vmatpush1.msra.mxu0 0.0
        %1156 = vmatprep.subr.mxu0 %v398
        %1157 = vmatpush1.msra.mxu0 %v395
        %1158 = vmatprep.subr.mxu0 %v281
        %1159 = vmatpush1.msra.mxu0 %v280
        %1160 = vmatprep.subr.mxu0 %v249
        %1161 = vmatpush1.msra.mxu0 %v248
        %1162 = vmatprep.subr.mxu0 %v217
        %1163 = vmatpush1.msra.mxu0 %v216
        %1164 = vmatprep.subr.mxu0 0.0
        %1165 = vmatpush2.msra.mxu0 0.0
        %1166 = vmatprep.subr.mxu0 0.0
        %1167 = vmatpush2.msra.mxu0 0.0
        %1168 = vmatprep.subr.mxu0 0.0
        %1169 = vmatpush2.msra.mxu0 0.0
        %1170 = vmatprep.subr.mxu0 0.0
        %1171 = vmatpush2.msra.mxu0 0.0
        %1172 = vmatprep.subr.mxu0 0.0
        %1173 = vmatpush2.msra.mxu0 0.0
        %1174 = vmatprep.subr.mxu0 0.0
        %1175 = vmatpush2.msra.mxu0 0.0
        %1176 = vmatprep.subr.mxu0 0.0
        %1177 = vmatpush2.msra.mxu0 0.0
        %1178 = vmatprep.subr.mxu0 0.0
        %1179 = vmatpush2.msra.mxu0 0.0
        %1180 = vmatprep.subr.mxu0 0.0
        %1181 = vmatpush2.msra.mxu0 0.0
        %1182 = vmatprep.subr.mxu0 0.0
        %1183 = vmatpush2.msra.mxu0 0.0
        %1184 = vmatprep.subr.mxu0 0.0
        %1185 = vmatpush2.msra.mxu0 0.0
        %1186 = vmatprep.subr.mxu0 0.0
        %1187 = vmatpush2.msra.mxu0 0.0
        %1188 = vmatprep.subr.mxu0 0.0
        %1189 = vmatpush2.msra.mxu0 0.0
        %1190 = vmatprep.subr.mxu0 0.0
        %1191 = vmatpush2.msra.mxu0 0.0
        %1192 = vmatprep.subr.mxu0 0.0
        %1193 = vmatpush2.msra.mxu0 0.0
        %1194 = vmatprep.subr.mxu0 0.0
        %1195 = vmatpush2.msra.mxu0 0.0
        %1196 = vmatprep.mubr.f32.mxu0 0.0
        %1197 = vmatmul.mubr.f32.gmra.mxu0 %v334
        %v1198 = vpop.f32.mrf.mxu0
        %v1199 = vadd.f32 0.0, %v1198
        %v1200 = vpop.f32.mrf.mxu0
        %v1201 = vadd.f32 0.0, %v1200
        %1202 = vmatprep.mubr.f32.mxu0 0.0
        %1203 = vmatmul.mubr.f32.gmra.mxu0 %v337
        %v1204 = vpop.f32.mrf.mxu0
        %v1205 = vadd.f32 0.0, %v1204
        %v1206 = vpop.f32.mrf.mxu0
        %v1207 = vadd.f32 0.0, %v1206
        %1208 = vmatprep.mubr.f32.mxu0 0.0
        %1209 = vmatmul.mubr.f32.gmra.mxu0 %v340
        %v1210 = vpop.f32.mrf.mxu0
        %v1211 = vadd.f32 0.0, %v1210
        %v1212 = vpop.f32.mrf.mxu0
        %v1213 = vadd.f32 0.0, %v1212
        %1214 = vmatprep.mubr.f32.mxu0 0.0
        %1215 = vmatmul.mubr.f32.gmra.mxu0 %v343
        %v1216 = vpop.f32.mrf.mxu0
        %v1217 = vadd.f32 0.0, %v1216
        %v1218 = vpop.f32.mrf.mxu0
        %v1219 = vadd.f32 0.0, %v1218
        %1220 = vmatprep.mubr.f32.mxu0 0.0
        %1221 = vmatmul.mubr.f32.gmra.mxu0 %v346
        %v1222 = vpop.f32.mrf.mxu0
        %v1223 = vadd.f32 0.0, %v1222
        %v1224 = vpop.f32.mrf.mxu0
        %v1225 = vadd.f32 0.0, %v1224
        %1226 = vmatprep.mubr.f32.mxu0 0.0
        %1227 = vmatmul.mubr.f32.gmra.mxu0 %v349
        %v1228 = vpop.f32.mrf.mxu0
        %v1229 = vadd.f32 0.0, %v1228
        %v1230 = vpop.f32.mrf.mxu0
        %v1231 = vadd.f32 0.0, %v1230
        %1232 = vmatprep.mubr.f32.mxu0 0.0
        %1233 = vmatmul.mubr.f32.gmra.mxu0 %v352
        %v1234 = vpop.f32.mrf.mxu0
        %v1235 = vadd.f32 0.0, %v1234
        %v1236 = vpop.f32.mrf.mxu0
        %v1237 = vadd.f32 0.0, %v1236
        %1238 = vmatprep.mubr.f32.mxu0 0.0
        %1239 = vmatmul.mubr.f32.gmra.mxu0 %v355
        %v1240 = vpop.f32.mrf.mxu0
        %v1241 = vadd.f32 0.0, %v1240
        %v1242 = vpop.f32.mrf.mxu0
        %v1243 = vadd.f32 0.0, %v1242
        %1244 = vdwg.mxu0
        %1245 = vmatprep.subr.mxu0 0.0
        %1246 = vmatpush1.msra.mxu0 0.0
        %1247 = vmatprep.subr.mxu0 0.0
        %1248 = vmatpush1.msra.mxu0 0.0
        %1249 = vmatprep.subr.mxu0 0.0
        %1250 = vmatpush1.msra.mxu0 0.0
        %1251 = vmatprep.subr.mxu0 0.0
        %1252 = vmatpush1.msra.mxu0 0.0
        %1253 = vmatprep.subr.mxu0 0.0
        %1254 = vmatpush1.msra.mxu0 0.0
        %1255 = vmatprep.subr.mxu0 0.0
        %1256 = vmatpush1.msra.mxu0 0.0
        %1257 = vmatprep.subr.mxu0 0.0
        %1258 = vmatpush1.msra.mxu0 0.0
        %1259 = vmatprep.subr.mxu0 0.0
        %1260 = vmatpush1.msra.mxu0 0.0
        %1261 = vmatprep.subr.mxu0 0.0
        %1262 = vmatpush1.msra.mxu0 0.0
        %1263 = vmatprep.subr.mxu0 0.0
        %1264 = vmatpush1.msra.mxu0 0.0
        %1265 = vmatprep.subr.mxu0 0.0
        %1266 = vmatpush1.msra.mxu0 0.0
        %1267 = vmatprep.subr.mxu0 0.0
        %1268 = vmatpush1.msra.mxu0 0.0
        %1269 = vmatprep.subr.mxu0 %v404
        %1270 = vmatpush1.msra.mxu0 %v401
        %1271 = vmatprep.subr.mxu0 %v283
        %1272 = vmatpush1.msra.mxu0 %v282
        %1273 = vmatprep.subr.mxu0 %v251
        %1274 = vmatpush1.msra.mxu0 %v250
        %1275 = vmatprep.subr.mxu0 %v219
        %1276 = vmatpush1.msra.mxu0 %v218
        %1277 = vmatprep.subr.mxu0 0.0
        %1278 = vmatpush2.msra.mxu0 0.0
        %1279 = vmatprep.subr.mxu0 0.0
        %1280 = vmatpush2.msra.mxu0 0.0
        %1281 = vmatprep.subr.mxu0 0.0
        %1282 = vmatpush2.msra.mxu0 0.0
        %1283 = vmatprep.subr.mxu0 0.0
        %1284 = vmatpush2.msra.mxu0 0.0
        %1285 = vmatprep.subr.mxu0 0.0
        %1286 = vmatpush2.msra.mxu0 0.0
        %1287 = vmatprep.subr.mxu0 0.0
        %1288 = vmatpush2.msra.mxu0 0.0
        %1289 = vmatprep.subr.mxu0 0.0
        %1290 = vmatpush2.msra.mxu0 0.0
        %1291 = vmatprep.subr.mxu0 0.0
        %1292 = vmatpush2.msra.mxu0 0.0
        %1293 = vmatprep.subr.mxu0 0.0
        %1294 = vmatpush2.msra.mxu0 0.0
        %1295 = vmatprep.subr.mxu0 0.0
        %1296 = vmatpush2.msra.mxu0 0.0
        %1297 = vmatprep.subr.mxu0 0.0
        %1298 = vmatpush2.msra.mxu0 0.0
        %1299 = vmatprep.subr.mxu0 0.0
        %1300 = vmatpush2.msra.mxu0 0.0
        %1301 = vmatprep.subr.mxu0 0.0
        %1302 = vmatpush2.msra.mxu0 0.0
        %1303 = vmatprep.subr.mxu0 0.0
        %1304 = vmatpush2.msra.mxu0 0.0
        %1305 = vmatprep.subr.mxu0 0.0
        %1306 = vmatpush2.msra.mxu0 0.0
        %1307 = vmatprep.subr.mxu0 0.0
        %1308 = vmatpush2.msra.mxu0 0.0
        %1309 = vmatprep.mubr.f32.mxu0 0.0
        %1310 = vmatmul.mubr.f32.gmra.mxu0 %v334
        %v1311 = vpop.f32.mrf.mxu0
        %v1312 = vadd.f32 0.0, %v1311
        %v1313 = vpop.f32.mrf.mxu0
        %v1314 = vadd.f32 0.0, %v1313
        %1315 = vmatprep.mubr.f32.mxu0 0.0
        %1316 = vmatmul.mubr.f32.gmra.mxu0 %v337
        %v1317 = vpop.f32.mrf.mxu0
        %v1318 = vadd.f32 0.0, %v1317
        %v1319 = vpop.f32.mrf.mxu0
        %v1320 = vadd.f32 0.0, %v1319
        %1321 = vmatprep.mubr.f32.mxu0 0.0
        %1322 = vmatmul.mubr.f32.gmra.mxu0 %v340
        %v1323 = vpop.f32.mrf.mxu0
        %v1324 = vadd.f32 0.0, %v1323
        %v1325 = vpop.f32.mrf.mxu0
        %v1326 = vadd.f32 0.0, %v1325
        %1327 = vmatprep.mubr.f32.mxu0 0.0
        %1328 = vmatmul.mubr.f32.gmra.mxu0 %v343
        %v1329 = vpop.f32.mrf.mxu0
        %v1330 = vadd.f32 0.0, %v1329
        %v1331 = vpop.f32.mrf.mxu0
        %v1332 = vadd.f32 0.0, %v1331
        %1333 = vmatprep.mubr.f32.mxu0 0.0
        %1334 = vmatmul.mubr.f32.gmra.mxu0 %v346
        %v1335 = vpop.f32.mrf.mxu0
        %v1336 = vadd.f32 0.0, %v1335
        %v1337 = vpop.f32.mrf.mxu0
        %v1338 = vadd.f32 0.0, %v1337
        %1339 = vmatprep.mubr.f32.mxu0 0.0
        %1340 = vmatmul.mubr.f32.gmra.mxu0 %v349
        %v1341 = vpop.f32.mrf.mxu0
        %v1342 = vadd.f32 0.0, %v1341
        %v1343 = vpop.f32.mrf.mxu0
        %v1344 = vadd.f32 0.0, %v1343
        %1345 = vmatprep.mubr.f32.mxu0 0.0
        %1346 = vmatmul.mubr.f32.gmra.mxu0 %v352
        %v1347 = vpop.f32.mrf.mxu0
        %v1348 = vadd.f32 0.0, %v1347
        %v1349 = vpop.f32.mrf.mxu0
        %v1350 = vadd.f32 0.0, %v1349
        %1351 = vmatprep.mubr.f32.mxu0 0.0
        %1352 = vmatmul.mubr.f32.gmra.mxu0 %v355
        %v1353 = vpop.f32.mrf.mxu0
        %v1354 = vadd.f32 0.0, %v1353
        %v1355 = vpop.f32.mrf.mxu0
        %v1356 = vadd.f32 0.0, %v1355
        %1357 = vdwg.mxu0
        %1358 = vmatprep.subr.mxu0 0.0
        %1359 = vmatpush1.msra.mxu0 0.0
        %1360 = vmatprep.subr.mxu0 0.0
        %1361 = vmatpush1.msra.mxu0 0.0
        %1362 = vmatprep.subr.mxu0 0.0
        %1363 = vmatpush1.msra.mxu0 0.0
        %1364 = vmatprep.subr.mxu0 0.0
        %1365 = vmatpush1.msra.mxu0 0.0
        %1366 = vmatprep.subr.mxu0 0.0
        %1367 = vmatpush1.msra.mxu0 0.0
        %1368 = vmatprep.subr.mxu0 0.0
        %1369 = vmatpush1.msra.mxu0 0.0
        %1370 = vmatprep.subr.mxu0 0.0
        %1371 = vmatpush1.msra.mxu0 0.0
        %1372 = vmatprep.subr.mxu0 0.0
        %1373 = vmatpush1.msra.mxu0 0.0
        %1374 = vmatprep.subr.mxu0 0.0
        %1375 = vmatpush1.msra.mxu0 0.0
        %1376 = vmatprep.subr.mxu0 0.0
        %1377 = vmatpush1.msra.mxu0 0.0
        %1378 = vmatprep.subr.mxu0 0.0
        %1379 = vmatpush1.msra.mxu0 0.0
        %1380 = vmatprep.subr.mxu0 0.0
        %1381 = vmatpush1.msra.mxu0 0.0
        %1382 = vmatprep.subr.mxu0 %v410
        %1383 = vmatpush1.msra.mxu0 %v407
        %1384 = vmatprep.subr.mxu0 %v285
        %1385 = vmatpush1.msra.mxu0 %v284
        %1386 = vmatprep.subr.mxu0 %v253
        %1387 = vmatpush1.msra.mxu0 %v252
        %1388 = vmatprep.subr.mxu0 %v221
        %1389 = vmatpush1.msra.mxu0 %v220
        %1390 = vmatprep.subr.mxu0 0.0
        %1391 = vmatpush2.msra.mxu0 0.0
        %1392 = vmatprep.subr.mxu0 0.0
        %1393 = vmatpush2.msra.mxu0 0.0
        %1394 = vmatprep.subr.mxu0 0.0
        %1395 = vmatpush2.msra.mxu0 0.0
        %1396 = vmatprep.subr.mxu0 0.0
        %1397 = vmatpush2.msra.mxu0 0.0
        %1398 = vmatprep.subr.mxu0 0.0
        %1399 = vmatpush2.msra.mxu0 0.0
        %1400 = vmatprep.subr.mxu0 0.0
        %1401 = vmatpush2.msra.mxu0 0.0
        %1402 = vmatprep.subr.mxu0 0.0
        %1403 = vmatpush2.msra.mxu0 0.0
        %1404 = vmatprep.subr.mxu0 0.0
        %1405 = vmatpush2.msra.mxu0 0.0
        %1406 = vmatprep.subr.mxu0 0.0
        %1407 = vmatpush2.msra.mxu0 0.0
        %1408 = vmatprep.subr.mxu0 0.0
        %1409 = vmatpush2.msra.mxu0 0.0
        %1410 = vmatprep.subr.mxu0 0.0
        %1411 = vmatpush2.msra.mxu0 0.0
        %1412 = vmatprep.subr.mxu0 0.0
        %1413 = vmatpush2.msra.mxu0 0.0
        %1414 = vmatprep.subr.mxu0 0.0
        %1415 = vmatpush2.msra.mxu0 0.0
        %1416 = vmatprep.subr.mxu0 0.0
        %1417 = vmatpush2.msra.mxu0 0.0
        %1418 = vmatprep.subr.mxu0 0.0
        %1419 = vmatpush2.msra.mxu0 0.0
        %1420 = vmatprep.subr.mxu0 0.0
        %1421 = vmatpush2.msra.mxu0 0.0
        %1422 = vmatprep.mubr.f32.mxu0 0.0
        %1423 = vmatmul.mubr.f32.gmra.mxu0 %v334
        %v1424 = vpop.f32.mrf.mxu0
        %v1425 = vadd.f32 0.0, %v1424
        %v1426 = vpop.f32.mrf.mxu0
        %v1427 = vadd.f32 0.0, %v1426
        %1428 = vmatprep.mubr.f32.mxu0 0.0
        %1429 = vmatmul.mubr.f32.gmra.mxu0 %v337
        %v1430 = vpop.f32.mrf.mxu0
        %v1431 = vadd.f32 0.0, %v1430
        %v1432 = vpop.f32.mrf.mxu0
        %v1433 = vadd.f32 0.0, %v1432
        %1434 = vmatprep.mubr.f32.mxu0 0.0
        %1435 = vmatmul.mubr.f32.gmra.mxu0 %v340
        %v1436 = vpop.f32.mrf.mxu0
        %v1437 = vadd.f32 0.0, %v1436
        %v1438 = vpop.f32.mrf.mxu0
        %v1439 = vadd.f32 0.0, %v1438
        %1440 = vmatprep.mubr.f32.mxu0 0.0
        %1441 = vmatmul.mubr.f32.gmra.mxu0 %v343
        %v1442 = vpop.f32.mrf.mxu0
        %v1443 = vadd.f32 0.0, %v1442
        %v1444 = vpop.f32.mrf.mxu0
        %v1445 = vadd.f32 0.0, %v1444
        %1446 = vmatprep.mubr.f32.mxu0 0.0
        %1447 = vmatmul.mubr.f32.gmra.mxu0 %v346
        %v1448 = vpop.f32.mrf.mxu0
        %v1449 = vadd.f32 0.0, %v1448
        %v1450 = vpop.f32.mrf.mxu0
        %v1451 = vadd.f32 0.0, %v1450
        %1452 = vmatprep.mubr.f32.mxu0 0.0
        %1453 = vmatmul.mubr.f32.gmra.mxu0 %v349
        %v1454 = vpop.f32.mrf.mxu0
        %v1455 = vadd.f32 0.0, %v1454
        %v1456 = vpop.f32.mrf.mxu0
        %v1457 = vadd.f32 0.0, %v1456
        %1458 = vmatprep.mubr.f32.mxu0 0.0
        %1459 = vmatmul.mubr.f32.gmra.mxu0 %v352
        %v1460 = vpop.f32.mrf.mxu0
        %v1461 = vadd.f32 0.0, %v1460
        %v1462 = vpop.f32.mrf.mxu0
        %v1463 = vadd.f32 0.0, %v1462
        %1464 = vmatprep.mubr.f32.mxu0 0.0
        %1465 = vmatmul.mubr.f32.gmra.mxu0 %v355
        %v1466 = vpop.f32.mrf.mxu0
        %v1467 = vadd.f32 0.0, %v1466
        %v1468 = vpop.f32.mrf.mxu0
        %v1469 = vadd.f32 0.0, %v1468
        %1470 = vdwg.mxu0
        %1471 = vmatprep.subr.mxu0 0.0
        %1472 = vmatpush1.msra.mxu0 0.0
        %1473 = vmatprep.subr.mxu0 0.0
        %1474 = vmatpush1.msra.mxu0 0.0
        %1475 = vmatprep.subr.mxu0 0.0
        %1476 = vmatpush1.msra.mxu0 0.0
        %1477 = vmatprep.subr.mxu0 0.0
        %1478 = vmatpush1.msra.mxu0 0.0
        %1479 = vmatprep.subr.mxu0 0.0
        %1480 = vmatpush1.msra.mxu0 0.0
        %1481 = vmatprep.subr.mxu0 0.0
        %1482 = vmatpush1.msra.mxu0 0.0
        %1483 = vmatprep.subr.mxu0 0.0
        %1484 = vmatpush1.msra.mxu0 0.0
        %1485 = vmatprep.subr.mxu0 0.0
        %1486 = vmatpush1.msra.mxu0 0.0
        %1487 = vmatprep.subr.mxu0 0.0
        %1488 = vmatpush1.msra.mxu0 0.0
        %1489 = vmatprep.subr.mxu0 0.0
        %1490 = vmatpush1.msra.mxu0 0.0
        %1491 = vmatprep.subr.mxu0 0.0
        %1492 = vmatpush1.msra.mxu0 0.0
        %1493 = vmatprep.subr.mxu0 0.0
        %1494 = vmatpush1.msra.mxu0 0.0
        %1495 = vmatprep.subr.mxu0 %v416
        %1496 = vmatpush1.msra.mxu0 %v413
        %1497 = vmatprep.subr.mxu0 %v287
        %1498 = vmatpush1.msra.mxu0 %v286
        %1499 = vmatprep.subr.mxu0 %v255
        %1500 = vmatpush1.msra.mxu0 %v254
        %1501 = vmatprep.subr.mxu0 %v223
        %1502 = vmatpush1.msra.mxu0 %v222
        %1503 = vmatprep.subr.mxu0 0.0
        %1504 = vmatpush2.msra.mxu0 0.0
        %1505 = vmatprep.subr.mxu0 0.0
        %1506 = vmatpush2.msra.mxu0 0.0
        %1507 = vmatprep.subr.mxu0 0.0
        %1508 = vmatpush2.msra.mxu0 0.0
        %1509 = vmatprep.subr.mxu0 0.0
        %1510 = vmatpush2.msra.mxu0 0.0
        %1511 = vmatprep.subr.mxu0 0.0
        %1512 = vmatpush2.msra.mxu0 0.0
        %1513 = vmatprep.subr.mxu0 0.0
        %1514 = vmatpush2.msra.mxu0 0.0
        %1515 = vmatprep.subr.mxu0 0.0
        %1516 = vmatpush2.msra.mxu0 0.0
        %1517 = vmatprep.subr.mxu0 0.0
        %1518 = vmatpush2.msra.mxu0 0.0
        %1519 = vmatprep.subr.mxu0 0.0
        %1520 = vmatpush2.msra.mxu0 0.0
        %1521 = vmatprep.subr.mxu0 0.0
        %1522 = vmatpush2.msra.mxu0 0.0
        %1523 = vmatprep.subr.mxu0 0.0
        %1524 = vmatpush2.msra.mxu0 0.0
        %1525 = vmatprep.subr.mxu0 0.0
        %1526 = vmatpush2.msra.mxu0 0.0
        %1527 = vmatprep.subr.mxu0 0.0
        %1528 = vmatpush2.msra.mxu0 0.0
        %1529 = vmatprep.subr.mxu0 0.0
        %1530 = vmatpush2.msra.mxu0 0.0
        %1531 = vmatprep.subr.mxu0 0.0
        %1532 = vmatpush2.msra.mxu0 0.0
        %1533 = vmatprep.subr.mxu0 0.0
        %1534 = vmatpush2.msra.mxu0 0.0
        %1535 = vmatprep.mubr.f32.mxu0 0.0
        %1536 = vmatmul.mubr.f32.gmra.mxu0 %v334
        %v1537 = vpop.f32.mrf.mxu0
        %v1538 = vadd.f32 0.0, %v1537
        %v1539 = vpop.f32.mrf.mxu0
        %v1540 = vadd.f32 0.0, %v1539
        %1541 = vmatprep.mubr.f32.mxu0 0.0
        %1542 = vmatmul.mubr.f32.gmra.mxu0 %v337
        %v1543 = vpop.f32.mrf.mxu0
        %v1544 = vadd.f32 0.0, %v1543
        %v1545 = vpop.f32.mrf.mxu0
        %v1546 = vadd.f32 0.0, %v1545
        %1547 = vmatprep.mubr.f32.mxu0 0.0
        %1548 = vmatmul.mubr.f32.gmra.mxu0 %v340
        %v1549 = vpop.f32.mrf.mxu0
        %v1550 = vadd.f32 0.0, %v1549
        %v1551 = vpop.f32.mrf.mxu0
        %v1552 = vadd.f32 0.0, %v1551
        %1553 = vmatprep.mubr.f32.mxu0 0.0
        %1554 = vmatmul.mubr.f32.gmra.mxu0 %v343
        %v1555 = vpop.f32.mrf.mxu0
        %v1556 = vadd.f32 0.0, %v1555
        %v1557 = vpop.f32.mrf.mxu0
        %v1558 = vadd.f32 0.0, %v1557
        %1559 = vmatprep.mubr.f32.mxu0 0.0
        %1560 = vmatmul.mubr.f32.gmra.mxu0 %v346
        %v1561 = vpop.f32.mrf.mxu0
        %v1562 = vadd.f32 0.0, %v1561
        %v1563 = vpop.f32.mrf.mxu0
        %v1564 = vadd.f32 0.0, %v1563
        %1565 = vmatprep.mubr.f32.mxu0 0.0
        %1566 = vmatmul.mubr.f32.gmra.mxu0 %v349
        %v1567 = vpop.f32.mrf.mxu0
        %v1568 = vadd.f32 0.0, %v1567
        %v1569 = vpop.f32.mrf.mxu0
        %v1570 = vadd.f32 0.0, %v1569
        %1571 = vmatprep.mubr.f32.mxu0 0.0
        %1572 = vmatmul.mubr.f32.gmra.mxu0 %v352
        %v1573 = vpop.f32.mrf.mxu0
        %v1574 = vadd.f32 0.0, %v1573
        %v1575 = vpop.f32.mrf.mxu0
        %v1576 = vadd.f32 0.0, %v1575
        %1577 = vmatprep.mubr.f32.mxu0 0.0
        %1578 = vmatmul.mubr.f32.gmra.mxu0 %v355
        %v1579 = vpop.f32.mrf.mxu0
        %v1580 = vadd.f32 0.0, %v1579
        %v1581 = vpop.f32.mrf.mxu0
        %v1582 = vadd.f32 0.0, %v1581
        %1583 = vdwg.mxu0
        %1584 = vmatprep.subr.mxu0 0.0
        %1585 = vmatpush1.msra.mxu0 0.0
        %1586 = vmatprep.subr.mxu0 0.0
        %1587 = vmatpush1.msra.mxu0 0.0
        %1588 = vmatprep.subr.mxu0 0.0
        %1589 = vmatpush1.msra.mxu0 0.0
        %1590 = vmatprep.subr.mxu0 0.0
        %1591 = vmatpush1.msra.mxu0 0.0
        %1592 = vmatprep.subr.mxu0 0.0
        %1593 = vmatpush1.msra.mxu0 0.0
        %1594 = vmatprep.subr.mxu0 0.0
        %1595 = vmatpush1.msra.mxu0 0.0
        %1596 = vmatprep.subr.mxu0 0.0
        %1597 = vmatpush1.msra.mxu0 0.0
        %1598 = vmatprep.subr.mxu0 0.0
        %1599 = vmatpush1.msra.mxu0 0.0
        %1600 = vmatprep.subr.mxu0 0.0
        %1601 = vmatpush1.msra.mxu0 0.0
        %1602 = vmatprep.subr.mxu0 0.0
        %1603 = vmatpush1.msra.mxu0 0.0
        %1604 = vmatprep.subr.mxu0 0.0
        %1605 = vmatpush1.msra.mxu0 0.0
        %1606 = vmatprep.subr.mxu0 0.0
        %1607 = vmatpush1.msra.mxu0 0.0
        %1608 = vmatprep.subr.mxu0 %v422
        %1609 = vmatpush1.msra.mxu0 %v419
        %1610 = vmatprep.subr.mxu0 %v289
        %1611 = vmatpush1.msra.mxu0 %v288
        %1612 = vmatprep.subr.mxu0 %v257
        %1613 = vmatpush1.msra.mxu0 %v256
        %1614 = vmatprep.subr.mxu0 %v225
        %1615 = vmatpush1.msra.mxu0 %v224
        %1616 = vmatprep.subr.mxu0 0.0
        %1617 = vmatpush2.msra.mxu0 0.0
        %1618 = vmatprep.subr.mxu0 0.0
        %1619 = vmatpush2.msra.mxu0 0.0
        %1620 = vmatprep.subr.mxu0 0.0
        %1621 = vmatpush2.msra.mxu0 0.0
        %1622 = vmatprep.subr.mxu0 0.0
        %1623 = vmatpush2.msra.mxu0 0.0
        %1624 = vmatprep.subr.mxu0 0.0
        %1625 = vmatpush2.msra.mxu0 0.0
        %1626 = vmatprep.subr.mxu0 0.0
        %1627 = vmatpush2.msra.mxu0 0.0
        %1628 = vmatprep.subr.mxu0 0.0
        %1629 = vmatpush2.msra.mxu0 0.0
        %1630 = vmatprep.subr.mxu0 0.0
        %1631 = vmatpush2.msra.mxu0 0.0
        %1632 = vmatprep.subr.mxu0 0.0
        %1633 = vmatpush2.msra.mxu0 0.0
        %1634 = vmatprep.subr.mxu0 0.0
        %1635 = vmatpush2.msra.mxu0 0.0
        %1636 = vmatprep.subr.mxu0 0.0
        %1637 = vmatpush2.msra.mxu0 0.0
        %1638 = vmatprep.subr.mxu0 0.0
        %1639 = vmatpush2.msra.mxu0 0.0
        %1640 = vmatprep.subr.mxu0 0.0
        %1641 = vmatpush2.msra.mxu0 0.0
        %1642 = vmatprep.subr.mxu0 0.0
        %1643 = vmatpush2.msra.mxu0 0.0
        %1644 = vmatprep.subr.mxu0 0.0
        %1645 = vmatpush2.msra.mxu0 0.0
        %1646 = vmatprep.subr.mxu0 0.0
        %1647 = vmatpush2.msra.mxu0 0.0
        %1648 = vmatprep.mubr.f32.mxu0 0.0
        %1649 = vmatmul.mubr.f32.gmra.mxu0 %v334
        %v1650 = vpop.f32.mrf.mxu0
        %v1651 = vadd.f32 0.0, %v1650
        %v1652 = vpop.f32.mrf.mxu0
        %v1653 = vadd.f32 0.0, %v1652
        %1654 = vmatprep.mubr.f32.mxu0 0.0
        %1655 = vmatmul.mubr.f32.gmra.mxu0 %v337
        %v1656 = vpop.f32.mrf.mxu0
        %v1657 = vadd.f32 0.0, %v1656
        %v1658 = vpop.f32.mrf.mxu0
        %v1659 = vadd.f32 0.0, %v1658
        %1660 = vmatprep.mubr.f32.mxu0 0.0
        %1661 = vmatmul.mubr.f32.gmra.mxu0 %v340
        %v1662 = vpop.f32.mrf.mxu0
        %v1663 = vadd.f32 0.0, %v1662
        %v1664 = vpop.f32.mrf.mxu0
        %v1665 = vadd.f32 0.0, %v1664
        %1666 = vmatprep.mubr.f32.mxu0 0.0
        %1667 = vmatmul.mubr.f32.gmra.mxu0 %v343
        %v1668 = vpop.f32.mrf.mxu0
        %v1669 = vadd.f32 0.0, %v1668
        %v1670 = vpop.f32.mrf.mxu0
        %v1671 = vadd.f32 0.0, %v1670
        %1672 = vmatprep.mubr.f32.mxu0 0.0
        %1673 = vmatmul.mubr.f32.gmra.mxu0 %v346
        %v1674 = vpop.f32.mrf.mxu0
        %v1675 = vadd.f32 0.0, %v1674
        %v1676 = vpop.f32.mrf.mxu0
        %v1677 = vadd.f32 0.0, %v1676
        %1678 = vmatprep.mubr.f32.mxu0 0.0
        %1679 = vmatmul.mubr.f32.gmra.mxu0 %v349
        %v1680 = vpop.f32.mrf.mxu0
        %v1681 = vadd.f32 0.0, %v1680
        %v1682 = vpop.f32.mrf.mxu0
        %v1683 = vadd.f32 0.0, %v1682
        %1684 = vmatprep.mubr.f32.mxu0 0.0
        %1685 = vmatmul.mubr.f32.gmra.mxu0 %v352
        %v1686 = vpop.f32.mrf.mxu0
        %v1687 = vadd.f32 0.0, %v1686
        %v1688 = vpop.f32.mrf.mxu0
        %v1689 = vadd.f32 0.0, %v1688
        %1690 = vmatprep.mubr.f32.mxu0 0.0
        %1691 = vmatmul.mubr.f32.gmra.mxu0 %v355
        %v1692 = vpop.f32.mrf.mxu0
        %v1693 = vadd.f32 0.0, %v1692
        %v1694 = vpop.f32.mrf.mxu0
        %v1695 = vadd.f32 0.0, %v1694
        %1696 = vdwg.mxu0
        %1697 = vmatprep.subr.mxu0 0.0
        %1698 = vmatpush1.msra.mxu0 0.0
        %1699 = vmatprep.subr.mxu0 0.0
        %1700 = vmatpush1.msra.mxu0 0.0
        %1701 = vmatprep.subr.mxu0 0.0
        %1702 = vmatpush1.msra.mxu0 0.0
        %1703 = vmatprep.subr.mxu0 0.0
        %1704 = vmatpush1.msra.mxu0 0.0
        %1705 = vmatprep.subr.mxu0 0.0
        %1706 = vmatpush1.msra.mxu0 0.0
        %1707 = vmatprep.subr.mxu0 0.0
        %1708 = vmatpush1.msra.mxu0 0.0
        %1709 = vmatprep.subr.mxu0 0.0
        %1710 = vmatpush1.msra.mxu0 0.0
        %1711 = vmatprep.subr.mxu0 0.0
        %1712 = vmatpush1.msra.mxu0 0.0
        %1713 = vmatprep.subr.mxu0 0.0
        %1714 = vmatpush1.msra.mxu0 0.0
        %1715 = vmatprep.subr.mxu0 0.0
        %1716 = vmatpush1.msra.mxu0 0.0
        %1717 = vmatprep.subr.mxu0 0.0
        %1718 = vmatpush1.msra.mxu0 0.0
        %1719 = vmatprep.subr.mxu0 0.0
        %1720 = vmatpush1.msra.mxu0 0.0
        %1721 = vmatprep.subr.mxu0 %v428
        %1722 = vmatpush1.msra.mxu0 %v425
        %1723 = vmatprep.subr.mxu0 %v291
        %1724 = vmatpush1.msra.mxu0 %v290
        %1725 = vmatprep.subr.mxu0 %v259
        %1726 = vmatpush1.msra.mxu0 %v258
        %1727 = vmatprep.subr.mxu0 %v227
        %1728 = vmatpush1.msra.mxu0 %v226
        %1729 = vmatprep.subr.mxu0 0.0
        %1730 = vmatpush2.msra.mxu0 0.0
        %1731 = vmatprep.subr.mxu0 0.0
        %1732 = vmatpush2.msra.mxu0 0.0
        %1733 = vmatprep.subr.mxu0 0.0
        %1734 = vmatpush2.msra.mxu0 0.0
        %1735 = vmatprep.subr.mxu0 0.0
        %1736 = vmatpush2.msra.mxu0 0.0
        %1737 = vmatprep.subr.mxu0 0.0
        %1738 = vmatpush2.msra.mxu0 0.0
        %1739 = vmatprep.subr.mxu0 0.0
        %1740 = vmatpush2.msra.mxu0 0.0
        %1741 = vmatprep.subr.mxu0 0.0
        %1742 = vmatpush2.msra.mxu0 0.0
        %1743 = vmatprep.subr.mxu0 0.0
        %1744 = vmatpush2.msra.mxu0 0.0
        %1745 = vmatprep.subr.mxu0 0.0
        %1746 = vmatpush2.msra.mxu0 0.0
        %1747 = vmatprep.subr.mxu0 0.0
        %1748 = vmatpush2.msra.mxu0 0.0
        %1749 = vmatprep.subr.mxu0 0.0
        %1750 = vmatpush2.msra.mxu0 0.0
        %1751 = vmatprep.subr.mxu0 0.0
        %1752 = vmatpush2.msra.mxu0 0.0
        %1753 = vmatprep.subr.mxu0 0.0
        %1754 = vmatpush2.msra.mxu0 0.0
        %1755 = vmatprep.subr.mxu0 0.0
        %1756 = vmatpush2.msra.mxu0 0.0
        %1757 = vmatprep.subr.mxu0 0.0
        %1758 = vmatpush2.msra.mxu0 0.0
        %1759 = vmatprep.subr.mxu0 0.0
        %1760 = vmatpush2.msra.mxu0 0.0
        %1761 = vmatprep.mubr.f32.mxu0 0.0
        %1762 = vmatmul.mubr.f32.gmra.mxu0 %v334
        %v1763 = vpop.f32.mrf.mxu0
        %v1764 = vadd.f32 0.0, %v1763
        %v1765 = vpop.f32.mrf.mxu0
        %v1766 = vadd.f32 0.0, %v1765
        %1767 = vmatprep.mubr.f32.mxu0 0.0
        %1768 = vmatmul.mubr.f32.gmra.mxu0 %v337
        %v1769 = vpop.f32.mrf.mxu0
        %v1770 = vadd.f32 0.0, %v1769
        %v1771 = vpop.f32.mrf.mxu0
        %v1772 = vadd.f32 0.0, %v1771
        %1773 = vmatprep.mubr.f32.mxu0 0.0
        %1774 = vmatmul.mubr.f32.gmra.mxu0 %v340
        %v1775 = vpop.f32.mrf.mxu0
        %v1776 = vadd.f32 0.0, %v1775
        %v1777 = vpop.f32.mrf.mxu0
        %v1778 = vadd.f32 0.0, %v1777
        %1779 = vmatprep.mubr.f32.mxu0 0.0
        %1780 = vmatmul.mubr.f32.gmra.mxu0 %v343
        %v1781 = vpop.f32.mrf.mxu0
        %v1782 = vadd.f32 0.0, %v1781
        %v1783 = vpop.f32.mrf.mxu0
        %v1784 = vadd.f32 0.0, %v1783
        %1785 = vmatprep.mubr.f32.mxu0 0.0
        %1786 = vmatmul.mubr.f32.gmra.mxu0 %v346
        %v1787 = vpop.f32.mrf.mxu0
        %v1788 = vadd.f32 0.0, %v1787
        %v1789 = vpop.f32.mrf.mxu0
        %v1790 = vadd.f32 0.0, %v1789
        %1791 = vmatprep.mubr.f32.mxu0 0.0
        %1792 = vmatmul.mubr.f32.gmra.mxu0 %v349
        %v1793 = vpop.f32.mrf.mxu0
        %v1794 = vadd.f32 0.0, %v1793
        %v1795 = vpop.f32.mrf.mxu0
        %v1796 = vadd.f32 0.0, %v1795
        %1797 = vmatprep.mubr.f32.mxu0 0.0
        %1798 = vmatmul.mubr.f32.gmra.mxu0 %v352
        %v1799 = vpop.f32.mrf.mxu0
        %v1800 = vadd.f32 0.0, %v1799
        %v1801 = vpop.f32.mrf.mxu0
        %v1802 = vadd.f32 0.0, %v1801
        %1803 = vmatprep.mubr.f32.mxu0 0.0
        %1804 = vmatmul.mubr.f32.gmra.mxu0 %v355
        %v1805 = vpop.f32.mrf.mxu0
        %v1806 = vadd.f32 0.0, %v1805
        %v1807 = vpop.f32.mrf.mxu0
        %v1808 = vadd.f32 0.0, %v1807
        %1809 = vdwg.mxu0
        %1810 = vmatprep.subr.mxu0 0.0
        %1811 = vmatpush1.msra.mxu0 0.0
        %1812 = vmatprep.subr.mxu0 0.0
        %1813 = vmatpush1.msra.mxu0 0.0
        %1814 = vmatprep.subr.mxu0 0.0
        %1815 = vmatpush1.msra.mxu0 0.0
        %1816 = vmatprep.subr.mxu0 0.0
        %1817 = vmatpush1.msra.mxu0 0.0
        %1818 = vmatprep.subr.mxu0 0.0
        %1819 = vmatpush1.msra.mxu0 0.0
        %1820 = vmatprep.subr.mxu0 0.0
        %1821 = vmatpush1.msra.mxu0 0.0
        %1822 = vmatprep.subr.mxu0 0.0
        %1823 = vmatpush1.msra.mxu0 0.0
        %1824 = vmatprep.subr.mxu0 0.0
        %1825 = vmatpush1.msra.mxu0 0.0
        %1826 = vmatprep.subr.mxu0 0.0
        %1827 = vmatpush1.msra.mxu0 0.0
        %1828 = vmatprep.subr.mxu0 0.0
        %1829 = vmatpush1.msra.mxu0 0.0
        %1830 = vmatprep.subr.mxu0 0.0
        %1831 = vmatpush1.msra.mxu0 0.0
        %1832 = vmatprep.subr.mxu0 0.0
        %1833 = vmatpush1.msra.mxu0 0.0
        %1834 = vmatprep.subr.mxu0 %v434
        %1835 = vmatpush1.msra.mxu0 %v431
        %1836 = vmatprep.subr.mxu0 %v293
        %1837 = vmatpush1.msra.mxu0 %v292
        %1838 = vmatprep.subr.mxu0 %v261
        %1839 = vmatpush1.msra.mxu0 %v260
        %1840 = vmatprep.subr.mxu0 %v229
        %1841 = vmatpush1.msra.mxu0 %v228
        %1842 = vmatprep.subr.mxu0 0.0
        %1843 = vmatpush2.msra.mxu0 0.0
        %1844 = vmatprep.subr.mxu0 0.0
        %1845 = vmatpush2.msra.mxu0 0.0
        %1846 = vmatprep.subr.mxu0 0.0
        %1847 = vmatpush2.msra.mxu0 0.0
        %1848 = vmatprep.subr.mxu0 0.0
        %1849 = vmatpush2.msra.mxu0 0.0
        %1850 = vmatprep.subr.mxu0 0.0
        %1851 = vmatpush2.msra.mxu0 0.0
        %1852 = vmatprep.subr.mxu0 0.0
        %1853 = vmatpush2.msra.mxu0 0.0
        %1854 = vmatprep.subr.mxu0 0.0
        %1855 = vmatpush2.msra.mxu0 0.0
        %1856 = vmatprep.subr.mxu0 0.0
        %1857 = vmatpush2.msra.mxu0 0.0
        %1858 = vmatprep.subr.mxu0 0.0
        %1859 = vmatpush2.msra.mxu0 0.0
        %1860 = vmatprep.subr.mxu0 0.0
        %1861 = vmatpush2.msra.mxu0 0.0
        %1862 = vmatprep.subr.mxu0 0.0
        %1863 = vmatpush2.msra.mxu0 0.0
        %1864 = vmatprep.subr.mxu0 0.0
        %1865 = vmatpush2.msra.mxu0 0.0
        %1866 = vmatprep.subr.mxu0 0.0
        %1867 = vmatpush2.msra.mxu0 0.0
        %1868 = vmatprep.subr.mxu0 0.0
        %1869 = vmatpush2.msra.mxu0 0.0
        %1870 = vmatprep.subr.mxu0 0.0
        %1871 = vmatpush2.msra.mxu0 0.0
        %1872 = vmatprep.subr.mxu0 0.0
        %1873 = vmatpush2.msra.mxu0 0.0
        %1874 = vmatprep.mubr.f32.mxu0 0.0
        %1875 = vmatmul.mubr.f32.gmra.mxu0 %v334
        %v1876 = vpop.f32.mrf.mxu0
        %v1877 = vadd.f32 0.0, %v1876
        %v1878 = vpop.f32.mrf.mxu0
        %v1879 = vadd.f32 0.0, %v1878
        %1880 = vmatprep.mubr.f32.mxu0 0.0
        %1881 = vmatmul.mubr.f32.gmra.mxu0 %v337
        %v1882 = vpop.f32.mrf.mxu0
        %v1883 = vadd.f32 0.0, %v1882
        %v1884 = vpop.f32.mrf.mxu0
        %v1885 = vadd.f32 0.0, %v1884
        %1886 = vmatprep.mubr.f32.mxu0 0.0
        %1887 = vmatmul.mubr.f32.gmra.mxu0 %v340
        %v1888 = vpop.f32.mrf.mxu0
        %v1889 = vadd.f32 0.0, %v1888
        %v1890 = vpop.f32.mrf.mxu0
        %v1891 = vadd.f32 0.0, %v1890
        %1892 = vmatprep.mubr.f32.mxu0 0.0
        %1893 = vmatmul.mubr.f32.gmra.mxu0 %v343
        %v1894 = vpop.f32.mrf.mxu0
        %v1895 = vadd.f32 0.0, %v1894
        %v1896 = vpop.f32.mrf.mxu0
        %v1897 = vadd.f32 0.0, %v1896
        %1898 = vmatprep.mubr.f32.mxu0 0.0
        %1899 = vmatmul.mubr.f32.gmra.mxu0 %v346
        %v1900 = vpop.f32.mrf.mxu0
        %v1901 = vadd.f32 0.0, %v1900
        %v1902 = vpop.f32.mrf.mxu0
        %v1903 = vadd.f32 0.0, %v1902
        %1904 = vmatprep.mubr.f32.mxu0 0.0
        %1905 = vmatmul.mubr.f32.gmra.mxu0 %v349
        %v1906 = vpop.f32.mrf.mxu0
        %v1907 = vadd.f32 0.0, %v1906
        %v1908 = vpop.f32.mrf.mxu0
        %v1909 = vadd.f32 0.0, %v1908
        %1910 = vmatprep.mubr.f32.mxu0 0.0
        %1911 = vmatmul.mubr.f32.gmra.mxu0 %v352
        %v1912 = vpop.f32.mrf.mxu0
        %v1913 = vadd.f32 0.0, %v1912
        %v1914 = vpop.f32.mrf.mxu0
        %v1915 = vadd.f32 0.0, %v1914
        %1916 = vmatprep.mubr.f32.mxu0 0.0
        %1917 = vmatmul.mubr.f32.gmra.mxu0 %v355
        %v1918 = vpop.f32.mrf.mxu0
        %v1919 = vadd.f32 0.0, %v1918
        %v1920 = vpop.f32.mrf.mxu0
        %v1921 = vadd.f32 0.0, %v1920
        %1922 = vdwg.mxu0
        %1923 = vmatprep.subr.mxu0 0.0
        %1924 = vmatpush1.msra.mxu0 0.0
        %1925 = vmatprep.subr.mxu0 0.0
        %1926 = vmatpush1.msra.mxu0 0.0
        %1927 = vmatprep.subr.mxu0 0.0
        %1928 = vmatpush1.msra.mxu0 0.0
        %1929 = vmatprep.subr.mxu0 0.0
        %1930 = vmatpush1.msra.mxu0 0.0
        %1931 = vmatprep.subr.mxu0 0.0
        %1932 = vmatpush1.msra.mxu0 0.0
        %1933 = vmatprep.subr.mxu0 0.0
        %1934 = vmatpush1.msra.mxu0 0.0
        %1935 = vmatprep.subr.mxu0 0.0
        %1936 = vmatpush1.msra.mxu0 0.0
        %1937 = vmatprep.subr.mxu0 0.0
        %1938 = vmatpush1.msra.mxu0 0.0
        %1939 = vmatprep.subr.mxu0 0.0
        %1940 = vmatpush1.msra.mxu0 0.0
        %1941 = vmatprep.subr.mxu0 0.0
        %1942 = vmatpush1.msra.mxu0 0.0
        %1943 = vmatprep.subr.mxu0 0.0
        %1944 = vmatpush1.msra.mxu0 0.0
        %1945 = vmatprep.subr.mxu0 0.0
        %1946 = vmatpush1.msra.mxu0 0.0
        %1947 = vmatprep.subr.mxu0 %v440
        %1948 = vmatpush1.msra.mxu0 %v437
        %1949 = vmatprep.subr.mxu0 %v295
        %1950 = vmatpush1.msra.mxu0 %v294
        %1951 = vmatprep.subr.mxu0 %v263
        %1952 = vmatpush1.msra.mxu0 %v262
        %1953 = vmatprep.subr.mxu0 %v231
        %1954 = vmatpush1.msra.mxu0 %v230
        %1955 = vmatprep.subr.mxu0 0.0
        %1956 = vmatpush2.msra.mxu0 0.0
        %1957 = vmatprep.subr.mxu0 0.0
        %1958 = vmatpush2.msra.mxu0 0.0
        %1959 = vmatprep.subr.mxu0 0.0
        %1960 = vmatpush2.msra.mxu0 0.0
        %1961 = vmatprep.subr.mxu0 0.0
        %1962 = vmatpush2.msra.mxu0 0.0
        %1963 = vmatprep.subr.mxu0 0.0
        %1964 = vmatpush2.msra.mxu0 0.0
        %1965 = vmatprep.subr.mxu0 0.0
        %1966 = vmatpush2.msra.mxu0 0.0
        %1967 = vmatprep.subr.mxu0 0.0
        %1968 = vmatpush2.msra.mxu0 0.0
        %1969 = vmatprep.subr.mxu0 0.0
        %1970 = vmatpush2.msra.mxu0 0.0
        %1971 = vmatprep.subr.mxu0 0.0
        %1972 = vmatpush2.msra.mxu0 0.0
        %1973 = vmatprep.subr.mxu0 0.0
        %1974 = vmatpush2.msra.mxu0 0.0
        %1975 = vmatprep.subr.mxu0 0.0
        %1976 = vmatpush2.msra.mxu0 0.0
        %1977 = vmatprep.subr.mxu0 0.0
        %1978 = vmatpush2.msra.mxu0 0.0
        %1979 = vmatprep.subr.mxu0 0.0
        %1980 = vmatpush2.msra.mxu0 0.0
        %1981 = vmatprep.subr.mxu0 0.0
        %1982 = vmatpush2.msra.mxu0 0.0
        %1983 = vmatprep.subr.mxu0 0.0
        %1984 = vmatpush2.msra.mxu0 0.0
        %1985 = vmatprep.subr.mxu0 0.0
        %1986 = vmatpush2.msra.mxu0 0.0
        %1987 = vmatprep.mubr.f32.mxu0 0.0
        %1988 = vmatmul.mubr.f32.gmra.mxu0 %v334
        %v1989 = vpop.f32.mrf.mxu0
        %v1990 = vadd.f32 0.0, %v1989
        %v1991 = vpop.f32.mrf.mxu0
        %v1992 = vadd.f32 0.0, %v1991
        %1993 = vmatprep.mubr.f32.mxu0 0.0
        %1994 = vmatmul.mubr.f32.gmra.mxu0 %v337
        %v1995 = vpop.f32.mrf.mxu0
        %v1996 = vadd.f32 0.0, %v1995
        %v1997 = vpop.f32.mrf.mxu0
        %v1998 = vadd.f32 0.0, %v1997
        %1999 = vmatprep.mubr.f32.mxu0 0.0
        %2000 = vmatmul.mubr.f32.gmra.mxu0 %v340
        %v2001 = vpop.f32.mrf.mxu0
        %v2002 = vadd.f32 0.0, %v2001
        %v2003 = vpop.f32.mrf.mxu0
        %v2004 = vadd.f32 0.0, %v2003
        %2005 = vmatprep.mubr.f32.mxu0 0.0
        %2006 = vmatmul.mubr.f32.gmra.mxu0 %v343
        %v2007 = vpop.f32.mrf.mxu0
        %v2008 = vadd.f32 0.0, %v2007
        %v2009 = vpop.f32.mrf.mxu0
        %v2010 = vadd.f32 0.0, %v2009
        %2011 = vmatprep.mubr.f32.mxu0 0.0
        %2012 = vmatmul.mubr.f32.gmra.mxu0 %v346
        %v2013 = vpop.f32.mrf.mxu0
        %v2014 = vadd.f32 0.0, %v2013
        %v2015 = vpop.f32.mrf.mxu0
        %v2016 = vadd.f32 0.0, %v2015
        %2017 = vmatprep.mubr.f32.mxu0 0.0
        %2018 = vmatmul.mubr.f32.gmra.mxu0 %v349
        %v2019 = vpop.f32.mrf.mxu0
        %v2020 = vadd.f32 0.0, %v2019
        %v2021 = vpop.f32.mrf.mxu0
        %v2022 = vadd.f32 0.0, %v2021
        %2023 = vmatprep.mubr.f32.mxu0 0.0
        %2024 = vmatmul.mubr.f32.gmra.mxu0 %v352
        %v2025 = vpop.f32.mrf.mxu0
        %v2026 = vadd.f32 0.0, %v2025
        %v2027 = vpop.f32.mrf.mxu0
        %v2028 = vadd.f32 0.0, %v2027
        %2029 = vmatprep.mubr.f32.mxu0 0.0
        %2030 = vmatmul.mubr.f32.gmra.mxu0 %v355
        %v2031 = vpop.f32.mrf.mxu0
        %v2032 = vadd.f32 0.0, %v2031
        %v2033 = vpop.f32.mrf.mxu0
        %v2034 = vadd.f32 0.0, %v2033
        %2035 = vdwg.mxu0
        %2036 = vmatprep.subr.mxu0 0.0
        %2037 = vmatpush1.msra.mxu0 0.0
        %2038 = vmatprep.subr.mxu0 0.0
        %2039 = vmatpush1.msra.mxu0 0.0
        %2040 = vmatprep.subr.mxu0 0.0
        %2041 = vmatpush1.msra.mxu0 0.0
        %2042 = vmatprep.subr.mxu0 0.0
        %2043 = vmatpush1.msra.mxu0 0.0
        %2044 = vmatprep.subr.mxu0 0.0
        %2045 = vmatpush1.msra.mxu0 0.0
        %2046 = vmatprep.subr.mxu0 0.0
        %2047 = vmatpush1.msra.mxu0 0.0
        %2048 = vmatprep.subr.mxu0 0.0
        %2049 = vmatpush1.msra.mxu0 0.0
        %2050 = vmatprep.subr.mxu0 0.0
        %2051 = vmatpush1.msra.mxu0 0.0
        %2052 = vmatprep.subr.mxu0 0.0
        %2053 = vmatpush1.msra.mxu0 0.0
        %2054 = vmatprep.subr.mxu0 0.0
        %2055 = vmatpush1.msra.mxu0 0.0
        %2056 = vmatprep.subr.mxu0 0.0
        %2057 = vmatpush1.msra.mxu0 0.0
        %2058 = vmatprep.subr.mxu0 0.0
        %2059 = vmatpush1.msra.mxu0 0.0
        %2060 = vmatprep.subr.mxu0 %v446
        %2061 = vmatpush1.msra.mxu0 %v443
        %2062 = vmatprep.subr.mxu0 %v297
        %2063 = vmatpush1.msra.mxu0 %v296
        %2064 = vmatprep.subr.mxu0 %v265
        %2065 = vmatpush1.msra.mxu0 %v264
        %2066 = vmatprep.subr.mxu0 %v233
        %2067 = vmatpush1.msra.mxu0 %v232
        %2068 = vmatprep.subr.mxu0 0.0
        %2069 = vmatpush2.msra.mxu0 0.0
        %2070 = vmatprep.subr.mxu0 0.0
        %2071 = vmatpush2.msra.mxu0 0.0
        %2072 = vmatprep.subr.mxu0 0.0
        %2073 = vmatpush2.msra.mxu0 0.0
        %2074 = vmatprep.subr.mxu0 0.0
        %2075 = vmatpush2.msra.mxu0 0.0
        %2076 = vmatprep.subr.mxu0 0.0
        %2077 = vmatpush2.msra.mxu0 0.0
        %2078 = vmatprep.subr.mxu0 0.0
        %2079 = vmatpush2.msra.mxu0 0.0
        %2080 = vmatprep.subr.mxu0 0.0
        %2081 = vmatpush2.msra.mxu0 0.0
        %2082 = vmatprep.subr.mxu0 0.0
        %2083 = vmatpush2.msra.mxu0 0.0
        %2084 = vmatprep.subr.mxu0 0.0
        %2085 = vmatpush2.msra.mxu0 0.0
        %2086 = vmatprep.subr.mxu0 0.0
        %2087 = vmatpush2.msra.mxu0 0.0
        %2088 = vmatprep.subr.mxu0 0.0
        %2089 = vmatpush2.msra.mxu0 0.0
        %2090 = vmatprep.subr.mxu0 0.0
        %2091 = vmatpush2.msra.mxu0 0.0
        %2092 = vmatprep.subr.mxu0 0.0
        %2093 = vmatpush2.msra.mxu0 0.0
        %2094 = vmatprep.subr.mxu0 0.0
        %2095 = vmatpush2.msra.mxu0 0.0
        %2096 = vmatprep.subr.mxu0 0.0
        %2097 = vmatpush2.msra.mxu0 0.0
        %2098 = vmatprep.subr.mxu0 0.0
        %2099 = vmatpush2.msra.mxu0 0.0
        %2100 = vmatprep.mubr.f32.mxu0 0.0
        %2101 = vmatmul.mubr.f32.gmra.mxu0 %v334
        %v2102 = vpop.f32.mrf.mxu0
        %v2103 = vadd.f32 0.0, %v2102
        %v2104 = vpop.f32.mrf.mxu0
        %v2105 = vadd.f32 0.0, %v2104
        %2106 = vmatprep.mubr.f32.mxu0 0.0
        %2107 = vmatmul.mubr.f32.gmra.mxu0 %v337
        %v2108 = vpop.f32.mrf.mxu0
        %v2109 = vadd.f32 0.0, %v2108
        %v2110 = vpop.f32.mrf.mxu0
        %v2111 = vadd.f32 0.0, %v2110
        %2112 = vmatprep.mubr.f32.mxu0 0.0
        %2113 = vmatmul.mubr.f32.gmra.mxu0 %v340
        %v2114 = vpop.f32.mrf.mxu0
        %v2115 = vadd.f32 0.0, %v2114
        %v2116 = vpop.f32.mrf.mxu0
        %v2117 = vadd.f32 0.0, %v2116
        %2118 = vmatprep.mubr.f32.mxu0 0.0
        %2119 = vmatmul.mubr.f32.gmra.mxu0 %v343
        %v2120 = vpop.f32.mrf.mxu0
        %v2121 = vadd.f32 0.0, %v2120
        %v2122 = vpop.f32.mrf.mxu0
        %v2123 = vadd.f32 0.0, %v2122
        %2124 = vmatprep.mubr.f32.mxu0 0.0
        %2125 = vmatmul.mubr.f32.gmra.mxu0 %v346
        %v2126 = vpop.f32.mrf.mxu0
        %v2127 = vadd.f32 0.0, %v2126
        %v2128 = vpop.f32.mrf.mxu0
        %v2129 = vadd.f32 0.0, %v2128
        %2130 = vmatprep.mubr.f32.mxu0 0.0
        %2131 = vmatmul.mubr.f32.gmra.mxu0 %v349
        %v2132 = vpop.f32.mrf.mxu0
        %v2133 = vadd.f32 0.0, %v2132
        %v2134 = vpop.f32.mrf.mxu0
        %v2135 = vadd.f32 0.0, %v2134
        %2136 = vmatprep.mubr.f32.mxu0 0.0
        %2137 = vmatmul.mubr.f32.gmra.mxu0 %v352
        %v2138 = vpop.f32.mrf.mxu0
        %v2139 = vadd.f32 0.0, %v2138
        %v2140 = vpop.f32.mrf.mxu0
        %v2141 = vadd.f32 0.0, %v2140
        %2142 = vmatprep.mubr.f32.mxu0 0.0
        %2143 = vmatmul.mubr.f32.gmra.mxu0 %v355
        %v2144 = vpop.f32.mrf.mxu0
        %v2145 = vadd.f32 0.0, %v2144
        %v2146 = vpop.f32.mrf.mxu0
        %v2147 = vadd.f32 0.0, %v2146
        %2148 = vdwg.mxu0
        %2149 = vmatprep.subr.mxu0 0.0
        %2150 = vmatpush1.msra.mxu0 0.0
        %2151 = vmatprep.subr.mxu0 0.0
        %2152 = vmatpush1.msra.mxu0 0.0
        %2153 = vmatprep.subr.mxu0 0.0
        %2154 = vmatpush1.msra.mxu0 0.0
        %2155 = vmatprep.subr.mxu0 0.0
        %2156 = vmatpush1.msra.mxu0 0.0
        %2157 = vmatprep.subr.mxu0 0.0
        %2158 = vmatpush1.msra.mxu0 0.0
        %2159 = vmatprep.subr.mxu0 0.0
        %2160 = vmatpush1.msra.mxu0 0.0
        %2161 = vmatprep.subr.mxu0 0.0
        %2162 = vmatpush1.msra.mxu0 0.0
        %2163 = vmatprep.subr.mxu0 0.0
        %2164 = vmatpush1.msra.mxu0 0.0
        %2165 = vmatprep.subr.mxu0 0.0
        %2166 = vmatpush1.msra.mxu0 0.0
        %2167 = vmatprep.subr.mxu0 0.0
        %2168 = vmatpush1.msra.mxu0 0.0
        %2169 = vmatprep.subr.mxu0 0.0
        %2170 = vmatpush1.msra.mxu0 0.0
        %2171 = vmatprep.subr.mxu0 0.0
        %2172 = vmatpush1.msra.mxu0 0.0
        %2173 = vmatprep.subr.mxu0 %v452
        %2174 = vmatpush1.msra.mxu0 %v449
        %2175 = vmatprep.subr.mxu0 %v299
        %2176 = vmatpush1.msra.mxu0 %v298
        %2177 = vmatprep.subr.mxu0 %v267
        %2178 = vmatpush1.msra.mxu0 %v266
        %2179 = vmatprep.subr.mxu0 %v235
        %2180 = vmatpush1.msra.mxu0 %v234
        %2181 = vmatprep.subr.mxu0 0.0
        %2182 = vmatpush2.msra.mxu0 0.0
        %2183 = vmatprep.subr.mxu0 0.0
        %2184 = vmatpush2.msra.mxu0 0.0
        %2185 = vmatprep.subr.mxu0 0.0
        %2186 = vmatpush2.msra.mxu0 0.0
        %2187 = vmatprep.subr.mxu0 0.0
        %2188 = vmatpush2.msra.mxu0 0.0
        %2189 = vmatprep.subr.mxu0 0.0
        %2190 = vmatpush2.msra.mxu0 0.0
        %2191 = vmatprep.subr.mxu0 0.0
        %2192 = vmatpush2.msra.mxu0 0.0
        %2193 = vmatprep.subr.mxu0 0.0
        %2194 = vmatpush2.msra.mxu0 0.0
        %2195 = vmatprep.subr.mxu0 0.0
        %2196 = vmatpush2.msra.mxu0 0.0
        %2197 = vmatprep.subr.mxu0 0.0
        %2198 = vmatpush2.msra.mxu0 0.0
        %2199 = vmatprep.subr.mxu0 0.0
        %2200 = vmatpush2.msra.mxu0 0.0
        %2201 = vmatprep.subr.mxu0 0.0
        %2202 = vmatpush2.msra.mxu0 0.0
        %2203 = vmatprep.subr.mxu0 0.0
        %2204 = vmatpush2.msra.mxu0 0.0
        %2205 = vmatprep.subr.mxu0 0.0
        %2206 = vmatpush2.msra.mxu0 0.0
        %2207 = vmatprep.subr.mxu0 0.0
        %2208 = vmatpush2.msra.mxu0 0.0
        %2209 = vmatprep.subr.mxu0 0.0
        %2210 = vmatpush2.msra.mxu0 0.0
        %2211 = vmatprep.subr.mxu0 0.0
        %2212 = vmatpush2.msra.mxu0 0.0
        %2213 = vmatprep.mubr.f32.mxu0 0.0
        %2214 = vmatmul.mubr.f32.gmra.mxu0 %v334
        %v2215 = vpop.f32.mrf.mxu0
        %v2216 = vadd.f32 0.0, %v2215
        %v2217 = vpop.f32.mrf.mxu0
        %v2218 = vadd.f32 0.0, %v2217
        %2219 = vmatprep.mubr.f32.mxu0 0.0
        %2220 = vmatmul.mubr.f32.gmra.mxu0 %v337
        %v2221 = vpop.f32.mrf.mxu0
        %v2222 = vadd.f32 0.0, %v2221
        %v2223 = vpop.f32.mrf.mxu0
        %v2224 = vadd.f32 0.0, %v2223
        %2225 = vmatprep.mubr.f32.mxu0 0.0
        %2226 = vmatmul.mubr.f32.gmra.mxu0 %v340
        %v2227 = vpop.f32.mrf.mxu0
        %v2228 = vadd.f32 0.0, %v2227
        %v2229 = vpop.f32.mrf.mxu0
        %v2230 = vadd.f32 0.0, %v2229
        %2231 = vmatprep.mubr.f32.mxu0 0.0
        %2232 = vmatmul.mubr.f32.gmra.mxu0 %v343
        %v2233 = vpop.f32.mrf.mxu0
        %v2234 = vadd.f32 0.0, %v2233
        %v2235 = vpop.f32.mrf.mxu0
        %v2236 = vadd.f32 0.0, %v2235
        %2237 = vmatprep.mubr.f32.mxu0 0.0
        %2238 = vmatmul.mubr.f32.gmra.mxu0 %v346
        %v2239 = vpop.f32.mrf.mxu0
        %v2240 = vadd.f32 0.0, %v2239
        %v2241 = vpop.f32.mrf.mxu0
        %v2242 = vadd.f32 0.0, %v2241
        %2243 = vmatprep.mubr.f32.mxu0 0.0
        %2244 = vmatmul.mubr.f32.gmra.mxu0 %v349
        %v2245 = vpop.f32.mrf.mxu0
        %v2246 = vadd.f32 0.0, %v2245
        %v2247 = vpop.f32.mrf.mxu0
        %v2248 = vadd.f32 0.0, %v2247
        %2249 = vmatprep.mubr.f32.mxu0 0.0
        %2250 = vmatmul.mubr.f32.gmra.mxu0 %v352
        %v2251 = vpop.f32.mrf.mxu0
        %v2252 = vadd.f32 0.0, %v2251
        %v2253 = vpop.f32.mrf.mxu0
        %v2254 = vadd.f32 0.0, %v2253
        %2255 = vmatprep.mubr.f32.mxu0 0.0
        %2256 = vmatmul.mubr.f32.gmra.mxu0 %v355
        %v2257 = vpop.f32.mrf.mxu0
        %v2258 = vadd.f32 0.0, %v2257
        %v2259 = vpop.f32.mrf.mxu0
        %v2260 = vadd.f32 0.0, %v2259
        %2261 = vdwg.mxu0
        %v2262 = vld [vmem:[%s2] sm:$0xff]
        %v2263 = vld [vmem:[%s2 + $0x8] sm:$0xff]
        %v2264 = vld [vmem:[%s2 + $0x10] sm:$0xff]
        %v2265 = vld [vmem:[%s2 + $0x18] sm:$0xff]
        %v2266 = vld [vmem:[%s2 + $0x20] sm:$0xff]
        %v2267 = vld [vmem:[%s2 + $0x28] sm:$0xff]
        %v2268 = vld [vmem:[%s2 + $0x30] sm:$0xff]
        %v2269 = vld [vmem:[%s2 + $0x38] sm:$0xff]
        %2271 = vset.pattern.permute.xlu0 0
        %2272 = vperm.xlu0 %2271, %v2262
        %v2273 = vpop.permute.xlu0 %2272
        %2276 = vset.pattern.permute.xlu0 0
        %2277 = vperm.xlu0 %2276, %v2263
        %v2278 = vpop.permute.xlu0 %2277
        %2281 = vset.pattern.permute.xlu0 0
        %2282 = vperm.xlu0 %2281, %v2264
        %v2283 = vpop.permute.xlu0 %2282
        %2286 = vset.pattern.permute.xlu0 0
        %2287 = vperm.xlu0 %2286, %v2265
        %v2288 = vpop.permute.xlu0 %2287
        %2291 = vset.pattern.permute.xlu0 0
        %2292 = vperm.xlu0 %2291, %v2266
        %v2293 = vpop.permute.xlu0 %2292
        %2296 = vset.pattern.permute.xlu0 0
        %2297 = vperm.xlu0 %2296, %v2267
        %v2298 = vpop.permute.xlu0 %2297
        %2301 = vset.pattern.permute.xlu0 0
        %2302 = vperm.xlu0 %2301, %v2268
        %v2303 = vpop.permute.xlu0 %2302
        %2306 = vset.pattern.permute.xlu0 0
        %2307 = vperm.xlu0 %2306, %v2269
        %v2308 = vpop.permute.xlu0 %2307
        %v2310 = vmul.f32 %v521, %v2273
        %v2311 = vmul.f32 %v523, %v2273
        %v2312 = vmul.f32 %v634, %v2273
        %v2313 = vmul.f32 %v636, %v2273
        %v2314 = vmul.f32 %v747, %v2273
        %v2315 = vmul.f32 %v749, %v2273
        %v2316 = vmul.f32 %v860, %v2273
        %v2317 = vmul.f32 %v862, %v2273
        %v2318 = vmul.f32 %v973, %v2273
        %v2319 = vmul.f32 %v975, %v2273
        %v2320 = vmul.f32 %v1086, %v2273
        %v2321 = vmul.f32 %v1088, %v2273
        %v2322 = vmul.f32 %v1199, %v2273
        %v2323 = vmul.f32 %v1201, %v2273
        %v2324 = vmul.f32 %v1312, %v2273
        %v2325 = vmul.f32 %v1314, %v2273
        %v2326 = vmul.f32 %v1425, %v2273
        %v2327 = vmul.f32 %v1427, %v2273
        %v2328 = vmul.f32 %v1538, %v2273
        %v2329 = vmul.f32 %v1540, %v2273
        %v2330 = vmul.f32 %v1651, %v2273
        %v2331 = vmul.f32 %v1653, %v2273
        %v2332 = vmul.f32 %v1764, %v2273
        %v2333 = vmul.f32 %v1766, %v2273
        %v2334 = vmul.f32 %v1877, %v2273
        %v2335 = vmul.f32 %v1879, %v2273
        %v2336 = vmul.f32 %v1990, %v2273
        %v2337 = vmul.f32 %v1992, %v2273
        %v2338 = vmul.f32 %v2103, %v2273
        %v2339 = vmul.f32 %v2105, %v2273
        %v2340 = vmul.f32 %v2216, %v2273
        %v2341 = vmul.f32 %v2218, %v2273
        %v2342 = vmul.f32 %v527, %v2278
        %v2343 = vmul.f32 %v529, %v2278
        %v2344 = vmul.f32 %v640, %v2278
        %v2345 = vmul.f32 %v642, %v2278
        %v2346 = vmul.f32 %v753, %v2278
        %v2347 = vmul.f32 %v755, %v2278
        %v2348 = vmul.f32 %v866, %v2278
        %v2349 = vmul.f32 %v868, %v2278
        %v2350 = vmul.f32 %v979, %v2278
        %v2351 = vmul.f32 %v981, %v2278
        %v2352 = vmul.f32 %v1092, %v2278
        %v2353 = vmul.f32 %v1094, %v2278
        %v2354 = vmul.f32 %v1205, %v2278
        %v2355 = vmul.f32 %v1207, %v2278
        %v2356 = vmul.f32 %v1318, %v2278
        %v2357 = vmul.f32 %v1320, %v2278
        %v2358 = vmul.f32 %v1431, %v2278
        %v2359 = vmul.f32 %v1433, %v2278
        %v2360 = vmul.f32 %v1544, %v2278
        %v2361 = vmul.f32 %v1546, %v2278
        %v2362 = vmul.f32 %v1657, %v2278
        %v2363 = vmul.f32 %v1659, %v2278
        %v2364 = vmul.f32 %v1770, %v2278
        %v2365 = vmul.f32 %v1772, %v2278
        %v2366 = vmul.f32 %v1883, %v2278
        %v2367 = vmul.f32 %v1885, %v2278
        %v2368 = vmul.f32 %v1996, %v2278
        %v2369 = vmul.f32 %v1998, %v2278
        %v2370 = vmul.f32 %v2109, %v2278
        %v2371 = vmul.f32 %v2111, %v2278
        %v2372 = vmul.f32 %v2222, %v2278
        %v2373 = vmul.f32 %v2224, %v2278
        %v2374 = vmul.f32 %v533, %v2283
        %v2375 = vmul.f32 %v535, %v2283
        %v2376 = vmul.f32 %v646, %v2283
        %v2377 = vmul.f32 %v648, %v2283
        %v2378 = vmul.f32 %v759, %v2283
        %v2379 = vmul.f32 %v761, %v2283
        %v2380 = vmul.f32 %v872, %v2283
        %v2381 = vmul.f32 %v874, %v2283
        %v2382 = vmul.f32 %v985, %v2283
        %v2383 = vmul.f32 %v987, %v2283
        %v2384 = vmul.f32 %v1098, %v2283
        %v2385 = vmul.f32 %v1100, %v2283
        %v2386 = vmul.f32 %v1211, %v2283
        %v2387 = vmul.f32 %v1213, %v2283
        %v2388 = vmul.f32 %v1324, %v2283
        %v2389 = vmul.f32 %v1326, %v2283
        %v2390 = vmul.f32 %v1437, %v2283
        %v2391 = vmul.f32 %v1439, %v2283
        %v2392 = vmul.f32 %v1550, %v2283
        %v2393 = vmul.f32 %v1552, %v2283
        %v2394 = vmul.f32 %v1663, %v2283
        %v2395 = vmul.f32 %v1665, %v2283
        %v2396 = vmul.f32 %v1776, %v2283
        %v2397 = vmul.f32 %v1778, %v2283
        %v2398 = vmul.f32 %v1889, %v2283
        %v2399 = vmul.f32 %v1891, %v2283
        %v2400 = vmul.f32 %v2002, %v2283
        %v2401 = vmul.f32 %v2004, %v2283
        %v2402 = vmul.f32 %v2115, %v2283
        %v2403 = vmul.f32 %v2117, %v2283
        %v2404 = vmul.f32 %v2228, %v2283
        %v2405 = vmul.f32 %v2230, %v2283
        %v2406 = vmul.f32 %v539, %v2288
        %v2407 = vmul.f32 %v541, %v2288
        %v2408 = vmul.f32 %v652, %v2288
        %v2409 = vmul.f32 %v654, %v2288
        %v2410 = vmul.f32 %v765, %v2288
        %v2411 = vmul.f32 %v767, %v2288
        %v2412 = vmul.f32 %v878, %v2288
        %v2413 = vmul.f32 %v880, %v2288
        %v2414 = vmul.f32 %v991, %v2288
        %v2415 = vmul.f32 %v993, %v2288
        %v2416 = vmul.f32 %v1104, %v2288
        %v2417 = vmul.f32 %v1106, %v2288
        %v2418 = vmul.f32 %v1217, %v2288
        %v2419 = vmul.f32 %v1219, %v2288
        %v2420 = vmul.f32 %v1330, %v2288
        %v2421 = vmul.f32 %v1332, %v2288
        %v2422 = vmul.f32 %v1443, %v2288
        %v2423 = vmul.f32 %v1445, %v2288
        %v2424 = vmul.f32 %v1556, %v2288
        %v2425 = vmul.f32 %v1558, %v2288
        %v2426 = vmul.f32 %v1669, %v2288
        %v2427 = vmul.f32 %v1671, %v2288
        %v2428 = vmul.f32 %v1782, %v2288
        %v2429 = vmul.f32 %v1784, %v2288
        %v2430 = vmul.f32 %v1895, %v2288
        %v2431 = vmul.f32 %v1897, %v2288
        %v2432 = vmul.f32 %v2008, %v2288
        %v2433 = vmul.f32 %v2010, %v2288
        %v2434 = vmul.f32 %v2121, %v2288
        %v2435 = vmul.f32 %v2123, %v2288
        %v2436 = vmul.f32 %v2234, %v2288
        %v2437 = vmul.f32 %v2236, %v2288
        %v2438 = vmul.f32 %v545, %v2293
        %v2439 = vmul.f32 %v547, %v2293
        %v2440 = vmul.f32 %v658, %v2293
        %v2441 = vmul.f32 %v660, %v2293
        %v2442 = vmul.f32 %v771, %v2293
        %v2443 = vmul.f32 %v773, %v2293
        %v2444 = vmul.f32 %v884, %v2293
        %v2445 = vmul.f32 %v886, %v2293
        %v2446 = vmul.f32 %v997, %v2293
        %v2447 = vmul.f32 %v999, %v2293
        %v2448 = vmul.f32 %v1110, %v2293
        %v2449 = vmul.f32 %v1112, %v2293
        %v2450 = vmul.f32 %v1223, %v2293
        %v2451 = vmul.f32 %v1225, %v2293
        %v2452 = vmul.f32 %v1336, %v2293
        %v2453 = vmul.f32 %v1338, %v2293
        %v2454 = vmul.f32 %v1449, %v2293
        %v2455 = vmul.f32 %v1451, %v2293
        %v2456 = vmul.f32 %v1562, %v2293
        %v2457 = vmul.f32 %v1564, %v2293
        %v2458 = vmul.f32 %v1675, %v2293
        %v2459 = vmul.f32 %v1677, %v2293
        %v2460 = vmul.f32 %v1788, %v2293
        %v2461 = vmul.f32 %v1790, %v2293
        %v2462 = vmul.f32 %v1901, %v2293
        %v2463 = vmul.f32 %v1903, %v2293
        %v2464 = vmul.f32 %v2014, %v2293
        %v2465 = vmul.f32 %v2016, %v2293
        %v2466 = vmul.f32 %v2127, %v2293
        %v2467 = vmul.f32 %v2129, %v2293
        %v2468 = vmul.f32 %v2240, %v2293
        %v2469 = vmul.f32 %v2242, %v2293
        %v2470 = vmul.f32 %v551, %v2298
        %v2471 = vmul.f32 %v553, %v2298
        %v2472 = vmul.f32 %v664, %v2298
        %v2473 = vmul.f32 %v666, %v2298
        %v2474 = vmul.f32 %v777, %v2298
        %v2475 = vmul.f32 %v779, %v2298
        %v2476 = vmul.f32 %v890, %v2298
        %v2477 = vmul.f32 %v892, %v2298
        %v2478 = vmul.f32 %v1003, %v2298
        %v2479 = vmul.f32 %v1005, %v2298
        %v2480 = vmul.f32 %v1116, %v2298
        %v2481 = vmul.f32 %v1118, %v2298
        %v2482 = vmul.f32 %v1229, %v2298
        %v2483 = vmul.f32 %v1231, %v2298
        %v2484 = vmul.f32 %v1342, %v2298
        %v2485 = vmul.f32 %v1344, %v2298
        %v2486 = vmul.f32 %v1455, %v2298
        %v2487 = vmul.f32 %v1457, %v2298
        %v2488 = vmul.f32 %v1568, %v2298
        %v2489 = vmul.f32 %v1570, %v2298
        %v2490 = vmul.f32 %v1681, %v2298
        %v2491 = vmul.f32 %v1683, %v2298
        %v2492 = vmul.f32 %v1794, %v2298
        %v2493 = vmul.f32 %v1796, %v2298
        %v2494 = vmul.f32 %v1907, %v2298
        %v2495 = vmul.f32 %v1909, %v2298
        %v2496 = vmul.f32 %v2020, %v2298
        %v2497 = vmul.f32 %v2022, %v2298
        %v2498 = vmul.f32 %v2133, %v2298
        %v2499 = vmul.f32 %v2135, %v2298
        %v2500 = vmul.f32 %v2246, %v2298
        %v2501 = vmul.f32 %v2248, %v2298
        %v2502 = vmul.f32 %v557, %v2303
        %v2503 = vmul.f32 %v559, %v2303
        %v2504 = vmul.f32 %v670, %v2303
        %v2505 = vmul.f32 %v672, %v2303
        %v2506 = vmul.f32 %v783, %v2303
        %v2507 = vmul.f32 %v785, %v2303
        %v2508 = vmul.f32 %v896, %v2303
        %v2509 = vmul.f32 %v898, %v2303
        %v2510 = vmul.f32 %v1009, %v2303
        %v2511 = vmul.f32 %v1011, %v2303
        %v2512 = vmul.f32 %v1122, %v2303
        %v2513 = vmul.f32 %v1124, %v2303
        %v2514 = vmul.f32 %v1235, %v2303
        %v2515 = vmul.f32 %v1237, %v2303
        %v2516 = vmul.f32 %v1348, %v2303
        %v2517 = vmul.f32 %v1350, %v2303
        %v2518 = vmul.f32 %v1461, %v2303
        %v2519 = vmul.f32 %v1463, %v2303
        %v2520 = vmul.f32 %v1574, %v2303
        %v2521 = vmul.f32 %v1576, %v2303
        %v2522 = vmul.f32 %v1687, %v2303
        %v2523 = vmul.f32 %v1689, %v2303
        %v2524 = vmul.f32 %v1800, %v2303
        %v2525 = vmul.f32 %v1802, %v2303
        %v2526 = vmul.f32 %v1913, %v2303
        %v2527 = vmul.f32 %v1915, %v2303
        %v2528 = vmul.f32 %v2026, %v2303
        %v2529 = vmul.f32 %v2028, %v2303
        %v2530 = vmul.f32 %v2139, %v2303
        %v2531 = vmul.f32 %v2141, %v2303
        %v2532 = vmul.f32 %v2252, %v2303
        %v2533 = vmul.f32 %v2254, %v2303
        %v2534 = vmul.f32 %v563, %v2308
        %v2535 = vmul.f32 %v565, %v2308
        %v2536 = vmul.f32 %v676, %v2308
        %v2537 = vmul.f32 %v678, %v2308
        %v2538 = vmul.f32 %v789, %v2308
        %v2539 = vmul.f32 %v791, %v2308
        %v2540 = vmul.f32 %v902, %v2308
        %v2541 = vmul.f32 %v904, %v2308
        %v2542 = vmul.f32 %v1015, %v2308
        %v2543 = vmul.f32 %v1017, %v2308
        %v2544 = vmul.f32 %v1128, %v2308
        %v2545 = vmul.f32 %v1130, %v2308
        %v2546 = vmul.f32 %v1241, %v2308
        %v2547 = vmul.f32 %v1243, %v2308
        %v2548 = vmul.f32 %v1354, %v2308
        %v2549 = vmul.f32 %v1356, %v2308
        %v2550 = vmul.f32 %v1467, %v2308
        %v2551 = vmul.f32 %v1469, %v2308
        %v2552 = vmul.f32 %v1580, %v2308
        %v2553 = vmul.f32 %v1582, %v2308
        %v2554 = vmul.f32 %v1693, %v2308
        %v2555 = vmul.f32 %v1695, %v2308
        %v2556 = vmul.f32 %v1806, %v2308
        %v2557 = vmul.f32 %v1808, %v2308
        %v2558 = vmul.f32 %v1919, %v2308
        %v2559 = vmul.f32 %v1921, %v2308
        %v2560 = vmul.f32 %v2032, %v2308
        %v2561 = vmul.f32 %v2034, %v2308
        %v2562 = vmul.f32 %v2145, %v2308
        %v2563 = vmul.f32 %v2147, %v2308
        %v2564 = vmul.f32 %v2258, %v2308
        %v2565 = vmul.f32 %v2260, %v2308
        %v2566 = vld [vmem:[%s3] sm:$0xff]
        %v2567 = vld [vmem:[%s3 + $0x8] sm:$0xff]
        %v2568 = vld [vmem:[%s3 + $0x10] sm:$0xff]
        %v2569 = vld [vmem:[%s3 + $0x18] sm:$0xff]
        %v2570 = vld [vmem:[%s3 + $0x20] sm:$0xff]
        %v2571 = vld [vmem:[%s3 + $0x28] sm:$0xff]
        %v2572 = vld [vmem:[%s3 + $0x30] sm:$0xff]
        %v2573 = vld [vmem:[%s3 + $0x38] sm:$0xff]
        %2575 = vset.pattern.permute.xlu0 0
        %2576 = vperm.xlu0 %2575, %v2566
        %v2577 = vpop.permute.xlu0 %2576
        %2580 = vset.pattern.permute.xlu0 0
        %2581 = vperm.xlu0 %2580, %v2567
        %v2582 = vpop.permute.xlu0 %2581
        %2585 = vset.pattern.permute.xlu0 0
        %2586 = vperm.xlu0 %2585, %v2568
        %v2587 = vpop.permute.xlu0 %2586
        %2590 = vset.pattern.permute.xlu0 0
        %2591 = vperm.xlu0 %2590, %v2569
        %v2592 = vpop.permute.xlu0 %2591
        %2595 = vset.pattern.permute.xlu0 0
        %2596 = vperm.xlu0 %2595, %v2570
        %v2597 = vpop.permute.xlu0 %2596
        %2600 = vset.pattern.permute.xlu0 0
        %2601 = vperm.xlu0 %2600, %v2571
        %v2602 = vpop.permute.xlu0 %2601
        %2605 = vset.pattern.permute.xlu0 0
        %2606 = vperm.xlu0 %2605, %v2572
        %v2607 = vpop.permute.xlu0 %2606
        %2610 = vset.pattern.permute.xlu0 0
        %2611 = vperm.xlu0 %2610, %v2573
        %v2612 = vpop.permute.xlu0 %2611
        %v2614 = vadd.f32 %v2310, %v2577
        %v2615 = vadd.f32 %v2311, %v2577
        %v2616 = vadd.f32 %v2312, %v2577
        %v2617 = vadd.f32 %v2313, %v2577
        %v2618 = vadd.f32 %v2314, %v2577
        %v2619 = vadd.f32 %v2315, %v2577
        %v2620 = vadd.f32 %v2316, %v2577
        %v2621 = vadd.f32 %v2317, %v2577
        %v2622 = vadd.f32 %v2318, %v2577
        %v2623 = vadd.f32 %v2319, %v2577
        %v2624 = vadd.f32 %v2320, %v2577
        %v2625 = vadd.f32 %v2321, %v2577
        %v2626 = vadd.f32 %v2322, %v2577
        %v2627 = vadd.f32 %v2323, %v2577
        %v2628 = vadd.f32 %v2324, %v2577
        %v2629 = vadd.f32 %v2325, %v2577
        %v2630 = vadd.f32 %v2326, %v2577
        %v2631 = vadd.f32 %v2327, %v2577
        %v2632 = vadd.f32 %v2328, %v2577
        %v2633 = vadd.f32 %v2329, %v2577
        %v2634 = vadd.f32 %v2330, %v2577
        %v2635 = vadd.f32 %v2331, %v2577
        %v2636 = vadd.f32 %v2332, %v2577
        %v2637 = vadd.f32 %v2333, %v2577
        %v2638 = vadd.f32 %v2334, %v2577
        %v2639 = vadd.f32 %v2335, %v2577
        %v2640 = vadd.f32 %v2336, %v2577
        %v2641 = vadd.f32 %v2337, %v2577
        %v2642 = vadd.f32 %v2338, %v2577
        %v2643 = vadd.f32 %v2339, %v2577
        %v2644 = vadd.f32 %v2340, %v2577
        %v2645 = vadd.f32 %v2341, %v2577
        %v2646 = vadd.f32 %v2342, %v2582
        %v2647 = vadd.f32 %v2343, %v2582
        %v2648 = vadd.f32 %v2344, %v2582
        %v2649 = vadd.f32 %v2345, %v2582
        %v2650 = vadd.f32 %v2346, %v2582
        %v2651 = vadd.f32 %v2347, %v2582
        %v2652 = vadd.f32 %v2348, %v2582
        %v2653 = vadd.f32 %v2349, %v2582
        %v2654 = vadd.f32 %v2350, %v2582
        %v2655 = vadd.f32 %v2351, %v2582
        %v2656 = vadd.f32 %v2352, %v2582
        %v2657 = vadd.f32 %v2353, %v2582
        %v2658 = vadd.f32 %v2354, %v2582
        %v2659 = vadd.f32 %v2355, %v2582
        %v2660 = vadd.f32 %v2356, %v2582
        %v2661 = vadd.f32 %v2357, %v2582
        %v2662 = vadd.f32 %v2358, %v2582
        %v2663 = vadd.f32 %v2359, %v2582
        %v2664 = vadd.f32 %v2360, %v2582
        %v2665 = vadd.f32 %v2361, %v2582
        %v2666 = vadd.f32 %v2362, %v2582
        %v2667 = vadd.f32 %v2363, %v2582
        %v2668 = vadd.f32 %v2364, %v2582
        %v2669 = vadd.f32 %v2365, %v2582
        %v2670 = vadd.f32 %v2366, %v2582
        %v2671 = vadd.f32 %v2367, %v2582
        %v2672 = vadd.f32 %v2368, %v2582
        %v2673 = vadd.f32 %v2369, %v2582
        %v2674 = vadd.f32 %v2370, %v2582
        %v2675 = vadd.f32 %v2371, %v2582
        %v2676 = vadd.f32 %v2372, %v2582
        %v2677 = vadd.f32 %v2373, %v2582
        %v2678 = vadd.f32 %v2374, %v2587
        %v2679 = vadd.f32 %v2375, %v2587
        %v2680 = vadd.f32 %v2376, %v2587
        %v2681 = vadd.f32 %v2377, %v2587
        %v2682 = vadd.f32 %v2378, %v2587
        %v2683 = vadd.f32 %v2379, %v2587
        %v2684 = vadd.f32 %v2380, %v2587
        %v2685 = vadd.f32 %v2381, %v2587
        %v2686 = vadd.f32 %v2382, %v2587
        %v2687 = vadd.f32 %v2383, %v2587
        %v2688 = vadd.f32 %v2384, %v2587
        %v2689 = vadd.f32 %v2385, %v2587
        %v2690 = vadd.f32 %v2386, %v2587
        %v2691 = vadd.f32 %v2387, %v2587
        %v2692 = vadd.f32 %v2388, %v2587
        %v2693 = vadd.f32 %v2389, %v2587
        %v2694 = vadd.f32 %v2390, %v2587
        %v2695 = vadd.f32 %v2391, %v2587
        %v2696 = vadd.f32 %v2392, %v2587
        %v2697 = vadd.f32 %v2393, %v2587
        %v2698 = vadd.f32 %v2394, %v2587
        %v2699 = vadd.f32 %v2395, %v2587
        %v2700 = vadd.f32 %v2396, %v2587
        %v2701 = vadd.f32 %v2397, %v2587
        %v2702 = vadd.f32 %v2398, %v2587
        %v2703 = vadd.f32 %v2399, %v2587
        %v2704 = vadd.f32 %v2400, %v2587
        %v2705 = vadd.f32 %v2401, %v2587
        %v2706 = vadd.f32 %v2402, %v2587
        %v2707 = vadd.f32 %v2403, %v2587
        %v2708 = vadd.f32 %v2404, %v2587
        %v2709 = vadd.f32 %v2405, %v2587
        %v2710 = vadd.f32 %v2406, %v2592
        %v2711 = vadd.f32 %v2407, %v2592
        %v2712 = vadd.f32 %v2408, %v2592
        %v2713 = vadd.f32 %v2409, %v2592
        %v2714 = vadd.f32 %v2410, %v2592
        %v2715 = vadd.f32 %v2411, %v2592
        %v2716 = vadd.f32 %v2412, %v2592
        %v2717 = vadd.f32 %v2413, %v2592
        %v2718 = vadd.f32 %v2414, %v2592
        %v2719 = vadd.f32 %v2415, %v2592
        %v2720 = vadd.f32 %v2416, %v2592
        %v2721 = vadd.f32 %v2417, %v2592
        %v2722 = vadd.f32 %v2418, %v2592
        %v2723 = vadd.f32 %v2419, %v2592
        %v2724 = vadd.f32 %v2420, %v2592
        %v2725 = vadd.f32 %v2421, %v2592
        %v2726 = vadd.f32 %v2422, %v2592
        %v2727 = vadd.f32 %v2423, %v2592
        %v2728 = vadd.f32 %v2424, %v2592
        %v2729 = vadd.f32 %v2425, %v2592
        %v2730 = vadd.f32 %v2426, %v2592
        %v2731 = vadd.f32 %v2427, %v2592
        %v2732 = vadd.f32 %v2428, %v2592
        %v2733 = vadd.f32 %v2429, %v2592
        %v2734 = vadd.f32 %v2430, %v2592
        %v2735 = vadd.f32 %v2431, %v2592
        %v2736 = vadd.f32 %v2432, %v2592
        %v2737 = vadd.f32 %v2433, %v2592
        %v2738 = vadd.f32 %v2434, %v2592
        %v2739 = vadd.f32 %v2435, %v2592
        %v2740 = vadd.f32 %v2436, %v2592
        %v2741 = vadd.f32 %v2437, %v2592
        %v2742 = vadd.f32 %v2438, %v2597
        %v2743 = vadd.f32 %v2439, %v2597
        %v2744 = vadd.f32 %v2440, %v2597
        %v2745 = vadd.f32 %v2441, %v2597
        %v2746 = vadd.f32 %v2442, %v2597
        %v2747 = vadd.f32 %v2443, %v2597
        %v2748 = vadd.f32 %v2444, %v2597
        %v2749 = vadd.f32 %v2445, %v2597
        %v2750 = vadd.f32 %v2446, %v2597
        %v2751 = vadd.f32 %v2447, %v2597
        %v2752 = vadd.f32 %v2448, %v2597
        %v2753 = vadd.f32 %v2449, %v2597
        %v2754 = vadd.f32 %v2450, %v2597
        %v2755 = vadd.f32 %v2451, %v2597
        %v2756 = vadd.f32 %v2452, %v2597
        %v2757 = vadd.f32 %v2453, %v2597
        %v2758 = vadd.f32 %v2454, %v2597
        %v2759 = vadd.f32 %v2455, %v2597
        %v2760 = vadd.f32 %v2456, %v2597
        %v2761 = vadd.f32 %v2457, %v2597
        %v2762 = vadd.f32 %v2458, %v2597
        %v2763 = vadd.f32 %v2459, %v2597
        %v2764 = vadd.f32 %v2460, %v2597
        %v2765 = vadd.f32 %v2461, %v2597
        %v2766 = vadd.f32 %v2462, %v2597
        %v2767 = vadd.f32 %v2463, %v2597
        %v2768 = vadd.f32 %v2464, %v2597
        %v2769 = vadd.f32 %v2465, %v2597
        %v2770 = vadd.f32 %v2466, %v2597
        %v2771 = vadd.f32 %v2467, %v2597
        %v2772 = vadd.f32 %v2468, %v2597
        %v2773 = vadd.f32 %v2469, %v2597
        %v2774 = vadd.f32 %v2470, %v2602
        %v2775 = vadd.f32 %v2471, %v2602
        %v2776 = vadd.f32 %v2472, %v2602
        %v2777 = vadd.f32 %v2473, %v2602
        %v2778 = vadd.f32 %v2474, %v2602
        %v2779 = vadd.f32 %v2475, %v2602
        %v2780 = vadd.f32 %v2476, %v2602
        %v2781 = vadd.f32 %v2477, %v2602
        %v2782 = vadd.f32 %v2478, %v2602
        %v2783 = vadd.f32 %v2479, %v2602
        %v2784 = vadd.f32 %v2480, %v2602
        %v2785 = vadd.f32 %v2481, %v2602
        %v2786 = vadd.f32 %v2482, %v2602
        %v2787 = vadd.f32 %v2483, %v2602
        %v2788 = vadd.f32 %v2484, %v2602
        %v2789 = vadd.f32 %v2485, %v2602
        %v2790 = vadd.f32 %v2486, %v2602
        %v2791 = vadd.f32 %v2487, %v2602
        %v2792 = vadd.f32 %v2488, %v2602
        %v2793 = vadd.f32 %v2489, %v2602
        %v2794 = vadd.f32 %v2490, %v2602
        %v2795 = vadd.f32 %v2491, %v2602
        %v2796 = vadd.f32 %v2492, %v2602
        %v2797 = vadd.f32 %v2493, %v2602
        %v2798 = vadd.f32 %v2494, %v2602
        %v2799 = vadd.f32 %v2495, %v2602
        %v2800 = vadd.f32 %v2496, %v2602
        %v2801 = vadd.f32 %v2497, %v2602
        %v2802 = vadd.f32 %v2498, %v2602
        %v2803 = vadd.f32 %v2499, %v2602
        %v2804 = vadd.f32 %v2500, %v2602
        %v2805 = vadd.f32 %v2501, %v2602
        %v2806 = vadd.f32 %v2502, %v2607
        %v2807 = vadd.f32 %v2503, %v2607
        %v2808 = vadd.f32 %v2504, %v2607
        %v2809 = vadd.f32 %v2505, %v2607
        %v2810 = vadd.f32 %v2506, %v2607
        %v2811 = vadd.f32 %v2507, %v2607
        %v2812 = vadd.f32 %v2508, %v2607
        %v2813 = vadd.f32 %v2509, %v2607
        %v2814 = vadd.f32 %v2510, %v2607
        %v2815 = vadd.f32 %v2511, %v2607
        %v2816 = vadd.f32 %v2512, %v2607
        %v2817 = vadd.f32 %v2513, %v2607
        %v2818 = vadd.f32 %v2514, %v2607
        %v2819 = vadd.f32 %v2515, %v2607
        %v2820 = vadd.f32 %v2516, %v2607
        %v2821 = vadd.f32 %v2517, %v2607
        %v2822 = vadd.f32 %v2518, %v2607
        %v2823 = vadd.f32 %v2519, %v2607
        %v2824 = vadd.f32 %v2520, %v2607
        %v2825 = vadd.f32 %v2521, %v2607
        %v2826 = vadd.f32 %v2522, %v2607
        %v2827 = vadd.f32 %v2523, %v2607
        %v2828 = vadd.f32 %v2524, %v2607
        %v2829 = vadd.f32 %v2525, %v2607
        %v2830 = vadd.f32 %v2526, %v2607
        %v2831 = vadd.f32 %v2527, %v2607
        %v2832 = vadd.f32 %v2528, %v2607
        %v2833 = vadd.f32 %v2529, %v2607
        %v2834 = vadd.f32 %v2530, %v2607
        %v2835 = vadd.f32 %v2531, %v2607
        %v2836 = vadd.f32 %v2532, %v2607
        %v2837 = vadd.f32 %v2533, %v2607
        %v2838 = vadd.f32 %v2534, %v2612
        %v2839 = vadd.f32 %v2535, %v2612
        %v2840 = vadd.f32 %v2536, %v2612
        %v2841 = vadd.f32 %v2537, %v2612
        %v2842 = vadd.f32 %v2538, %v2612
        %v2843 = vadd.f32 %v2539, %v2612
        %v2844 = vadd.f32 %v2540, %v2612
        %v2845 = vadd.f32 %v2541, %v2612
        %v2846 = vadd.f32 %v2542, %v2612
        %v2847 = vadd.f32 %v2543, %v2612
        %v2848 = vadd.f32 %v2544, %v2612
        %v2849 = vadd.f32 %v2545, %v2612
        %v2850 = vadd.f32 %v2546, %v2612
        %v2851 = vadd.f32 %v2547, %v2612
        %v2852 = vadd.f32 %v2548, %v2612
        %v2853 = vadd.f32 %v2549, %v2612
        %v2854 = vadd.f32 %v2550, %v2612
        %v2855 = vadd.f32 %v2551, %v2612
        %v2856 = vadd.f32 %v2552, %v2612
        %v2857 = vadd.f32 %v2553, %v2612
        %v2858 = vadd.f32 %v2554, %v2612
        %v2859 = vadd.f32 %v2555, %v2612
        %v2860 = vadd.f32 %v2556, %v2612
        %v2861 = vadd.f32 %v2557, %v2612
        %v2862 = vadd.f32 %v2558, %v2612
        %v2863 = vadd.f32 %v2559, %v2612
        %v2864 = vadd.f32 %v2560, %v2612
        %v2865 = vadd.f32 %v2561, %v2612
        %v2866 = vadd.f32 %v2562, %v2612
        %v2867 = vadd.f32 %v2563, %v2612
        %v2868 = vadd.f32 %v2564, %v2612
        %v2869 = vadd.f32 %v2565, %v2612
        %v2870 = vmax.f32 %v2614, 0.0
        %v2871 = vmax.f32 %v2615, 0.0
        %v2872 = vmax.f32 %v2616, 0.0
        %v2873 = vmax.f32 %v2617, 0.0
        %v2874 = vmax.f32 %v2618, 0.0
        %v2875 = vmax.f32 %v2619, 0.0
        %v2876 = vmax.f32 %v2620, 0.0
        %v2877 = vmax.f32 %v2621, 0.0
        %v2878 = vmax.f32 %v2622, 0.0
        %v2879 = vmax.f32 %v2623, 0.0
        %v2880 = vmax.f32 %v2624, 0.0
        %v2881 = vmax.f32 %v2625, 0.0
        %v2882 = vmax.f32 %v2626, 0.0
        %v2883 = vmax.f32 %v2627, 0.0
        %v2884 = vmax.f32 %v2628, 0.0
        %v2885 = vmax.f32 %v2629, 0.0
        %v2886 = vmax.f32 %v2630, 0.0
        %v2887 = vmax.f32 %v2631, 0.0
        %v2888 = vmax.f32 %v2632, 0.0
        %v2889 = vmax.f32 %v2633, 0.0
        %v2890 = vmax.f32 %v2634, 0.0
        %v2891 = vmax.f32 %v2635, 0.0
        %v2892 = vmax.f32 %v2636, 0.0
        %v2893 = vmax.f32 %v2637, 0.0
        %v2894 = vmax.f32 %v2638, 0.0
        %v2895 = vmax.f32 %v2639, 0.0
        %v2896 = vmax.f32 %v2640, 0.0
        %v2897 = vmax.f32 %v2641, 0.0
        %v2898 = vmax.f32 %v2642, 0.0
        %v2899 = vmax.f32 %v2643, 0.0
        %v2900 = vmax.f32 %v2644, 0.0
        %v2901 = vmax.f32 %v2645, 0.0
        %v2902 = vmax.f32 %v2646, 0.0
        %v2903 = vmax.f32 %v2647, 0.0
        %v2904 = vmax.f32 %v2648, 0.0
        %v2905 = vmax.f32 %v2649, 0.0
        %v2906 = vmax.f32 %v2650, 0.0
        %v2907 = vmax.f32 %v2651, 0.0
        %v2908 = vmax.f32 %v2652, 0.0
        %v2909 = vmax.f32 %v2653, 0.0
        %v2910 = vmax.f32 %v2654, 0.0
        %v2911 = vmax.f32 %v2655, 0.0
        %v2912 = vmax.f32 %v2656, 0.0
        %v2913 = vmax.f32 %v2657, 0.0
        %v2914 = vmax.f32 %v2658, 0.0
        %v2915 = vmax.f32 %v2659, 0.0
        %v2916 = vmax.f32 %v2660, 0.0
        %v2917 = vmax.f32 %v2661, 0.0
        %v2918 = vmax.f32 %v2662, 0.0
        %v2919 = vmax.f32 %v2663, 0.0
        %v2920 = vmax.f32 %v2664, 0.0
        %v2921 = vmax.f32 %v2665, 0.0
        %v2922 = vmax.f32 %v2666, 0.0
        %v2923 = vmax.f32 %v2667, 0.0
        %v2924 = vmax.f32 %v2668, 0.0
        %v2925 = vmax.f32 %v2669, 0.0
        %v2926 = vmax.f32 %v2670, 0.0
        %v2927 = vmax.f32 %v2671, 0.0
        %v2928 = vmax.f32 %v2672, 0.0
        %v2929 = vmax.f32 %v2673, 0.0
        %v2930 = vmax.f32 %v2674, 0.0
        %v2931 = vmax.f32 %v2675, 0.0
        %v2932 = vmax.f32 %v2676, 0.0
        %v2933 = vmax.f32 %v2677, 0.0
        %v2934 = vmax.f32 %v2678, 0.0
        %v2935 = vmax.f32 %v2679, 0.0
        %v2936 = vmax.f32 %v2680, 0.0
        %v2937 = vmax.f32 %v2681, 0.0
        %v2938 = vmax.f32 %v2682, 0.0
        %v2939 = vmax.f32 %v2683, 0.0
        %v2940 = vmax.f32 %v2684, 0.0
        %v2941 = vmax.f32 %v2685, 0.0
        %v2942 = vmax.f32 %v2686, 0.0
        %v2943 = vmax.f32 %v2687, 0.0
        %v2944 = vmax.f32 %v2688, 0.0
        %v2945 = vmax.f32 %v2689, 0.0
        %v2946 = vmax.f32 %v2690, 0.0
        %v2947 = vmax.f32 %v2691, 0.0
        %v2948 = vmax.f32 %v2692, 0.0
        %v2949 = vmax.f32 %v2693, 0.0
        %v2950 = vmax.f32 %v2694, 0.0
        %v2951 = vmax.f32 %v2695, 0.0
        %v2952 = vmax.f32 %v2696, 0.0
        %v2953 = vmax.f32 %v2697, 0.0
        %v2954 = vmax.f32 %v2698, 0.0
        %v2955 = vmax.f32 %v2699, 0.0
        %v2956 = vmax.f32 %v2700, 0.0
        %v2957 = vmax.f32 %v2701, 0.0
        %v2958 = vmax.f32 %v2702, 0.0
        %v2959 = vmax.f32 %v2703, 0.0
        %v2960 = vmax.f32 %v2704, 0.0
        %v2961 = vmax.f32 %v2705, 0.0
        %v2962 = vmax.f32 %v2706, 0.0
        %v2963 = vmax.f32 %v2707, 0.0
        %v2964 = vmax.f32 %v2708, 0.0
        %v2965 = vmax.f32 %v2709, 0.0
        %v2966 = vmax.f32 %v2710, 0.0
        %v2967 = vmax.f32 %v2711, 0.0
        %v2968 = vmax.f32 %v2712, 0.0
        %v2969 = vmax.f32 %v2713, 0.0
        %v2970 = vmax.f32 %v2714, 0.0
        %v2971 = vmax.f32 %v2715, 0.0
        %v2972 = vmax.f32 %v2716, 0.0
        %v2973 = vmax.f32 %v2717, 0.0
        %v2974 = vmax.f32 %v2718, 0.0
        %v2975 = vmax.f32 %v2719, 0.0
        %v2976 = vmax.f32 %v2720, 0.0
        %v2977 = vmax.f32 %v2721, 0.0
        %v2978 = vmax.f32 %v2722, 0.0
        %v2979 = vmax.f32 %v2723, 0.0
        %v2980 = vmax.f32 %v2724, 0.0
        %v2981 = vmax.f32 %v2725, 0.0
        %v2982 = vmax.f32 %v2726, 0.0
        %v2983 = vmax.f32 %v2727, 0.0
        %v2984 = vmax.f32 %v2728, 0.0
        %v2985 = vmax.f32 %v2729, 0.0
        %v2986 = vmax.f32 %v2730, 0.0
        %v2987 = vmax.f32 %v2731, 0.0
        %v2988 = vmax.f32 %v2732, 0.0
        %v2989 = vmax.f32 %v2733, 0.0
        %v2990 = vmax.f32 %v2734, 0.0
        %v2991 = vmax.f32 %v2735, 0.0
        %v2992 = vmax.f32 %v2736, 0.0
        %v2993 = vmax.f32 %v2737, 0.0
        %v2994 = vmax.f32 %v2738, 0.0
        %v2995 = vmax.f32 %v2739, 0.0
        %v2996 = vmax.f32 %v2740, 0.0
        %v2997 = vmax.f32 %v2741, 0.0
        %v2998 = vmax.f32 %v2742, 0.0
        %v2999 = vmax.f32 %v2743, 0.0
        %v3000 = vmax.f32 %v2744, 0.0
        %v3001 = vmax.f32 %v2745, 0.0
        %v3002 = vmax.f32 %v2746, 0.0
        %v3003 = vmax.f32 %v2747, 0.0
        %v3004 = vmax.f32 %v2748, 0.0
        %v3005 = vmax.f32 %v2749, 0.0
        %v3006 = vmax.f32 %v2750, 0.0
        %v3007 = vmax.f32 %v2751, 0.0
        %v3008 = vmax.f32 %v2752, 0.0
        %v3009 = vmax.f32 %v2753, 0.0
        %v3010 = vmax.f32 %v2754, 0.0
        %v3011 = vmax.f32 %v2755, 0.0
        %v3012 = vmax.f32 %v2756, 0.0
        %v3013 = vmax.f32 %v2757, 0.0
        %v3014 = vmax.f32 %v2758, 0.0
        %v3015 = vmax.f32 %v2759, 0.0
        %v3016 = vmax.f32 %v2760, 0.0
        %v3017 = vmax.f32 %v2761, 0.0
        %v3018 = vmax.f32 %v2762, 0.0
        %v3019 = vmax.f32 %v2763, 0.0
        %v3020 = vmax.f32 %v2764, 0.0
        %v3021 = vmax.f32 %v2765, 0.0
        %v3022 = vmax.f32 %v2766, 0.0
        %v3023 = vmax.f32 %v2767, 0.0
        %v3024 = vmax.f32 %v2768, 0.0
        %v3025 = vmax.f32 %v2769, 0.0
        %v3026 = vmax.f32 %v2770, 0.0
        %v3027 = vmax.f32 %v2771, 0.0
        %v3028 = vmax.f32 %v2772, 0.0
        %v3029 = vmax.f32 %v2773, 0.0
        %v3030 = vmax.f32 %v2774, 0.0
        %v3031 = vmax.f32 %v2775, 0.0
        %v3032 = vmax.f32 %v2776, 0.0
        %v3033 = vmax.f32 %v2777, 0.0
        %v3034 = vmax.f32 %v2778, 0.0
        %v3035 = vmax.f32 %v2779, 0.0
        %v3036 = vmax.f32 %v2780, 0.0
        %v3037 = vmax.f32 %v2781, 0.0
        %v3038 = vmax.f32 %v2782, 0.0
        %v3039 = vmax.f32 %v2783, 0.0
        %v3040 = vmax.f32 %v2784, 0.0
        %v3041 = vmax.f32 %v2785, 0.0
        %v3042 = vmax.f32 %v2786, 0.0
        %v3043 = vmax.f32 %v2787, 0.0
        %v3044 = vmax.f32 %v2788, 0.0
        %v3045 = vmax.f32 %v2789, 0.0
        %v3046 = vmax.f32 %v2790, 0.0
        %v3047 = vmax.f32 %v2791, 0.0
        %v3048 = vmax.f32 %v2792, 0.0
        %v3049 = vmax.f32 %v2793, 0.0
        %v3050 = vmax.f32 %v2794, 0.0
        %v3051 = vmax.f32 %v2795, 0.0
        %v3052 = vmax.f32 %v2796, 0.0
        %v3053 = vmax.f32 %v2797, 0.0
        %v3054 = vmax.f32 %v2798, 0.0
        %v3055 = vmax.f32 %v2799, 0.0
        %v3056 = vmax.f32 %v2800, 0.0
        %v3057 = vmax.f32 %v2801, 0.0
        %v3058 = vmax.f32 %v2802, 0.0
        %v3059 = vmax.f32 %v2803, 0.0
        %v3060 = vmax.f32 %v2804, 0.0
        %v3061 = vmax.f32 %v2805, 0.0
        %v3062 = vmax.f32 %v2806, 0.0
        %v3063 = vmax.f32 %v2807, 0.0
        %v3064 = vmax.f32 %v2808, 0.0
        %v3065 = vmax.f32 %v2809, 0.0
        %v3066 = vmax.f32 %v2810, 0.0
        %v3067 = vmax.f32 %v2811, 0.0
        %v3068 = vmax.f32 %v2812, 0.0
        %v3069 = vmax.f32 %v2813, 0.0
        %v3070 = vmax.f32 %v2814, 0.0
        %v3071 = vmax.f32 %v2815, 0.0
        %v3072 = vmax.f32 %v2816, 0.0
        %v3073 = vmax.f32 %v2817, 0.0
        %v3074 = vmax.f32 %v2818, 0.0
        %v3075 = vmax.f32 %v2819, 0.0
        %v3076 = vmax.f32 %v2820, 0.0
        %v3077 = vmax.f32 %v2821, 0.0
        %v3078 = vmax.f32 %v2822, 0.0
        %v3079 = vmax.f32 %v2823, 0.0
        %v3080 = vmax.f32 %v2824, 0.0
        %v3081 = vmax.f32 %v2825, 0.0
        %v3082 = vmax.f32 %v2826, 0.0
        %v3083 = vmax.f32 %v2827, 0.0
        %v3084 = vmax.f32 %v2828, 0.0
        %v3085 = vmax.f32 %v2829, 0.0
        %v3086 = vmax.f32 %v2830, 0.0
        %v3087 = vmax.f32 %v2831, 0.0
        %v3088 = vmax.f32 %v2832, 0.0
        %v3089 = vmax.f32 %v2833, 0.0
        %v3090 = vmax.f32 %v2834, 0.0
        %v3091 = vmax.f32 %v2835, 0.0
        %v3092 = vmax.f32 %v2836, 0.0
        %v3093 = vmax.f32 %v2837, 0.0
        %v3094 = vmax.f32 %v2838, 0.0
        %v3095 = vmax.f32 %v2839, 0.0
        %v3096 = vmax.f32 %v2840, 0.0
        %v3097 = vmax.f32 %v2841, 0.0
        %v3098 = vmax.f32 %v2842, 0.0
        %v3099 = vmax.f32 %v2843, 0.0
        %v3100 = vmax.f32 %v2844, 0.0
        %v3101 = vmax.f32 %v2845, 0.0
        %v3102 = vmax.f32 %v2846, 0.0
        %v3103 = vmax.f32 %v2847, 0.0
        %v3104 = vmax.f32 %v2848, 0.0
        %v3105 = vmax.f32 %v2849, 0.0
        %v3106 = vmax.f32 %v2850, 0.0
        %v3107 = vmax.f32 %v2851, 0.0
        %v3108 = vmax.f32 %v2852, 0.0
        %v3109 = vmax.f32 %v2853, 0.0
        %v3110 = vmax.f32 %v2854, 0.0
        %v3111 = vmax.f32 %v2855, 0.0
        %v3112 = vmax.f32 %v2856, 0.0
        %v3113 = vmax.f32 %v2857, 0.0
        %v3114 = vmax.f32 %v2858, 0.0
        %v3115 = vmax.f32 %v2859, 0.0
        %v3116 = vmax.f32 %v2860, 0.0
        %v3117 = vmax.f32 %v2861, 0.0
        %v3118 = vmax.f32 %v2862, 0.0
        %v3119 = vmax.f32 %v2863, 0.0
        %v3120 = vmax.f32 %v2864, 0.0
        %v3121 = vmax.f32 %v2865, 0.0
        %v3122 = vmax.f32 %v2866, 0.0
        %v3123 = vmax.f32 %v2867, 0.0
        %v3124 = vmax.f32 %v2868, 0.0
        %v3125 = vmax.f32 %v2869, 0.0
        %3126 = vst [vmem:[%s190] sm:$0xff] %v2870
        %3127 = vst [vmem:[%s190 + $0x8] sm:$0xff] %v2871
        %3128 = vst [vmem:[%s190 + $0x10] sm:$0xff] %v2872
        %3129 = vst [vmem:[%s190 + $0x18] sm:$0xff] %v2873
        %3130 = vst [vmem:[%s190 + $0x20] sm:$0xff] %v2874
        %3131 = vst [vmem:[%s190 + $0x28] sm:$0xff] %v2875
        %3132 = vst [vmem:[%s190 + $0x30] sm:$0xff] %v2876
        %3133 = vst [vmem:[%s190 + $0x38] sm:$0xff] %v2877
        %3134 = vst [vmem:[%s190 + $0x40] sm:$0xff] %v2878
        %3135 = vst [vmem:[%s190 + $0x48] sm:$0xff] %v2879
        %3136 = vst [vmem:[%s190 + $0x50] sm:$0xff] %v2880
        %3137 = vst [vmem:[%s190 + $0x58] sm:$0xff] %v2881
        %3138 = vst [vmem:[%s190 + $0x60] sm:$0xff] %v2882
        %3139 = vst [vmem:[%s190 + $0x68] sm:$0xff] %v2883
        %3140 = vst [vmem:[%s190 + $0x70] sm:$0xff] %v2884
        %3141 = vst [vmem:[%s190 + $0x78] sm:$0xff] %v2885
        %3142 = vst [vmem:[%s190 + $0x80] sm:$0xff] %v2886
        %3143 = vst [vmem:[%s190 + $0x88] sm:$0xff] %v2887
        %3144 = vst [vmem:[%s190 + $0x90] sm:$0xff] %v2888
        %3145 = vst [vmem:[%s190 + $0x98] sm:$0xff] %v2889
        %3146 = vst [vmem:[%s190 + $0xa0] sm:$0xff] %v2890
        %3147 = vst [vmem:[%s190 + $0xa8] sm:$0xff] %v2891
        %3148 = vst [vmem:[%s190 + $0xb0] sm:$0xff] %v2892
        %3149 = vst [vmem:[%s190 + $0xb8] sm:$0xff] %v2893
        %3150 = vst [vmem:[%s190 + $0xc0] sm:$0xff] %v2894
        %3151 = vst [vmem:[%s190 + $0xc8] sm:$0xff] %v2895
        %3152 = vst [vmem:[%s190 + $0xd0] sm:$0xff] %v2896
        %3153 = vst [vmem:[%s190 + $0xd8] sm:$0xff] %v2897
        %3154 = vst [vmem:[%s190 + $0xe0] sm:$0xff] %v2898
        %3155 = vst [vmem:[%s190 + $0xe8] sm:$0xff] %v2899
        %3156 = vst [vmem:[%s190 + $0xf0] sm:$0xff] %v2900
        %3157 = vst [vmem:[%s190 + $0xf8] sm:$0xff] %v2901
        %3158 = vst [vmem:[%s190 + $0x100] sm:$0xff] %v2902
        %3159 = vst [vmem:[%s190 + $0x108] sm:$0xff] %v2903
        %3160 = vst [vmem:[%s190 + $0x110] sm:$0xff] %v2904
        %3161 = vst [vmem:[%s190 + $0x118] sm:$0xff] %v2905
        %3162 = vst [vmem:[%s190 + $0x120] sm:$0xff] %v2906
        %3163 = vst [vmem:[%s190 + $0x128] sm:$0xff] %v2907
        %3164 = vst [vmem:[%s190 + $0x130] sm:$0xff] %v2908
        %3165 = vst [vmem:[%s190 + $0x138] sm:$0xff] %v2909
        %3166 = vst [vmem:[%s190 + $0x140] sm:$0xff] %v2910
        %3167 = vst [vmem:[%s190 + $0x148] sm:$0xff] %v2911
        %3168 = vst [vmem:[%s190 + $0x150] sm:$0xff] %v2912
        %3169 = vst [vmem:[%s190 + $0x158] sm:$0xff] %v2913
        %3170 = vst [vmem:[%s190 + $0x160] sm:$0xff] %v2914
        %3171 = vst [vmem:[%s190 + $0x168] sm:$0xff] %v2915
        %3172 = vst [vmem:[%s190 + $0x170] sm:$0xff] %v2916
        %3173 = vst [vmem:[%s190 + $0x178] sm:$0xff] %v2917
        %3174 = vst [vmem:[%s190 + $0x180] sm:$0xff] %v2918
        %3175 = vst [vmem:[%s190 + $0x188] sm:$0xff] %v2919
        %3176 = vst [vmem:[%s190 + $0x190] sm:$0xff] %v2920
        %3177 = vst [vmem:[%s190 + $0x198] sm:$0xff] %v2921
        %3178 = vst [vmem:[%s190 + $0x1a0] sm:$0xff] %v2922
        %3179 = vst [vmem:[%s190 + $0x1a8] sm:$0xff] %v2923
        %3180 = vst [vmem:[%s190 + $0x1b0] sm:$0xff] %v2924
        %3181 = vst [vmem:[%s190 + $0x1b8] sm:$0xff] %v2925
        %3182 = vst [vmem:[%s190 + $0x1c0] sm:$0xff] %v2926
        %3183 = vst [vmem:[%s190 + $0x1c8] sm:$0xff] %v2927
        %3184 = vst [vmem:[%s190 + $0x1d0] sm:$0xff] %v2928
        %3185 = vst [vmem:[%s190 + $0x1d8] sm:$0xff] %v2929
        %3186 = vst [vmem:[%s190 + $0x1e0] sm:$0xff] %v2930
        %3187 = vst [vmem:[%s190 + $0x1e8] sm:$0xff] %v2931
        %3188 = vst [vmem:[%s190 + $0x1f0] sm:$0xff] %v2932
        %3189 = vst [vmem:[%s190 + $0x1f8] sm:$0xff] %v2933
        %3190 = vst [vmem:[%s190 + $0x200] sm:$0xff] %v2934
        %3191 = vst [vmem:[%s190 + $0x208] sm:$0xff] %v2935
        %3192 = vst [vmem:[%s190 + $0x210] sm:$0xff] %v2936
        %3193 = vst [vmem:[%s190 + $0x218] sm:$0xff] %v2937
        %3194 = vst [vmem:[%s190 + $0x220] sm:$0xff] %v2938
        %3195 = vst [vmem:[%s190 + $0x228] sm:$0xff] %v2939
        %3196 = vst [vmem:[%s190 + $0x230] sm:$0xff] %v2940
        %3197 = vst [vmem:[%s190 + $0x238] sm:$0xff] %v2941
        %3198 = vst [vmem:[%s190 + $0x240] sm:$0xff] %v2942
        %3199 = vst [vmem:[%s190 + $0x248] sm:$0xff] %v2943
        %3200 = vst [vmem:[%s190 + $0x250] sm:$0xff] %v2944
        %3201 = vst [vmem:[%s190 + $0x258] sm:$0xff] %v2945
        %3202 = vst [vmem:[%s190 + $0x260] sm:$0xff] %v2946
        %3203 = vst [vmem:[%s190 + $0x268] sm:$0xff] %v2947
        %3204 = vst [vmem:[%s190 + $0x270] sm:$0xff] %v2948
        %3205 = vst [vmem:[%s190 + $0x278] sm:$0xff] %v2949
        %3206 = vst [vmem:[%s190 + $0x280] sm:$0xff] %v2950
        %3207 = vst [vmem:[%s190 + $0x288] sm:$0xff] %v2951
        %3208 = vst [vmem:[%s190 + $0x290] sm:$0xff] %v2952
        %3209 = vst [vmem:[%s190 + $0x298] sm:$0xff] %v2953
        %3210 = vst [vmem:[%s190 + $0x2a0] sm:$0xff] %v2954
        %3211 = vst [vmem:[%s190 + $0x2a8] sm:$0xff] %v2955
        %3212 = vst [vmem:[%s190 + $0x2b0] sm:$0xff] %v2956
        %3213 = vst [vmem:[%s190 + $0x2b8] sm:$0xff] %v2957
        %3214 = vst [vmem:[%s190 + $0x2c0] sm:$0xff] %v2958
        %3215 = vst [vmem:[%s190 + $0x2c8] sm:$0xff] %v2959
        %3216 = vst [vmem:[%s190 + $0x2d0] sm:$0xff] %v2960
        %3217 = vst [vmem:[%s190 + $0x2d8] sm:$0xff] %v2961
        %3218 = vst [vmem:[%s190 + $0x2e0] sm:$0xff] %v2962
        %3219 = vst [vmem:[%s190 + $0x2e8] sm:$0xff] %v2963
        %3220 = vst [vmem:[%s190 + $0x2f0] sm:$0xff] %v2964
        %3221 = vst [vmem:[%s190 + $0x2f8] sm:$0xff] %v2965
        %3222 = vst [vmem:[%s190 + $0x300] sm:$0xff] %v2966
        %3223 = vst [vmem:[%s190 + $0x308] sm:$0xff] %v2967
        %3224 = vst [vmem:[%s190 + $0x310] sm:$0xff] %v2968
        %3225 = vst [vmem:[%s190 + $0x318] sm:$0xff] %v2969
        %3226 = vst [vmem:[%s190 + $0x320] sm:$0xff] %v2970
        %3227 = vst [vmem:[%s190 + $0x328] sm:$0xff] %v2971
        %3228 = vst [vmem:[%s190 + $0x330] sm:$0xff] %v2972
        %3229 = vst [vmem:[%s190 + $0x338] sm:$0xff] %v2973
        %3230 = vst [vmem:[%s190 + $0x340] sm:$0xff] %v2974
        %3231 = vst [vmem:[%s190 + $0x348] sm:$0xff] %v2975
        %3232 = vst [vmem:[%s190 + $0x350] sm:$0xff] %v2976
        %3233 = vst [vmem:[%s190 + $0x358] sm:$0xff] %v2977
        %3234 = vst [vmem:[%s190 + $0x360] sm:$0xff] %v2978
        %3235 = vst [vmem:[%s190 + $0x368] sm:$0xff] %v2979
        %3236 = vst [vmem:[%s190 + $0x370] sm:$0xff] %v2980
        %3237 = vst [vmem:[%s190 + $0x378] sm:$0xff] %v2981
        %3238 = vst [vmem:[%s190 + $0x380] sm:$0xff] %v2982
        %3239 = vst [vmem:[%s190 + $0x388] sm:$0xff] %v2983
        %3240 = vst [vmem:[%s190 + $0x390] sm:$0xff] %v2984
        %3241 = vst [vmem:[%s190 + $0x398] sm:$0xff] %v2985
        %3242 = vst [vmem:[%s190 + $0x3a0] sm:$0xff] %v2986
        %3243 = vst [vmem:[%s190 + $0x3a8] sm:$0xff] %v2987
        %3244 = vst [vmem:[%s190 + $0x3b0] sm:$0xff] %v2988
        %3245 = vst [vmem:[%s190 + $0x3b8] sm:$0xff] %v2989
        %3246 = vst [vmem:[%s190 + $0x3c0] sm:$0xff] %v2990
        %3247 = vst [vmem:[%s190 + $0x3c8] sm:$0xff] %v2991
        %3248 = vst [vmem:[%s190 + $0x3d0] sm:$0xff] %v2992
        %3249 = vst [vmem:[%s190 + $0x3d8] sm:$0xff] %v2993
        %3250 = vst [vmem:[%s190 + $0x3e0] sm:$0xff] %v2994
        %3251 = vst [vmem:[%s190 + $0x3e8] sm:$0xff] %v2995
        %3252 = vst [vmem:[%s190 + $0x3f0] sm:$0xff] %v2996
        %3253 = vst [vmem:[%s190 + $0x3f8] sm:$0xff] %v2997
        %3254 = vst [vmem:[%s190 + $0x400] sm:$0xff] %v2998
        %3255 = vst [vmem:[%s190 + $0x408] sm:$0xff] %v2999
        %3256 = vst [vmem:[%s190 + $0x410] sm:$0xff] %v3000
        %3257 = vst [vmem:[%s190 + $0x418] sm:$0xff] %v3001
        %3258 = vst [vmem:[%s190 + $0x420] sm:$0xff] %v3002
        %3259 = vst [vmem:[%s190 + $0x428] sm:$0xff] %v3003
        %3260 = vst [vmem:[%s190 + $0x430] sm:$0xff] %v3004
        %3261 = vst [vmem:[%s190 + $0x438] sm:$0xff] %v3005
        %3262 = vst [vmem:[%s190 + $0x440] sm:$0xff] %v3006
        %3263 = vst [vmem:[%s190 + $0x448] sm:$0xff] %v3007
        %3264 = vst [vmem:[%s190 + $0x450] sm:$0xff] %v3008
        %3265 = vst [vmem:[%s190 + $0x458] sm:$0xff] %v3009
        %3266 = vst [vmem:[%s190 + $0x460] sm:$0xff] %v3010
        %3267 = vst [vmem:[%s190 + $0x468] sm:$0xff] %v3011
        %3268 = vst [vmem:[%s190 + $0x470] sm:$0xff] %v3012
        %3269 = vst [vmem:[%s190 + $0x478] sm:$0xff] %v3013
        %3270 = vst [vmem:[%s190 + $0x480] sm:$0xff] %v3014
        %3271 = vst [vmem:[%s190 + $0x488] sm:$0xff] %v3015
        %3272 = vst [vmem:[%s190 + $0x490] sm:$0xff] %v3016
        %3273 = vst [vmem:[%s190 + $0x498] sm:$0xff] %v3017
        %3274 = vst [vmem:[%s190 + $0x4a0] sm:$0xff] %v3018
        %3275 = vst [vmem:[%s190 + $0x4a8] sm:$0xff] %v3019
        %3276 = vst [vmem:[%s190 + $0x4b0] sm:$0xff] %v3020
        %3277 = vst [vmem:[%s190 + $0x4b8] sm:$0xff] %v3021
        %3278 = vst [vmem:[%s190 + $0x4c0] sm:$0xff] %v3022
        %3279 = vst [vmem:[%s190 + $0x4c8] sm:$0xff] %v3023
        %3280 = vst [vmem:[%s190 + $0x4d0] sm:$0xff] %v3024
        %3281 = vst [vmem:[%s190 + $0x4d8] sm:$0xff] %v3025
        %3282 = vst [vmem:[%s190 + $0x4e0] sm:$0xff] %v3026
        %3283 = vst [vmem:[%s190 + $0x4e8] sm:$0xff] %v3027
        %3284 = vst [vmem:[%s190 + $0x4f0] sm:$0xff] %v3028
        %3285 = vst [vmem:[%s190 + $0x4f8] sm:$0xff] %v3029
        %3286 = vst [vmem:[%s190 + $0x500] sm:$0xff] %v3030
        %3287 = vst [vmem:[%s190 + $0x508] sm:$0xff] %v3031
        %3288 = vst [vmem:[%s190 + $0x510] sm:$0xff] %v3032
        %3289 = vst [vmem:[%s190 + $0x518] sm:$0xff] %v3033
        %3290 = vst [vmem:[%s190 + $0x520] sm:$0xff] %v3034
        %3291 = vst [vmem:[%s190 + $0x528] sm:$0xff] %v3035
        %3292 = vst [vmem:[%s190 + $0x530] sm:$0xff] %v3036
        %3293 = vst [vmem:[%s190 + $0x538] sm:$0xff] %v3037
        %3294 = vst [vmem:[%s190 + $0x540] sm:$0xff] %v3038
        %3295 = vst [vmem:[%s190 + $0x548] sm:$0xff] %v3039
        %3296 = vst [vmem:[%s190 + $0x550] sm:$0xff] %v3040
        %3297 = vst [vmem:[%s190 + $0x558] sm:$0xff] %v3041
        %3298 = vst [vmem:[%s190 + $0x560] sm:$0xff] %v3042
        %3299 = vst [vmem:[%s190 + $0x568] sm:$0xff] %v3043
        %3300 = vst [vmem:[%s190 + $0x570] sm:$0xff] %v3044
        %3301 = vst [vmem:[%s190 + $0x578] sm:$0xff] %v3045
        %3302 = vst [vmem:[%s190 + $0x580] sm:$0xff] %v3046
        %3303 = vst [vmem:[%s190 + $0x588] sm:$0xff] %v3047
        %3304 = vst [vmem:[%s190 + $0x590] sm:$0xff] %v3048
        %3305 = vst [vmem:[%s190 + $0x598] sm:$0xff] %v3049
        %3306 = vst [vmem:[%s190 + $0x5a0] sm:$0xff] %v3050
        %3307 = vst [vmem:[%s190 + $0x5a8] sm:$0xff] %v3051
        %3308 = vst [vmem:[%s190 + $0x5b0] sm:$0xff] %v3052
        %3309 = vst [vmem:[%s190 + $0x5b8] sm:$0xff] %v3053
        %3310 = vst [vmem:[%s190 + $0x5c0] sm:$0xff] %v3054
        %3311 = vst [vmem:[%s190 + $0x5c8] sm:$0xff] %v3055
        %3312 = vst [vmem:[%s190 + $0x5d0] sm:$0xff] %v3056
        %3313 = vst [vmem:[%s190 + $0x5d8] sm:$0xff] %v3057
        %3314 = vst [vmem:[%s190 + $0x5e0] sm:$0xff] %v3058
        %3315 = vst [vmem:[%s190 + $0x5e8] sm:$0xff] %v3059
        %3316 = vst [vmem:[%s190 + $0x5f0] sm:$0xff] %v3060
        %3317 = vst [vmem:[%s190 + $0x5f8] sm:$0xff] %v3061
        %3318 = vst [vmem:[%s190 + $0x600] sm:$0xff] %v3062
        %3319 = vst [vmem:[%s190 + $0x608] sm:$0xff] %v3063
        %3320 = vst [vmem:[%s190 + $0x610] sm:$0xff] %v3064
        %3321 = vst [vmem:[%s190 + $0x618] sm:$0xff] %v3065
        %3322 = vst [vmem:[%s190 + $0x620] sm:$0xff] %v3066
        %3323 = vst [vmem:[%s190 + $0x628] sm:$0xff] %v3067
        %3324 = vst [vmem:[%s190 + $0x630] sm:$0xff] %v3068
        %3325 = vst [vmem:[%s190 + $0x638] sm:$0xff] %v3069
        %3326 = vst [vmem:[%s190 + $0x640] sm:$0xff] %v3070
        %3327 = vst [vmem:[%s190 + $0x648] sm:$0xff] %v3071
        %3328 = vst [vmem:[%s190 + $0x650] sm:$0xff] %v3072
        %3329 = vst [vmem:[%s190 + $0x658] sm:$0xff] %v3073
        %3330 = vst [vmem:[%s190 + $0x660] sm:$0xff] %v3074
        %3331 = vst [vmem:[%s190 + $0x668] sm:$0xff] %v3075
        %3332 = vst [vmem:[%s190 + $0x670] sm:$0xff] %v3076
        %3333 = vst [vmem:[%s190 + $0x678] sm:$0xff] %v3077
        %3334 = vst [vmem:[%s190 + $0x680] sm:$0xff] %v3078
        %3335 = vst [vmem:[%s190 + $0x688] sm:$0xff] %v3079
        %3336 = vst [vmem:[%s190 + $0x690] sm:$0xff] %v3080
        %3337 = vst [vmem:[%s190 + $0x698] sm:$0xff] %v3081
        %3338 = vst [vmem:[%s190 + $0x6a0] sm:$0xff] %v3082
        %3339 = vst [vmem:[%s190 + $0x6a8] sm:$0xff] %v3083
        %3340 = vst [vmem:[%s190 + $0x6b0] sm:$0xff] %v3084
        %3341 = vst [vmem:[%s190 + $0x6b8] sm:$0xff] %v3085
        %3342 = vst [vmem:[%s190 + $0x6c0] sm:$0xff] %v3086
        %3343 = vst [vmem:[%s190 + $0x6c8] sm:$0xff] %v3087
        %3344 = vst [vmem:[%s190 + $0x6d0] sm:$0xff] %v3088
        %3345 = vst [vmem:[%s190 + $0x6d8] sm:$0xff] %v3089
        %3346 = vst [vmem:[%s190 + $0x6e0] sm:$0xff] %v3090
        %3347 = vst [vmem:[%s190 + $0x6e8] sm:$0xff] %v3091
        %3348 = vst [vmem:[%s190 + $0x6f0] sm:$0xff] %v3092
        %3349 = vst [vmem:[%s190 + $0x6f8] sm:$0xff] %v3093
        %3350 = vst [vmem:[%s190 + $0x700] sm:$0xff] %v3094
        %3351 = vst [vmem:[%s190 + $0x708] sm:$0xff] %v3095
        %3352 = vst [vmem:[%s190 + $0x710] sm:$0xff] %v3096
        %3353 = vst [vmem:[%s190 + $0x718] sm:$0xff] %v3097
        %3354 = vst [vmem:[%s190 + $0x720] sm:$0xff] %v3098
        %3355 = vst [vmem:[%s190 + $0x728] sm:$0xff] %v3099
        %3356 = vst [vmem:[%s190 + $0x730] sm:$0xff] %v3100
        %3357 = vst [vmem:[%s190 + $0x738] sm:$0xff] %v3101
        %3358 = vst [vmem:[%s190 + $0x740] sm:$0xff] %v3102
        %3359 = vst [vmem:[%s190 + $0x748] sm:$0xff] %v3103
        %3360 = vst [vmem:[%s190 + $0x750] sm:$0xff] %v3104
        %3361 = vst [vmem:[%s190 + $0x758] sm:$0xff] %v3105
        %3362 = vst [vmem:[%s190 + $0x760] sm:$0xff] %v3106
        %3363 = vst [vmem:[%s190 + $0x768] sm:$0xff] %v3107
        %3364 = vst [vmem:[%s190 + $0x770] sm:$0xff] %v3108
        %3365 = vst [vmem:[%s190 + $0x778] sm:$0xff] %v3109
        %3366 = vst [vmem:[%s190 + $0x780] sm:$0xff] %v3110
        %3367 = vst [vmem:[%s190 + $0x788] sm:$0xff] %v3111
        %3368 = vst [vmem:[%s190 + $0x790] sm:$0xff] %v3112
        %3369 = vst [vmem:[%s190 + $0x798] sm:$0xff] %v3113
        %3370 = vst [vmem:[%s190 + $0x7a0] sm:$0xff] %v3114
        %3371 = vst [vmem:[%s190 + $0x7a8] sm:$0xff] %v3115
        %3372 = vst [vmem:[%s190 + $0x7b0] sm:$0xff] %v3116
        %3373 = vst [vmem:[%s190 + $0x7b8] sm:$0xff] %v3117
        %3374 = vst [vmem:[%s190 + $0x7c0] sm:$0xff] %v3118
        %3375 = vst [vmem:[%s190 + $0x7c8] sm:$0xff] %v3119
        %3376 = vst [vmem:[%s190 + $0x7d0] sm:$0xff] %v3120
        %3377 = vst [vmem:[%s190 + $0x7d8] sm:$0xff] %v3121
        %3378 = vst [vmem:[%s190 + $0x7e0] sm:$0xff] %v3122
        %3379 = vst [vmem:[%s190 + $0x7e8] sm:$0xff] %v3123
        %3380 = vst [vmem:[%s190 + $0x7f0] sm:$0xff] %v3124
        %3381 = vst [vmem:[%s190 + $0x7f8] sm:$0xff] %v3125
        %s3382 = sand.u32 %s115, 1
        %s3383 = scalar_lea.sflag [#allocation3], %s3382
        %s3384 = sand.u32 %s115, 1
        %s3385 = smul.addr %s3384, 2048
        %s3386 = scalar_lea.vmem [#allocation2], %s3385
        // Predicated region
        $region37: #{tpu_custom_call.1} parent=35 // pred_check
          %p3387 = pneg %p125
        $region38: #{tpu_custom_call.1} parent=35 // pred_check_branch
          %3389 = sbr.rel (%p3387) target = $region40
        $region39: #{tpu_custom_call.1} parent=35 // pred_region
          %s3391 = ssub.s32 32768, 32768
          %3392 = vsyncadd %s3383, %s3391
          %s3393 = smul.addr %s18, 256
          %s3394 = smul.addr %s3393, 128
          %s3395 = scalar_lea.hbm %s4, %s3394
          %s3396 = sshll.u32 %s3386, 4
          %s3397 = int_to_ptr.vmem [resolvable:$true] %s3396
          %3402 = dma.vmem_to_hbm [thread:$0]  %s3397, 32768, %s3395, %s3383, 4096, 4096, 256
        $region40: #{tpu_custom_call.1} parent=35 // pred_fallthru
          _
      $region36: #{tpu_custom_call.1} parent=5 // pred_fallthru
        _
      %p3403 = scmp.le.s32.totalorder 2, %s13
      // Predicated region
      $region41: #{tpu_custom_call.1} parent=5 // pred_check
        %p3404 = pneg %p3403
      $region42: #{tpu_custom_call.1} parent=5 // pred_check_branch
        %3406 = sbr.rel (%p3404) target = $region44
      $region43: #{tpu_custom_call.1} parent=5 // pred_region
        %s3407 = ssub.s32 %s13, 2
        // Predicated region
        $region45: #{tpu_custom_call.1} parent=43 // pred_check
          %p3408 = pneg %p131
        $region46: #{tpu_custom_call.1} parent=43 // pred_check_branch
          %3410 = sbr.rel (%p3408) target = $region48
        $region47: #{tpu_custom_call.1} parent=43 // pred_region
          %s3411 = sand.u32 %s116, 1
          %s3412 = scalar_lea.sflag [#allocation3], %s3411
          %s3413 = sand.u32 %s116, 1
          %s3414 = smul.addr %s3413, 2048
          %s3415 = scalar_lea.vmem [#allocation2], %s3414
          %3416 = dma.done %s3412, 32768
        $region48: #{tpu_custom_call.1} parent=43 // pred_fallthru
          _
      $region44: #{tpu_custom_call.1} parent=5 // pred_fallthru
        _
    $region6: #{tpu_custom_call.1} parent=1 // loop_footer
      %s17 = sadd.s32 1, %s13
    $region7: #{tpu_custom_call.1} parent=1 // loop_footer_branch
      %12 = sbr.rel target = $region3
    $region8: #{tpu_custom_call.1} parent=1 // loop_exit
      _
    %3417 = vsyncpa [#allocation3], 1
    %s3418 = scalar_lea.sflag [#allocation3], 1
    %3419 = vsyncpa %s3418, 1

</llo_original>
